<compile_context>
chip_gen: v7x
topology: tpu7x:2x2x1
jax: 0.10.0
libtpu: 0.0.40
codegen_flags: <defaults>
</compile_context>

<pallas_src>
import functools

import jax
import jax.numpy as jnp
from jax import lax
from jax.experimental import pallas as pl
from jax.experimental.pallas import tpu as pltpu


def _round_up(x, m):
    return (x + m - 1) // m * m


def _choose_batch_block(B):
    """Target 64-128 rows per chunk for MXU occupancy; for small B split into
    two chunks (sublane-aligned) so a second TensorCore (v7x) gets work."""
    B8 = _round_up(max(B, 1), 8)
    if B8 >= 256:
        return 128
    return max(8, min(128, _round_up((B8 + 1) // 2, 8)))


def _make_lstm_kernel(num_layers, T, Tc, Bc, Hp, Op, unroll):
    """Stacked LSTM + linear head; one batch chunk of size Bc per grid step.

    Refs per grid step:
      x_ref                 (T, Bc, Dp)      bf16  time-major input chunk
      per layer l:
        wih_ref             (D_l, 4*Hp)      bf16  input->gates (gate-major cols)
        whh_ref             (Hp, 4*Hp)       bf16  hidden->gates
        b_ref               (1, 4*Hp)        f32   b_ih + b_hh (gate-major)
      wfc_ref               (Hp, Op)         bf16
      bfc_ref               (1, Op)          f32
      out_ref               (T, Bc, Op)      bf16
      gx_ref  (scratch)     (Tc, Bc, 4*Hp)   bf16  hoisted input projection (per T-chunk)
      h_ref   (scratch)     (T, Bc, Hp)      bf16  per-timestep hidden (reused per layer)
    """
    chunks = [(t0, min(Tc, T - t0)) for t0 in range(0, T, Tc)]

    def kernel(*refs):
        x_ref = refs[0]
        w_refs = refs[1:1 + 3 * num_layers]
        wfc_ref = refs[1 + 3 * num_layers]
        bfc_ref = refs[2 + 3 * num_layers]
        out_ref = refs[3 + 3 * num_layers]
        gx_ref = refs[4 + 3 * num_layers]
        h_ref = refs[5 + 3 * num_layers]

        for l in range(num_layers):
            wih = w_refs[3 * l][...]          # (D_l, 4Hp) bf16
            whh = w_refs[3 * l + 1][...]      # (Hp, 4Hp)  bf16
            bias = w_refs[3 * l + 2][...]     # (1, 4Hp)   f32

            h = jnp.zeros((Bc, Hp), jnp.float32)
            c = jnp.zeros((Bc, Hp), jnp.float32)

            for (t0, tc) in chunks:
                # ---- hoisted input projection for this T-chunk: one large MXU
                # matmul into a bounded bf16 scratch ----
                if l == 0:
                    x_in = x_ref[pl.ds(t0, tc)]        # (tc, Bc, Dp) bf16
                else:
                    x_in = h_ref[pl.ds(t0, tc)]        # (tc, Bc, Hp) bf16
                d_l = x_in.shape[-1]
                gx = jnp.dot(x_in.reshape(tc * Bc, d_l), wih,
                             preferred_element_type=jnp.float32) + bias
                gx_ref[pl.ds(0, tc)] = gx.reshape(tc, Bc, 4 * Hp).astype(jnp.bfloat16)

                # ---- recurrence: only the small h @ Whh matmul + gate math on
                # the serial path.  (Whh is loop-invariant; a larger Bc
                # amortizes its MXU reload each step.) ----
                def step(t, carry, whh=whh, t0=t0):
                    h_c, c_c = carry                             # (Bc, Hp) f32
                    gates = (gx_ref[t].astype(jnp.float32)
                             + jnp.dot(h_c.astype(jnp.bfloat16), whh,
                                       preferred_element_type=jnp.float32))
                    i_g = jax.nn.sigmoid(gates[:, 0 * Hp:1 * Hp])
                    f_g = jax.nn.sigmoid(gates[:, 1 * Hp:2 * Hp])
                    g_g = jnp.tanh(gates[:, 2 * Hp:3 * Hp])
                    o_g = jax.nn.sigmoid(gates[:, 3 * Hp:4 * Hp])
                    c_new = f_g * c_c + i_g * g_g
                    h_new = o_g * jnp.tanh(c_new)
                    # bf16 store: only consumed as a bf16 MXU operand later.
                    h_ref[t0 + t] = h_new.astype(jnp.bfloat16)
                    return (h_new, c_new)

                h, c = lax.fori_loop(0, tc, step, (h, c),
                                     unroll=min(tc, unroll))

        # ---- fc head on every timestep, per T-chunk, lane-dense bf16 output ----
        wfc = wfc_ref[...]
        bfc = bfc_ref[...]
        for (t0, tc) in chunks:
            h_all = h_ref[pl.ds(t0, tc)].reshape(tc * Bc, Hp)    # bf16
            y = jnp.dot(h_all, wfc, preferred_element_type=jnp.float32) + bfc
            out_ref[pl.ds(t0, tc)] = y.reshape(tc, Bc, Op).astype(jnp.bfloat16)

    return kernel


def prepare_params(params, input_dim, hidden_dim, num_layers, output_dim):
    """One-time conversion of PyTorch-layout params into padded, transposed,
    gate-major, bf16 kernel weights (done once, outside the per-call path)."""
    H = hidden_dim
    Hp = _round_up(H, 128)
    Dp = _round_up(input_dim, 128)
    Op = _round_up(output_dim, 128)

    args = []
    for l in range(num_layers):
        wih, whh, b_ih, b_hh = params["layers"][l]           # torch shapes
        d_in = wih.shape[1]
        d_in_p = Dp if l == 0 else Hp
        # Per-gate padding so each gate occupies a lane-aligned Hp-wide slab.
        wih_g = jnp.zeros((4, Hp, d_in_p), jnp.float32).at[:, :H, :d_in].set(
            wih.reshape(4, H, d_in))
        whh_g = jnp.zeros((4, Hp, Hp), jnp.float32).at[:, :H, :H].set(
            whh.reshape(4, H, H))
        b_g = jnp.zeros((4, Hp), jnp.float32).at[:, :H].set(
            (b_ih + b_hh).reshape(4, H))
        wih_k = jnp.transpose(wih_g, (2, 0, 1)).reshape(d_in_p, 4 * Hp).astype(jnp.bfloat16)
        whh_k = jnp.transpose(whh_g, (2, 0, 1)).reshape(Hp, 4 * Hp).astype(jnp.bfloat16)
        b_k = b_g.reshape(1, 4 * Hp)
        args += [wih_k, whh_k, b_k]

    wfc_k = jnp.zeros((Hp, Op), jnp.float32).at[:H, :output_dim].set(
        params["fc_w"].T).astype(jnp.bfloat16)
    bfc_k = jnp.zeros((1, Op), jnp.float32).at[0, :output_dim].set(params["fc_b"])
    return tuple(args) + (wfc_k, bfc_k)


def lstm_forward(x, kernel_params, *, hidden_dim, num_layers, output_dim,
                 batch_block=None, time_block=None):
    """x: (B, T, D_in) float32, batch_first. Returns (B, T, output_dim) f32."""
    B, T, D = x.shape
    Hp = _round_up(hidden_dim, 128)
    Dp = _round_up(D, 128)
    Op = _round_up(output_dim, 128)

    Bc = batch_block if batch_block is not None else _choose_batch_block(B)
    # >= 2 batch chunks so v7x's second TensorCore is never idle.
    num_chunks = max(2, pl.cdiv(B, Bc))
    B_pad = num_chunks * Bc

    # Bound the bf16 gx scratch to ~8 MiB by chunking the time axis.
    if time_block is None:
        Tc = max(1, min(T, (8 << 20) // max(1, Bc * 4 * Hp * 2)))
    else:
        Tc = max(1, min(T, time_block))

    # Pad to full vreg tiles, cast to bf16 (halves DMA), go time-major.
    # Zero padding is exact: padded h/c columns stay 0 through the recurrence.
    x_tm = jnp.transpose(
        jnp.zeros((B_pad, T, Dp), jnp.bfloat16).at[:B, :, :D].set(
            x.astype(jnp.bfloat16)),
        (1, 0, 2))                                            # (T, B_pad, Dp)

    unroll = 8 if Bc <= 32 else (4 if Bc <= 64 else 2)
    kernel = _make_lstm_kernel(num_layers, T, Tc, Bc, Hp, Op, unroll)

    in_specs = [pl.BlockSpec((T, Bc, Dp), lambda b: (0, b, 0))]
    for a in kernel_params:                                   # weights: whole-array, grid-invariant
        in_specs.append(pl.BlockSpec(a.shape, lambda b: (0, 0)))

    # VMEM budget from the actual resident set (weights counted double-buffered,
    # bf16 scratches, double-buffered in/out blocks), clamped to be valid on
    # v5e / v6e / v7x alike.
    weight_bytes = 2 * sum(int(a.size) * a.dtype.itemsize for a in kernel_params)
    scratch_bytes = (Tc * Bc * 4 * Hp + T * Bc * Hp) * 2      # bf16
    io_bytes = 2 * (T * Bc * Dp * 2) + 2 * (T * Bc * Op * 2)  # bf16 in/out blocks
    vmem_need = weight_bytes + scratch_bytes + io_bytes
    vmem_limit = int(min(max(vmem_need * 3 // 2 + (4 << 20), 32 << 20), 64 << 20))

    out_tm = pl.pallas_call(
        kernel,
        out_shape=jax.ShapeDtypeStruct((T, B_pad, Op), jnp.bfloat16),
        grid_spec=pltpu.PrefetchScalarGridSpec(
            num_scalar_prefetch=0,
            grid=(num_chunks,),                               # batch chunks -> megacore parallel
            in_specs=in_specs,
            out_specs=pl.BlockSpec((T, Bc, Op), lambda b: (0, b, 0)),
            scratch_shapes=[
                pltpu.VMEM((Tc, Bc, 4 * Hp), jnp.bfloat16),   # hoisted input projection (T-chunked)
                pltpu.VMEM((T, Bc, Hp), jnp.bfloat16),        # per-timestep hidden (reused per layer)
            ]),
        compiler_params=pltpu.CompilerParams(
            dimension_semantics=("parallel",),
            vmem_limit_bytes=vmem_limit),
    )(x_tm, *kernel_params)

    out = jnp.transpose(out_tm, (1, 0, 2)).astype(jnp.float32)  # (B_pad, T, Op)
    return out[:B, :, :output_dim]


# ---------------------------------------------------------------------------
# Deterministic parameter init (same shapes as nn.LSTM / nn.Linear).
# ---------------------------------------------------------------------------
def init_params(key, input_dim, hidden_dim, num_layers, output_dim):
    H = hidden_dim
    k = 1.0 / jnp.sqrt(H)
    layers = []
    for l in range(num_layers):
        d_in = input_dim if l == 0 else H
        key, k1, k2, k3, k4 = jax.random.split(key, 5)
        wih = jax.random.uniform(k1, (4 * H, d_in), jnp.float32, -k, k)   # weight_ih_l{l}
        whh = jax.random.uniform(k2, (4 * H, H), jnp.float32, -k, k)      # weight_hh_l{l}
        b_ih = jax.random.uniform(k3, (4 * H,), jnp.float32, -k, k)
        b_hh = jax.random.uniform(k4, (4 * H,), jnp.float32, -k, k)
        layers.append((wih, whh, b_ih, b_hh))
    key, k5, k6 = jax.random.split(key, 3)
    kf = 1.0 / jnp.sqrt(H)
    fc_w = jax.random.uniform(k5, (output_dim, H), jnp.float32, -kf, kf)  # nn.Linear weight
    fc_b = jax.random.uniform(k6, (output_dim,), jnp.float32, -kf, kf)
    return {"layers": layers, "fc_w": fc_w, "fc_b": fc_b}


# ---------------------------------------------------------------------------
# Pure-JAX f32 reference (mirrors torch.nn.LSTM semantics) for validation.
# ---------------------------------------------------------------------------
def lstm_reference(x, params, hidden_dim, num_layers, output_dim):
    B, T, _ = x.shape
    H = hidden_dim
    seq = x
    for l in range(num_layers):
        wih, whh, b_ih, b_hh = params["layers"][l]
        h = jnp.zeros((B, H), jnp.float32)
        c = jnp.zeros((B, H), jnp.float32)
        outs = []
        for t in range(T):
            gates = seq[:, t, :] @ wih.T + h @ whh.T + b_ih + b_hh
            i = jax.nn.sigmoid(gates[:, 0 * H:1 * H])
            f = jax.nn.sigmoid(gates[:, 1 * H:2 * H])
            g = jnp.tanh(gates[:, 2 * H:3 * H])
            o = jax.nn.sigmoid(gates[:, 3 * H:4 * H])
            c = f * c + i * g
            h = o * jnp.tanh(c)
            outs.append(h)
        seq = jnp.stack(outs, axis=1)
    return seq @ params["fc_w"].T + params["fc_b"]


if __name__ == "__main__":
    # Small shapes consistent with the module's forward: (batch, seq, input_dim).
    B, T, D_IN, H, L, O = 2, 8, 4, 32, 2, 1

    key = jax.random.PRNGKey(0)
    key, kx = jax.random.split(key)
    x = jax.random.normal(kx, (B, T, D_IN), jnp.float32)
    params = init_params(key, D_IN, H, L, O)

    # One-time weight layout conversion (pad / transpose / gate-major / bf16).
    kparams = prepare_params(params, D_IN, H, L, O)

    run = jax.jit(functools.partial(
        lstm_forward, hidden_dim=H, num_layers=L, output_dim=O))
    out = jax.block_until_ready(run(x, kparams))

    ref = lstm_reference(x, params, H, L, O)
    assert out.shape == (B, T, O), out.shape
    # bf16 MXU operands + bf16 gx/h/output scratches vs the f32 torch-semantics
    # reference -> loosened tolerance (re-validated per the review).
    err = float(jnp.max(jnp.abs(out - ref)))
    assert err < 5e-2, err

    print("KERNEL_OK")
</pallas_src>

<mosaic_0001>
module attributes {stable_mosaic.version = 11 : i64} {
  func.func @kernel(%arg0: i32, %arg1: memref<8x8x128xbf16, #tpu.memory_space<vmem>>, %arg2: memref<128x512xbf16, #tpu.memory_space<vmem>>, %arg3: memref<128x512xbf16, #tpu.memory_space<vmem>>, %arg4: memref<1x512xf32, #tpu.memory_space<vmem>>, %arg5: memref<128x512xbf16, #tpu.memory_space<vmem>>, %arg6: memref<128x512xbf16, #tpu.memory_space<vmem>>, %arg7: memref<1x512xf32, #tpu.memory_space<vmem>>, %arg8: memref<128x128xbf16, #tpu.memory_space<vmem>>, %arg9: memref<1x128xf32, #tpu.memory_space<vmem>>, %arg10: memref<8x8x128xbf16, #tpu.memory_space<vmem>>, %arg11: memref<8x8x512xbf16, #tpu.memory_space<vmem>>, %arg12: memref<8x8x128xbf16, #tpu.memory_space<vmem>>) attributes {dimension_semantics = [#tpu.dimension_semantics<parallel>], iteration_bounds = array<i64: 2>, scalar_prefetch = 0 : i64, scratch_operands = 2 : i64, tpu.core_type = #tpu.core_type<tc>, window_params = [{transform_indices = @transform_0, window_bounds = array<i64: 8, 8, 128>}, {pipeline_mode = #tpu.pipeline_mode<synchronous>, transform_indices = @transform_1, window_bounds = array<i64: 128, 512>}, {pipeline_mode = #tpu.pipeline_mode<synchronous>, transform_indices = @transform_2, window_bounds = array<i64: 128, 512>}, {pipeline_mode = #tpu.pipeline_mode<synchronous>, transform_indices = @transform_3, window_bounds = array<i64: 1, 512>}, {pipeline_mode = #tpu.pipeline_mode<synchronous>, transform_indices = @transform_4, window_bounds = array<i64: 128, 512>}, {pipeline_mode = #tpu.pipeline_mode<synchronous>, transform_indices = @transform_5, window_bounds = array<i64: 128, 512>}, {pipeline_mode = #tpu.pipeline_mode<synchronous>, transform_indices = @transform_6, window_bounds = array<i64: 1, 512>}, {pipeline_mode = #tpu.pipeline_mode<synchronous>, transform_indices = @transform_7, window_bounds = array<i64: 128, 128>}, {pipeline_mode = #tpu.pipeline_mode<synchronous>, transform_indices = @transform_8, window_bounds = array<i64: 1, 128>}, {transform_indices = @transform_9, window_bounds = array<i64: 8, 8, 128>}]} {
    %c0 = arith.constant 0 : index
    %c0_0 = arith.constant 0 : index
    %0 = vector.load %arg2[%c0, %c0_0] : memref<128x512xbf16, #tpu.memory_space<vmem>>, vector<128x512xbf16>
    %c0_1 = arith.constant 0 : index
    %c0_2 = arith.constant 0 : index
    %1 = vector.load %arg3[%c0_1, %c0_2] : memref<128x512xbf16, #tpu.memory_space<vmem>>, vector<128x512xbf16>
    %c0_3 = arith.constant 0 : index
    %c0_4 = arith.constant 0 : index
    %2 = vector.load %arg4[%c0_3, %c0_4] : memref<1x512xf32, #tpu.memory_space<vmem>>, vector<1x512xf32>
    %cst = arith.constant 0.000000e+00 : f32
    %3 = vector.broadcast %cst : f32 to vector<8x128xf32>
    %cst_5 = arith.constant 0.000000e+00 : f32
    %4 = vector.broadcast %cst_5 : f32 to vector<8x128xf32>
    %c0_6 = arith.constant 0 : index
    %c0_7 = arith.constant 0 : index
    %c0_8 = arith.constant 0 : index
    %5 = vector.load %arg1[%c0_6, %c0_7, %c0_8] : memref<8x8x128xbf16, #tpu.memory_space<vmem>>, vector<8x8x128xbf16>
    %6 = vector.shape_cast %5 : vector<8x8x128xbf16> to vector<64x128xbf16>
    %cst_9 = arith.constant dense<0.000000e+00> : vector<64x512xf32>
    %7 = tpu.matmul %6, %0, %cst_9 {dimension_numbers = #tpu.dot_dimension_numbers<[1], [0], [0], [1], [0, 0, 1, 1], [], []>} : vector<64x128xbf16>, vector<128x512xbf16>, vector<64x512xf32> -> vector<64x512xf32>
    %8 = vector.broadcast %2 : vector<1x512xf32> to vector<64x512xf32>
    %9 = arith.addf %7, %8 : vector<64x512xf32>
    %10 = vector.shape_cast %9 : vector<64x512xf32> to vector<8x8x512xf32>
    %11 = arith.truncf %10 : vector<8x8x512xf32> to vector<8x8x512xbf16>
    %c0_10 = arith.constant 0 : index
    %c0_11 = arith.constant 0 : index
    %c0_12 = arith.constant 0 : index
    %12 = vector.load %arg11[%c0_10, %c0_11, %c0_12] : memref<8x8x512xbf16, #tpu.memory_space<vmem>>, vector<8x8x512xbf16>
    tpu.vector_store %arg11[%c0_10, %c0_11, %c0_12], %11 {strides = array<i32>} : memref<8x8x512xbf16, #tpu.memory_space<vmem>>, vector<8x8x512xbf16>,
    %c0_i32 = arith.constant 0 : i32
    %13 = arith.index_cast %c0_i32 : i32 to index
    %c0_13 = arith.constant 0 : index
    %c0_14 = arith.constant 0 : index
    %14 = vector.load %arg11[%13, %c0_13, %c0_14] : memref<8x8x512xbf16, #tpu.memory_space<vmem>>, vector<1x8x512xbf16>
    %15 = vector.shape_cast %14 : vector<1x8x512xbf16> to vector<8x512xbf16>
    %16 = arith.extf %15 : vector<8x512xbf16> to vector<8x512xf32>
    %17 = arith.truncf %3 : vector<8x128xf32> to vector<8x128xbf16>
    %cst_15 = arith.constant dense<0.000000e+00> : vector<8x512xf32>
    %18 = tpu.matmul %17, %1, %cst_15 {dimension_numbers = #tpu.dot_dimension_numbers<[1], [0], [0], [1], [0, 0, 1, 1], [], []>} : vector<8x128xbf16>, vector<128x512xbf16>, vector<8x512xf32> -> vector<8x512xf32>
    %19 = arith.addf %16, %18 : vector<8x512xf32>
    %20 = vector.extract_strided_slice %19 {offsets = [0, 0], sizes = [8, 128], strides = [1, 1]} : vector<8x512xf32> to vector<8x128xf32>
    %21 = arith.negf %20 : vector<8x128xf32>
    %22 = math.exp %21 : vector<8x128xf32>
    %cst_16 = arith.constant 1.000000e+00 : f32
    %23 = vector.broadcast %cst_16 : f32 to vector<8x128xf32>
    %24 = arith.addf %23, %22 : vector<8x128xf32>
    %25 = arith.divf %23, %24 : vector<8x128xf32>
    %26 = vector.extract_strided_slice %19 {offsets = [0, 128], sizes = [8, 128], strides = [1, 1]} : vector<8x512xf32> to vector<8x128xf32>
    %27 = arith.negf %26 : vector<8x128xf32>
    %28 = math.exp %27 : vector<8x128xf32>
    %cst_17 = arith.constant 1.000000e+00 : f32
    %29 = vector.broadcast %cst_17 : f32 to vector<8x128xf32>
    %30 = arith.addf %29, %28 : vector<8x128xf32>
    %31 = arith.divf %29, %30 : vector<8x128xf32>
    %32 = vector.extract_strided_slice %19 {offsets = [0, 256], sizes = [8, 128], strides = [1, 1]} : vector<8x512xf32> to vector<8x128xf32>
    %33 = math.tanh %32 : vector<8x128xf32>
    %34 = vector.extract_strided_slice %19 {offsets = [0, 384], sizes = [8, 128], strides = [1, 1]} : vector<8x512xf32> to vector<8x128xf32>
    %35 = arith.negf %34 : vector<8x128xf32>
    %36 = math.exp %35 : vector<8x128xf32>
    %cst_18 = arith.constant 1.000000e+00 : f32
    %37 = vector.broadcast %cst_18 : f32 to vector<8x128xf32>
    %38 = arith.addf %37, %36 : vector<8x128xf32>
    %39 = arith.divf %37, %38 : vector<8x128xf32>
    %40 = arith.mulf %31, %4 : vector<8x128xf32>
    %41 = arith.mulf %25, %33 : vector<8x128xf32>
    %42 = arith.addf %40, %41 : vector<8x128xf32>
    %43 = math.tanh %42 : vector<8x128xf32>
    %44 = arith.mulf %39, %43 : vector<8x128xf32>
    %45 = arith.truncf %44 : vector<8x128xf32> to vector<8x128xbf16>
    %c0_i32_19 = arith.constant 0 : i32
    %46 = arith.addi %c0_i32_19, %c0_i32 : i32
    %47 = arith.index_cast %46 : i32 to index
    %c0_20 = arith.constant 0 : index
    %c0_21 = arith.constant 0 : index
    %48 = vector.load %arg12[%47, %c0_20, %c0_21] : memref<8x8x128xbf16, #tpu.memory_space<vmem>>, vector<1x8x128xbf16>
    %49 = vector.shape_cast %48 : vector<1x8x128xbf16> to vector<8x128xbf16>
    %50 = vector.shape_cast %45 : vector<8x128xbf16> to vector<1x8x128xbf16>
    tpu.vector_store %arg12[%47, %c0_20, %c0_21], %50 {strides = array<i32>} : memref<8x8x128xbf16, #tpu.memory_space<vmem>>, vector<1x8x128xbf16>,
    %c1_i32 = arith.constant 1 : i32
    %51 = arith.index_cast %c1_i32 : i32 to index
    %c0_22 = arith.constant 0 : index
    %c0_23 = arith.constant 0 : index
    %52 = vector.load %arg11[%51, %c0_22, %c0_23] : memref<8x8x512xbf16, #tpu.memory_space<vmem>>, vector<1x8x512xbf16>
    %53 = vector.shape_cast %52 : vector<1x8x512xbf16> to vector<8x512xbf16>
    %54 = arith.extf %53 : vector<8x512xbf16> to vector<8x512xf32>
    %55 = arith.truncf %44 : vector<8x128xf32> to vector<8x128xbf16>
    %cst_24 = arith.constant dense<0.000000e+00> : vector<8x512xf32>
    %56 = tpu.matmul %55, %1, %cst_24 {dimension_numbers = #tpu.dot_dimension_numbers<[1], [0], [0], [1], [0, 0, 1, 1], [], []>} : vector<8x128xbf16>, vector<128x512xbf16>, vector<8x512xf32> -> vector<8x512xf32>
    %57 = arith.addf %54, %56 : vector<8x512xf32>
    %58 = vector.extract_strided_slice %57 {offsets = [0, 0], sizes = [8, 128], strides = [1, 1]} : vector<8x512xf32> to vector<8x128xf32>
    %59 = arith.negf %58 : vector<8x128xf32>
    %60 = math.exp %59 : vector<8x128xf32>
    %cst_25 = arith.constant 1.000000e+00 : f32
    %61 = vector.broadcast %cst_25 : f32 to vector<8x128xf32>
    %62 = arith.addf %61, %60 : vector<8x128xf32>
    %63 = arith.divf %61, %62 : vector<8x128xf32>
    %64 = vector.extract_strided_slice %57 {offsets = [0, 128], sizes = [8, 128], strides = [1, 1]} : vector<8x512xf32> to vector<8x128xf32>
    %65 = arith.negf %64 : vector<8x128xf32>
    %66 = math.exp %65 : vector<8x128xf32>
    %cst_26 = arith.constant 1.000000e+00 : f32
    %67 = vector.broadcast %cst_26 : f32 to vector<8x128xf32>
    %68 = arith.addf %67, %66 : vector<8x128xf32>
    %69 = arith.divf %67, %68 : vector<8x128xf32>
    %70 = vector.extract_strided_slice %57 {offsets = [0, 256], sizes = [8, 128], strides = [1, 1]} : vector<8x512xf32> to vector<8x128xf32>
    %71 = math.tanh %70 : vector<8x128xf32>
    %72 = vector.extract_strided_slice %57 {offsets = [0, 384], sizes = [8, 128], strides = [1, 1]} : vector<8x512xf32> to vector<8x128xf32>
    %73 = arith.negf %72 : vector<8x128xf32>
    %74 = math.exp %73 : vector<8x128xf32>
    %cst_27 = arith.constant 1.000000e+00 : f32
    %75 = vector.broadcast %cst_27 : f32 to vector<8x128xf32>
    %76 = arith.addf %75, %74 : vector<8x128xf32>
    %77 = arith.divf %75, %76 : vector<8x128xf32>
    %78 = arith.mulf %69, %42 : vector<8x128xf32>
    %79 = arith.mulf %63, %71 : vector<8x128xf32>
    %80 = arith.addf %78, %79 : vector<8x128xf32>
    %81 = math.tanh %80 : vector<8x128xf32>
    %82 = arith.mulf %77, %81 : vector<8x128xf32>
    %83 = arith.truncf %82 : vector<8x128xf32> to vector<8x128xbf16>
    %c0_i32_28 = arith.constant 0 : i32
    %84 = arith.addi %c0_i32_28, %c1_i32 : i32
    %85 = arith.index_cast %84 : i32 to index
    %c0_29 = arith.constant 0 : index
    %c0_30 = arith.constant 0 : index
    %86 = vector.load %arg12[%85, %c0_29, %c0_30] : memref<8x8x128xbf16, #tpu.memory_space<vmem>>, vector<1x8x128xbf16>
    %87 = vector.shape_cast %86 : vector<1x8x128xbf16> to vector<8x128xbf16>
    %88 = vector.shape_cast %83 : vector<8x128xbf16> to vector<1x8x128xbf16>
    tpu.vector_store %arg12[%85, %c0_29, %c0_30], %88 {strides = array<i32>} : memref<8x8x128xbf16, #tpu.memory_space<vmem>>, vector<1x8x128xbf16>,
    %c2_i32 = arith.constant 2 : i32
    %89 = arith.index_cast %c2_i32 : i32 to index
    %c0_31 = arith.constant 0 : index
    %c0_32 = arith.constant 0 : index
    %90 = vector.load %arg11[%89, %c0_31, %c0_32] : memref<8x8x512xbf16, #tpu.memory_space<vmem>>, vector<1x8x512xbf16>
    %91 = vector.shape_cast %90 : vector<1x8x512xbf16> to vector<8x512xbf16>
    %92 = arith.extf %91 : vector<8x512xbf16> to vector<8x512xf32>
    %93 = arith.truncf %82 : vector<8x128xf32> to vector<8x128xbf16>
    %cst_33 = arith.constant dense<0.000000e+00> : vector<8x512xf32>
    %94 = tpu.matmul %93, %1, %cst_33 {dimension_numbers = #tpu.dot_dimension_numbers<[1], [0], [0], [1], [0, 0, 1, 1], [], []>} : vector<8x128xbf16>, vector<128x512xbf16>, vector<8x512xf32> -> vector<8x512xf32>
    %95 = arith.addf %92, %94 : vector<8x512xf32>
    %96 = vector.extract_strided_slice %95 {offsets = [0, 0], sizes = [8, 128], strides = [1, 1]} : vector<8x512xf32> to vector<8x128xf32>
    %97 = arith.negf %96 : vector<8x128xf32>
    %98 = math.exp %97 : vector<8x128xf32>
    %cst_34 = arith.constant 1.000000e+00 : f32
    %99 = vector.broadcast %cst_34 : f32 to vector<8x128xf32>
    %100 = arith.addf %99, %98 : vector<8x128xf32>
    %101 = arith.divf %99, %100 : vector<8x128xf32>
    %102 = vector.extract_strided_slice %95 {offsets = [0, 128], sizes = [8, 128], strides = [1, 1]} : vector<8x512xf32> to vector<8x128xf32>
    %103 = arith.negf %102 : vector<8x128xf32>
    %104 = math.exp %103 : vector<8x128xf32>
    %cst_35 = arith.constant 1.000000e+00 : f32
    %105 = vector.broadcast %cst_35 : f32 to vector<8x128xf32>
    %106 = arith.addf %105, %104 : vector<8x128xf32>
    %107 = arith.divf %105, %106 : vector<8x128xf32>
    %108 = vector.extract_strided_slice %95 {offsets = [0, 256], sizes = [8, 128], strides = [1, 1]} : vector<8x512xf32> to vector<8x128xf32>
    %109 = math.tanh %108 : vector<8x128xf32>
    %110 = vector.extract_strided_slice %95 {offsets = [0, 384], sizes = [8, 128], strides = [1, 1]} : vector<8x512xf32> to vector<8x128xf32>
    %111 = arith.negf %110 : vector<8x128xf32>
    %112 = math.exp %111 : vector<8x128xf32>
    %cst_36 = arith.constant 1.000000e+00 : f32
    %113 = vector.broadcast %cst_36 : f32 to vector<8x128xf32>
    %114 = arith.addf %113, %112 : vector<8x128xf32>
    %115 = arith.divf %113, %114 : vector<8x128xf32>
    %116 = arith.mulf %107, %80 : vector<8x128xf32>
    %117 = arith.mulf %101, %109 : vector<8x128xf32>
    %118 = arith.addf %116, %117 : vector<8x128xf32>
    %119 = math.tanh %118 : vector<8x128xf32>
    %120 = arith.mulf %115, %119 : vector<8x128xf32>
    %121 = arith.truncf %120 : vector<8x128xf32> to vector<8x128xbf16>
    %c0_i32_37 = arith.constant 0 : i32
    %122 = arith.addi %c0_i32_37, %c2_i32 : i32
    %123 = arith.index_cast %122 : i32 to index
    %c0_38 = arith.constant 0 : index
    %c0_39 = arith.constant 0 : index
    %124 = vector.load %arg12[%123, %c0_38, %c0_39] : memref<8x8x128xbf16, #tpu.memory_space<vmem>>, vector<1x8x128xbf16>
    %125 = vector.shape_cast %124 : vector<1x8x128xbf16> to vector<8x128xbf16>
    %126 = vector.shape_cast %121 : vector<8x128xbf16> to vector<1x8x128xbf16>
    tpu.vector_store %arg12[%123, %c0_38, %c0_39], %126 {strides = array<i32>} : memref<8x8x128xbf16, #tpu.memory_space<vmem>>, vector<1x8x128xbf16>,
    %c3_i32 = arith.constant 3 : i32
    %127 = arith.index_cast %c3_i32 : i32 to index
    %c0_40 = arith.constant 0 : index
    %c0_41 = arith.constant 0 : index
    %128 = vector.load %arg11[%127, %c0_40, %c0_41] : memref<8x8x512xbf16, #tpu.memory_space<vmem>>, vector<1x8x512xbf16>
    %129 = vector.shape_cast %128 : vector<1x8x512xbf16> to vector<8x512xbf16>
    %130 = arith.extf %129 : vector<8x512xbf16> to vector<8x512xf32>
    %131 = arith.truncf %120 : vector<8x128xf32> to vector<8x128xbf16>
    %cst_42 = arith.constant dense<0.000000e+00> : vector<8x512xf32>
    %132 = tpu.matmul %131, %1, %cst_42 {dimension_numbers = #tpu.dot_dimension_numbers<[1], [0], [0], [1], [0, 0, 1, 1], [], []>} : vector<8x128xbf16>, vector<128x512xbf16>, vector<8x512xf32> -> vector<8x512xf32>
    %133 = arith.addf %130, %132 : vector<8x512xf32>
    %134 = vector.extract_strided_slice %133 {offsets = [0, 0], sizes = [8, 128], strides = [1, 1]} : vector<8x512xf32> to vector<8x128xf32>
    %135 = arith.negf %134 : vector<8x128xf32>
    %136 = math.exp %135 : vector<8x128xf32>
    %cst_43 = arith.constant 1.000000e+00 : f32
    %137 = vector.broadcast %cst_43 : f32 to vector<8x128xf32>
    %138 = arith.addf %137, %136 : vector<8x128xf32>
    %139 = arith.divf %137, %138 : vector<8x128xf32>
    %140 = vector.extract_strided_slice %133 {offsets = [0, 128], sizes = [8, 128], strides = [1, 1]} : vector<8x512xf32> to vector<8x128xf32>
    %141 = arith.negf %140 : vector<8x128xf32>
    %142 = math.exp %141 : vector<8x128xf32>
    %cst_44 = arith.constant 1.000000e+00 : f32
    %143 = vector.broadcast %cst_44 : f32 to vector<8x128xf32>
    %144 = arith.addf %143, %142 : vector<8x128xf32>
    %145 = arith.divf %143, %144 : vector<8x128xf32>
    %146 = vector.extract_strided_slice %133 {offsets = [0, 256], sizes = [8, 128], strides = [1, 1]} : vector<8x512xf32> to vector<8x128xf32>
    %147 = math.tanh %146 : vector<8x128xf32>
    %148 = vector.extract_strided_slice %133 {offsets = [0, 384], sizes = [8, 128], strides = [1, 1]} : vector<8x512xf32> to vector<8x128xf32>
    %149 = arith.negf %148 : vector<8x128xf32>
    %150 = math.exp %149 : vector<8x128xf32>
    %cst_45 = arith.constant 1.000000e+00 : f32
    %151 = vector.broadcast %cst_45 : f32 to vector<8x128xf32>
    %152 = arith.addf %151, %150 : vector<8x128xf32>
    %153 = arith.divf %151, %152 : vector<8x128xf32>
    %154 = arith.mulf %145, %118 : vector<8x128xf32>
    %155 = arith.mulf %139, %147 : vector<8x128xf32>
    %156 = arith.addf %154, %155 : vector<8x128xf32>
    %157 = math.tanh %156 : vector<8x128xf32>
    %158 = arith.mulf %153, %157 : vector<8x128xf32>
    %159 = arith.truncf %158 : vector<8x128xf32> to vector<8x128xbf16>
    %c0_i32_46 = arith.constant 0 : i32
    %160 = arith.addi %c0_i32_46, %c3_i32 : i32
    %161 = arith.index_cast %160 : i32 to index
    %c0_47 = arith.constant 0 : index
    %c0_48 = arith.constant 0 : index
    %162 = vector.load %arg12[%161, %c0_47, %c0_48] : memref<8x8x128xbf16, #tpu.memory_space<vmem>>, vector<1x8x128xbf16>
    %163 = vector.shape_cast %162 : vector<1x8x128xbf16> to vector<8x128xbf16>
    %164 = vector.shape_cast %159 : vector<8x128xbf16> to vector<1x8x128xbf16>
    tpu.vector_store %arg12[%161, %c0_47, %c0_48], %164 {strides = array<i32>} : memref<8x8x128xbf16, #tpu.memory_space<vmem>>, vector<1x8x128xbf16>,
    %c4_i32 = arith.constant 4 : i32
    %165 = arith.index_cast %c4_i32 : i32 to index
    %c0_49 = arith.constant 0 : index
    %c0_50 = arith.constant 0 : index
    %166 = vector.load %arg11[%165, %c0_49, %c0_50] : memref<8x8x512xbf16, #tpu.memory_space<vmem>>, vector<1x8x512xbf16>
    %167 = vector.shape_cast %166 : vector<1x8x512xbf16> to vector<8x512xbf16>
    %168 = arith.extf %167 : vector<8x512xbf16> to vector<8x512xf32>
    %169 = arith.truncf %158 : vector<8x128xf32> to vector<8x128xbf16>
    %cst_51 = arith.constant dense<0.000000e+00> : vector<8x512xf32>
    %170 = tpu.matmul %169, %1, %cst_51 {dimension_numbers = #tpu.dot_dimension_numbers<[1], [0], [0], [1], [0, 0, 1, 1], [], []>} : vector<8x128xbf16>, vector<128x512xbf16>, vector<8x512xf32> -> vector<8x512xf32>
    %171 = arith.addf %168, %170 : vector<8x512xf32>
    %172 = vector.extract_strided_slice %171 {offsets = [0, 0], sizes = [8, 128], strides = [1, 1]} : vector<8x512xf32> to vector<8x128xf32>
    %173 = arith.negf %172 : vector<8x128xf32>
    %174 = math.exp %173 : vector<8x128xf32>
    %cst_52 = arith.constant 1.000000e+00 : f32
    %175 = vector.broadcast %cst_52 : f32 to vector<8x128xf32>
    %176 = arith.addf %175, %174 : vector<8x128xf32>
    %177 = arith.divf %175, %176 : vector<8x128xf32>
    %178 = vector.extract_strided_slice %171 {offsets = [0, 128], sizes = [8, 128], strides = [1, 1]} : vector<8x512xf32> to vector<8x128xf32>
    %179 = arith.negf %178 : vector<8x128xf32>
    %180 = math.exp %179 : vector<8x128xf32>
    %cst_53 = arith.constant 1.000000e+00 : f32
    %181 = vector.broadcast %cst_53 : f32 to vector<8x128xf32>
    %182 = arith.addf %181, %180 : vector<8x128xf32>
    %183 = arith.divf %181, %182 : vector<8x128xf32>
    %184 = vector.extract_strided_slice %171 {offsets = [0, 256], sizes = [8, 128], strides = [1, 1]} : vector<8x512xf32> to vector<8x128xf32>
    %185 = math.tanh %184 : vector<8x128xf32>
    %186 = vector.extract_strided_slice %171 {offsets = [0, 384], sizes = [8, 128], strides = [1, 1]} : vector<8x512xf32> to vector<8x128xf32>
    %187 = arith.negf %186 : vector<8x128xf32>
    %188 = math.exp %187 : vector<8x128xf32>
    %cst_54 = arith.constant 1.000000e+00 : f32
    %189 = vector.broadcast %cst_54 : f32 to vector<8x128xf32>
    %190 = arith.addf %189, %188 : vector<8x128xf32>
    %191 = arith.divf %189, %190 : vector<8x128xf32>
    %192 = arith.mulf %183, %156 : vector<8x128xf32>
    %193 = arith.mulf %177, %185 : vector<8x128xf32>
    %194 = arith.addf %192, %193 : vector<8x128xf32>
    %195 = math.tanh %194 : vector<8x128xf32>
    %196 = arith.mulf %191, %195 : vector<8x128xf32>
    %197 = arith.truncf %196 : vector<8x128xf32> to vector<8x128xbf16>
    %c0_i32_55 = arith.constant 0 : i32
    %198 = arith.addi %c0_i32_55, %c4_i32 : i32
    %199 = arith.index_cast %198 : i32 to index
    %c0_56 = arith.constant 0 : index
    %c0_57 = arith.constant 0 : index
    %200 = vector.load %arg12[%199, %c0_56, %c0_57] : memref<8x8x128xbf16, #tpu.memory_space<vmem>>, vector<1x8x128xbf16>
    %201 = vector.shape_cast %200 : vector<1x8x128xbf16> to vector<8x128xbf16>
    %202 = vector.shape_cast %197 : vector<8x128xbf16> to vector<1x8x128xbf16>
    tpu.vector_store %arg12[%199, %c0_56, %c0_57], %202 {strides = array<i32>} : memref<8x8x128xbf16, #tpu.memory_space<vmem>>, vector<1x8x128xbf16>,
    %c5_i32 = arith.constant 5 : i32
    %203 = arith.index_cast %c5_i32 : i32 to index
    %c0_58 = arith.constant 0 : index
    %c0_59 = arith.constant 0 : index
    %204 = vector.load %arg11[%203, %c0_58, %c0_59] : memref<8x8x512xbf16, #tpu.memory_space<vmem>>, vector<1x8x512xbf16>
    %205 = vector.shape_cast %204 : vector<1x8x512xbf16> to vector<8x512xbf16>
    %206 = arith.extf %205 : vector<8x512xbf16> to vector<8x512xf32>
    %207 = arith.truncf %196 : vector<8x128xf32> to vector<8x128xbf16>
    %cst_60 = arith.constant dense<0.000000e+00> : vector<8x512xf32>
    %208 = tpu.matmul %207, %1, %cst_60 {dimension_numbers = #tpu.dot_dimension_numbers<[1], [0], [0], [1], [0, 0, 1, 1], [], []>} : vector<8x128xbf16>, vector<128x512xbf16>, vector<8x512xf32> -> vector<8x512xf32>
    %209 = arith.addf %206, %208 : vector<8x512xf32>
    %210 = vector.extract_strided_slice %209 {offsets = [0, 0], sizes = [8, 128], strides = [1, 1]} : vector<8x512xf32> to vector<8x128xf32>
    %211 = arith.negf %210 : vector<8x128xf32>
    %212 = math.exp %211 : vector<8x128xf32>
    %cst_61 = arith.constant 1.000000e+00 : f32
    %213 = vector.broadcast %cst_61 : f32 to vector<8x128xf32>
    %214 = arith.addf %213, %212 : vector<8x128xf32>
    %215 = arith.divf %213, %214 : vector<8x128xf32>
    %216 = vector.extract_strided_slice %209 {offsets = [0, 128], sizes = [8, 128], strides = [1, 1]} : vector<8x512xf32> to vector<8x128xf32>
    %217 = arith.negf %216 : vector<8x128xf32>
    %218 = math.exp %217 : vector<8x128xf32>
    %cst_62 = arith.constant 1.000000e+00 : f32
    %219 = vector.broadcast %cst_62 : f32 to vector<8x128xf32>
    %220 = arith.addf %219, %218 : vector<8x128xf32>
    %221 = arith.divf %219, %220 : vector<8x128xf32>
    %222 = vector.extract_strided_slice %209 {offsets = [0, 256], sizes = [8, 128], strides = [1, 1]} : vector<8x512xf32> to vector<8x128xf32>
    %223 = math.tanh %222 : vector<8x128xf32>
    %224 = vector.extract_strided_slice %209 {offsets = [0, 384], sizes = [8, 128], strides = [1, 1]} : vector<8x512xf32> to vector<8x128xf32>
    %225 = arith.negf %224 : vector<8x128xf32>
    %226 = math.exp %225 : vector<8x128xf32>
    %cst_63 = arith.constant 1.000000e+00 : f32
    %227 = vector.broadcast %cst_63 : f32 to vector<8x128xf32>
    %228 = arith.addf %227, %226 : vector<8x128xf32>
    %229 = arith.divf %227, %228 : vector<8x128xf32>
    %230 = arith.mulf %221, %194 : vector<8x128xf32>
    %231 = arith.mulf %215, %223 : vector<8x128xf32>
    %232 = arith.addf %230, %231 : vector<8x128xf32>
    %233 = math.tanh %232 : vector<8x128xf32>
    %234 = arith.mulf %229, %233 : vector<8x128xf32>
    %235 = arith.truncf %234 : vector<8x128xf32> to vector<8x128xbf16>
    %c0_i32_64 = arith.constant 0 : i32
    %236 = arith.addi %c0_i32_64, %c5_i32 : i32
    %237 = arith.index_cast %236 : i32 to index
    %c0_65 = arith.constant 0 : index
    %c0_66 = arith.constant 0 : index
    %238 = vector.load %arg12[%237, %c0_65, %c0_66] : memref<8x8x128xbf16, #tpu.memory_space<vmem>>, vector<1x8x128xbf16>
    %239 = vector.shape_cast %238 : vector<1x8x128xbf16> to vector<8x128xbf16>
    %240 = vector.shape_cast %235 : vector<8x128xbf16> to vector<1x8x128xbf16>
    tpu.vector_store %arg12[%237, %c0_65, %c0_66], %240 {strides = array<i32>} : memref<8x8x128xbf16, #tpu.memory_space<vmem>>, vector<1x8x128xbf16>,
    %c6_i32 = arith.constant 6 : i32
    %241 = arith.index_cast %c6_i32 : i32 to index
    %c0_67 = arith.constant 0 : index
    %c0_68 = arith.constant 0 : index
    %242 = vector.load %arg11[%241, %c0_67, %c0_68] : memref<8x8x512xbf16, #tpu.memory_space<vmem>>, vector<1x8x512xbf16>
    %243 = vector.shape_cast %242 : vector<1x8x512xbf16> to vector<8x512xbf16>
    %244 = arith.extf %243 : vector<8x512xbf16> to vector<8x512xf32>
    %245 = arith.truncf %234 : vector<8x128xf32> to vector<8x128xbf16>
    %cst_69 = arith.constant dense<0.000000e+00> : vector<8x512xf32>
    %246 = tpu.matmul %245, %1, %cst_69 {dimension_numbers = #tpu.dot_dimension_numbers<[1], [0], [0], [1], [0, 0, 1, 1], [], []>} : vector<8x128xbf16>, vector<128x512xbf16>, vector<8x512xf32> -> vector<8x512xf32>
    %247 = arith.addf %244, %246 : vector<8x512xf32>
    %248 = vector.extract_strided_slice %247 {offsets = [0, 0], sizes = [8, 128], strides = [1, 1]} : vector<8x512xf32> to vector<8x128xf32>
    %249 = arith.negf %248 : vector<8x128xf32>
    %250 = math.exp %249 : vector<8x128xf32>
    %cst_70 = arith.constant 1.000000e+00 : f32
    %251 = vector.broadcast %cst_70 : f32 to vector<8x128xf32>
    %252 = arith.addf %251, %250 : vector<8x128xf32>
    %253 = arith.divf %251, %252 : vector<8x128xf32>
    %254 = vector.extract_strided_slice %247 {offsets = [0, 128], sizes = [8, 128], strides = [1, 1]} : vector<8x512xf32> to vector<8x128xf32>
    %255 = arith.negf %254 : vector<8x128xf32>
    %256 = math.exp %255 : vector<8x128xf32>
    %cst_71 = arith.constant 1.000000e+00 : f32
    %257 = vector.broadcast %cst_71 : f32 to vector<8x128xf32>
    %258 = arith.addf %257, %256 : vector<8x128xf32>
    %259 = arith.divf %257, %258 : vector<8x128xf32>
    %260 = vector.extract_strided_slice %247 {offsets = [0, 256], sizes = [8, 128], strides = [1, 1]} : vector<8x512xf32> to vector<8x128xf32>
    %261 = math.tanh %260 : vector<8x128xf32>
    %262 = vector.extract_strided_slice %247 {offsets = [0, 384], sizes = [8, 128], strides = [1, 1]} : vector<8x512xf32> to vector<8x128xf32>
    %263 = arith.negf %262 : vector<8x128xf32>
    %264 = math.exp %263 : vector<8x128xf32>
    %cst_72 = arith.constant 1.000000e+00 : f32
    %265 = vector.broadcast %cst_72 : f32 to vector<8x128xf32>
    %266 = arith.addf %265, %264 : vector<8x128xf32>
    %267 = arith.divf %265, %266 : vector<8x128xf32>
    %268 = arith.mulf %259, %232 : vector<8x128xf32>
    %269 = arith.mulf %253, %261 : vector<8x128xf32>
    %270 = arith.addf %268, %269 : vector<8x128xf32>
    %271 = math.tanh %270 : vector<8x128xf32>
    %272 = arith.mulf %267, %271 : vector<8x128xf32>
    %273 = arith.truncf %272 : vector<8x128xf32> to vector<8x128xbf16>
    %c0_i32_73 = arith.constant 0 : i32
    %274 = arith.addi %c0_i32_73, %c6_i32 : i32
    %275 = arith.index_cast %274 : i32 to index
    %c0_74 = arith.constant 0 : index
    %c0_75 = arith.constant 0 : index
    %276 = vector.load %arg12[%275, %c0_74, %c0_75] : memref<8x8x128xbf16, #tpu.memory_space<vmem>>, vector<1x8x128xbf16>
    %277 = vector.shape_cast %276 : vector<1x8x128xbf16> to vector<8x128xbf16>
    %278 = vector.shape_cast %273 : vector<8x128xbf16> to vector<1x8x128xbf16>
    tpu.vector_store %arg12[%275, %c0_74, %c0_75], %278 {strides = array<i32>} : memref<8x8x128xbf16, #tpu.memory_space<vmem>>, vector<1x8x128xbf16>,
    %c7_i32 = arith.constant 7 : i32
    %279 = arith.index_cast %c7_i32 : i32 to index
    %c0_76 = arith.constant 0 : index
    %c0_77 = arith.constant 0 : index
    %280 = vector.load %arg11[%279, %c0_76, %c0_77] : memref<8x8x512xbf16, #tpu.memory_space<vmem>>, vector<1x8x512xbf16>
    %281 = vector.shape_cast %280 : vector<1x8x512xbf16> to vector<8x512xbf16>
    %282 = arith.extf %281 : vector<8x512xbf16> to vector<8x512xf32>
    %283 = arith.truncf %272 : vector<8x128xf32> to vector<8x128xbf16>
    %cst_78 = arith.constant dense<0.000000e+00> : vector<8x512xf32>
    %284 = tpu.matmul %283, %1, %cst_78 {dimension_numbers = #tpu.dot_dimension_numbers<[1], [0], [0], [1], [0, 0, 1, 1], [], []>} : vector<8x128xbf16>, vector<128x512xbf16>, vector<8x512xf32> -> vector<8x512xf32>
    %285 = arith.addf %282, %284 : vector<8x512xf32>
    %286 = vector.extract_strided_slice %285 {offsets = [0, 0], sizes = [8, 128], strides = [1, 1]} : vector<8x512xf32> to vector<8x128xf32>
    %287 = arith.negf %286 : vector<8x128xf32>
    %288 = math.exp %287 : vector<8x128xf32>
    %cst_79 = arith.constant 1.000000e+00 : f32
    %289 = vector.broadcast %cst_79 : f32 to vector<8x128xf32>
    %290 = arith.addf %289, %288 : vector<8x128xf32>
    %291 = arith.divf %289, %290 : vector<8x128xf32>
    %292 = vector.extract_strided_slice %285 {offsets = [0, 128], sizes = [8, 128], strides = [1, 1]} : vector<8x512xf32> to vector<8x128xf32>
    %293 = arith.negf %292 : vector<8x128xf32>
    %294 = math.exp %293 : vector<8x128xf32>
    %cst_80 = arith.constant 1.000000e+00 : f32
    %295 = vector.broadcast %cst_80 : f32 to vector<8x128xf32>
    %296 = arith.addf %295, %294 : vector<8x128xf32>
    %297 = arith.divf %295, %296 : vector<8x128xf32>
    %298 = vector.extract_strided_slice %285 {offsets = [0, 256], sizes = [8, 128], strides = [1, 1]} : vector<8x512xf32> to vector<8x128xf32>
    %299 = math.tanh %298 : vector<8x128xf32>
    %300 = vector.extract_strided_slice %285 {offsets = [0, 384], sizes = [8, 128], strides = [1, 1]} : vector<8x512xf32> to vector<8x128xf32>
    %301 = arith.negf %300 : vector<8x128xf32>
    %302 = math.exp %301 : vector<8x128xf32>
    %cst_81 = arith.constant 1.000000e+00 : f32
    %303 = vector.broadcast %cst_81 : f32 to vector<8x128xf32>
    %304 = arith.addf %303, %302 : vector<8x128xf32>
    %305 = arith.divf %303, %304 : vector<8x128xf32>
    %306 = arith.mulf %297, %270 : vector<8x128xf32>
    %307 = arith.mulf %291, %299 : vector<8x128xf32>
    %308 = arith.addf %306, %307 : vector<8x128xf32>
    %309 = math.tanh %308 : vector<8x128xf32>
    %310 = arith.mulf %305, %309 : vector<8x128xf32>
    %311 = arith.truncf %310 : vector<8x128xf32> to vector<8x128xbf16>
    %c0_i32_82 = arith.constant 0 : i32
    %312 = arith.addi %c0_i32_82, %c7_i32 : i32
    %313 = arith.index_cast %312 : i32 to index
    %c0_83 = arith.constant 0 : index
    %c0_84 = arith.constant 0 : index
    %314 = vector.load %arg12[%313, %c0_83, %c0_84] : memref<8x8x128xbf16, #tpu.memory_space<vmem>>, vector<1x8x128xbf16>
    %315 = vector.shape_cast %314 : vector<1x8x128xbf16> to vector<8x128xbf16>
    %316 = vector.shape_cast %311 : vector<8x128xbf16> to vector<1x8x128xbf16>
    tpu.vector_store %arg12[%313, %c0_83, %c0_84], %316 {strides = array<i32>} : memref<8x8x128xbf16, #tpu.memory_space<vmem>>, vector<1x8x128xbf16>,
    %c8_i32 = arith.constant 8 : i32
    %c0_85 = arith.constant 0 : index
    %c0_86 = arith.constant 0 : index
    %317 = vector.load %arg5[%c0_85, %c0_86] : memref<128x512xbf16, #tpu.memory_space<vmem>>, vector<128x512xbf16>
    %c0_87 = arith.constant 0 : index
    %c0_88 = arith.constant 0 : index
    %318 = vector.load %arg6[%c0_87, %c0_88] : memref<128x512xbf16, #tpu.memory_space<vmem>>, vector<128x512xbf16>
    %c0_89 = arith.constant 0 : index
    %c0_90 = arith.constant 0 : index
    %319 = vector.load %arg7[%c0_89, %c0_90] : memref<1x512xf32, #tpu.memory_space<vmem>>, vector<1x512xf32>
    %cst_91 = arith.constant 0.000000e+00 : f32
    %320 = vector.broadcast %cst_91 : f32 to vector<8x128xf32>
    %cst_92 = arith.constant 0.000000e+00 : f32
    %321 = vector.broadcast %cst_92 : f32 to vector<8x128xf32>
    %c0_93 = arith.constant 0 : index
    %c0_94 = arith.constant 0 : index
    %c0_95 = arith.constant 0 : index
    %322 = vector.load %arg12[%c0_93, %c0_94, %c0_95] : memref<8x8x128xbf16, #tpu.memory_space<vmem>>, vector<8x8x128xbf16>
    %323 = vector.shape_cast %322 : vector<8x8x128xbf16> to vector<64x128xbf16>
    %cst_96 = arith.constant dense<0.000000e+00> : vector<64x512xf32>
    %324 = tpu.matmul %323, %317, %cst_96 {dimension_numbers = #tpu.dot_dimension_numbers<[1], [0], [0], [1], [0, 0, 1, 1], [], []>} : vector<64x128xbf16>, vector<128x512xbf16>, vector<64x512xf32> -> vector<64x512xf32>
    %325 = vector.broadcast %319 : vector<1x512xf32> to vector<64x512xf32>
    %326 = arith.addf %324, %325 : vector<64x512xf32>
    %327 = vector.shape_cast %326 : vector<64x512xf32> to vector<8x8x512xf32>
    %328 = arith.truncf %327 : vector<8x8x512xf32> to vector<8x8x512xbf16>
    %c0_97 = arith.constant 0 : index
    %c0_98 = arith.constant 0 : index
    %c0_99 = arith.constant 0 : index
    %329 = vector.load %arg11[%c0_97, %c0_98, %c0_99] : memref<8x8x512xbf16, #tpu.memory_space<vmem>>, vector<8x8x512xbf16>
    tpu.vector_store %arg11[%c0_97, %c0_98, %c0_99], %328 {strides = array<i32>} : memref<8x8x512xbf16, #tpu.memory_space<vmem>>, vector<8x8x512xbf16>,
    %c0_i32_100 = arith.constant 0 : i32
    %330 = arith.index_cast %c0_i32_100 : i32 to index
    %c0_101 = arith.constant 0 : index
    %c0_102 = arith.constant 0 : index
    %331 = vector.load %arg11[%330, %c0_101, %c0_102] : memref<8x8x512xbf16, #tpu.memory_space<vmem>>, vector<1x8x512xbf16>
    %332 = vector.shape_cast %331 : vector<1x8x512xbf16> to vector<8x512xbf16>
    %333 = arith.extf %332 : vector<8x512xbf16> to vector<8x512xf32>
    %334 = arith.truncf %320 : vector<8x128xf32> to vector<8x128xbf16>
    %cst_103 = arith.constant dense<0.000000e+00> : vector<8x512xf32>
    %335 = tpu.matmul %334, %318, %cst_103 {dimension_numbers = #tpu.dot_dimension_numbers<[1], [0], [0], [1], [0, 0, 1, 1], [], []>} : vector<8x128xbf16>, vector<128x512xbf16>, vector<8x512xf32> -> vector<8x512xf32>
    %336 = arith.addf %333, %335 : vector<8x512xf32>
    %337 = vector.extract_strided_slice %336 {offsets = [0, 0], sizes = [8, 128], strides = [1, 1]} : vector<8x512xf32> to vector<8x128xf32>
    %338 = arith.negf %337 : vector<8x128xf32>
    %339 = math.exp %338 : vector<8x128xf32>
    %cst_104 = arith.constant 1.000000e+00 : f32
    %340 = vector.broadcast %cst_104 : f32 to vector<8x128xf32>
    %341 = arith.addf %340, %339 : vector<8x128xf32>
    %342 = arith.divf %340, %341 : vector<8x128xf32>
    %343 = vector.extract_strided_slice %336 {offsets = [0, 128], sizes = [8, 128], strides = [1, 1]} : vector<8x512xf32> to vector<8x128xf32>
    %344 = arith.negf %343 : vector<8x128xf32>
    %345 = math.exp %344 : vector<8x128xf32>
    %cst_105 = arith.constant 1.000000e+00 : f32
    %346 = vector.broadcast %cst_105 : f32 to vector<8x128xf32>
    %347 = arith.addf %346, %345 : vector<8x128xf32>
    %348 = arith.divf %346, %347 : vector<8x128xf32>
    %349 = vector.extract_strided_slice %336 {offsets = [0, 256], sizes = [8, 128], strides = [1, 1]} : vector<8x512xf32> to vector<8x128xf32>
    %350 = math.tanh %349 : vector<8x128xf32>
    %351 = vector.extract_strided_slice %336 {offsets = [0, 384], sizes = [8, 128], strides = [1, 1]} : vector<8x512xf32> to vector<8x128xf32>
    %352 = arith.negf %351 : vector<8x128xf32>
    %353 = math.exp %352 : vector<8x128xf32>
    %cst_106 = arith.constant 1.000000e+00 : f32
    %354 = vector.broadcast %cst_106 : f32 to vector<8x128xf32>
    %355 = arith.addf %354, %353 : vector<8x128xf32>
    %356 = arith.divf %354, %355 : vector<8x128xf32>
    %357 = arith.mulf %348, %321 : vector<8x128xf32>
    %358 = arith.mulf %342, %350 : vector<8x128xf32>
    %359 = arith.addf %357, %358 : vector<8x128xf32>
    %360 = math.tanh %359 : vector<8x128xf32>
    %361 = arith.mulf %356, %360 : vector<8x128xf32>
    %362 = arith.truncf %361 : vector<8x128xf32> to vector<8x128xbf16>
    %c0_i32_107 = arith.constant 0 : i32
    %363 = arith.addi %c0_i32_107, %c0_i32_100 : i32
    %364 = arith.index_cast %363 : i32 to index
    %c0_108 = arith.constant 0 : index
    %c0_109 = arith.constant 0 : index
    %365 = vector.load %arg12[%364, %c0_108, %c0_109] : memref<8x8x128xbf16, #tpu.memory_space<vmem>>, vector<1x8x128xbf16>
    %366 = vector.shape_cast %365 : vector<1x8x128xbf16> to vector<8x128xbf16>
    %367 = vector.shape_cast %362 : vector<8x128xbf16> to vector<1x8x128xbf16>
    tpu.vector_store %arg12[%364, %c0_108, %c0_109], %367 {strides = array<i32>} : memref<8x8x128xbf16, #tpu.memory_space<vmem>>, vector<1x8x128xbf16>,
    %c1_i32_110 = arith.constant 1 : i32
    %368 = arith.index_cast %c1_i32_110 : i32 to index
    %c0_111 = arith.constant 0 : index
    %c0_112 = arith.constant 0 : index
    %369 = vector.load %arg11[%368, %c0_111, %c0_112] : memref<8x8x512xbf16, #tpu.memory_space<vmem>>, vector<1x8x512xbf16>
    %370 = vector.shape_cast %369 : vector<1x8x512xbf16> to vector<8x512xbf16>
    %371 = arith.extf %370 : vector<8x512xbf16> to vector<8x512xf32>
    %372 = arith.truncf %361 : vector<8x128xf32> to vector<8x128xbf16>
    %cst_113 = arith.constant dense<0.000000e+00> : vector<8x512xf32>
    %373 = tpu.matmul %372, %318, %cst_113 {dimension_numbers = #tpu.dot_dimension_numbers<[1], [0], [0], [1], [0, 0, 1, 1], [], []>} : vector<8x128xbf16>, vector<128x512xbf16>, vector<8x512xf32> -> vector<8x512xf32>
    %374 = arith.addf %371, %373 : vector<8x512xf32>
    %375 = vector.extract_strided_slice %374 {offsets = [0, 0], sizes = [8, 128], strides = [1, 1]} : vector<8x512xf32> to vector<8x128xf32>
    %376 = arith.negf %375 : vector<8x128xf32>
    %377 = math.exp %376 : vector<8x128xf32>
    %cst_114 = arith.constant 1.000000e+00 : f32
    %378 = vector.broadcast %cst_114 : f32 to vector<8x128xf32>
    %379 = arith.addf %378, %377 : vector<8x128xf32>
    %380 = arith.divf %378, %379 : vector<8x128xf32>
    %381 = vector.extract_strided_slice %374 {offsets = [0, 128], sizes = [8, 128], strides = [1, 1]} : vector<8x512xf32> to vector<8x128xf32>
    %382 = arith.negf %381 : vector<8x128xf32>
    %383 = math.exp %382 : vector<8x128xf32>
    %cst_115 = arith.constant 1.000000e+00 : f32
    %384 = vector.broadcast %cst_115 : f32 to vector<8x128xf32>
    %385 = arith.addf %384, %383 : vector<8x128xf32>
    %386 = arith.divf %384, %385 : vector<8x128xf32>
    %387 = vector.extract_strided_slice %374 {offsets = [0, 256], sizes = [8, 128], strides = [1, 1]} : vector<8x512xf32> to vector<8x128xf32>
    %388 = math.tanh %387 : vector<8x128xf32>
    %389 = vector.extract_strided_slice %374 {offsets = [0, 384], sizes = [8, 128], strides = [1, 1]} : vector<8x512xf32> to vector<8x128xf32>
    %390 = arith.negf %389 : vector<8x128xf32>
    %391 = math.exp %390 : vector<8x128xf32>
    %cst_116 = arith.constant 1.000000e+00 : f32
    %392 = vector.broadcast %cst_116 : f32 to vector<8x128xf32>
    %393 = arith.addf %392, %391 : vector<8x128xf32>
    %394 = arith.divf %392, %393 : vector<8x128xf32>
    %395 = arith.mulf %386, %359 : vector<8x128xf32>
    %396 = arith.mulf %380, %388 : vector<8x128xf32>
    %397 = arith.addf %395, %396 : vector<8x128xf32>
    %398 = math.tanh %397 : vector<8x128xf32>
    %399 = arith.mulf %394, %398 : vector<8x128xf32>
    %400 = arith.truncf %399 : vector<8x128xf32> to vector<8x128xbf16>
    %c0_i32_117 = arith.constant 0 : i32
    %401 = arith.addi %c0_i32_117, %c1_i32_110 : i32
    %402 = arith.index_cast %401 : i32 to index
    %c0_118 = arith.constant 0 : index
    %c0_119 = arith.constant 0 : index
    %403 = vector.load %arg12[%402, %c0_118, %c0_119] : memref<8x8x128xbf16, #tpu.memory_space<vmem>>, vector<1x8x128xbf16>
    %404 = vector.shape_cast %403 : vector<1x8x128xbf16> to vector<8x128xbf16>
    %405 = vector.shape_cast %400 : vector<8x128xbf16> to vector<1x8x128xbf16>
    tpu.vector_store %arg12[%402, %c0_118, %c0_119], %405 {strides = array<i32>} : memref<8x8x128xbf16, #tpu.memory_space<vmem>>, vector<1x8x128xbf16>,
    %c2_i32_120 = arith.constant 2 : i32
    %406 = arith.index_cast %c2_i32_120 : i32 to index
    %c0_121 = arith.constant 0 : index
    %c0_122 = arith.constant 0 : index
    %407 = vector.load %arg11[%406, %c0_121, %c0_122] : memref<8x8x512xbf16, #tpu.memory_space<vmem>>, vector<1x8x512xbf16>
    %408 = vector.shape_cast %407 : vector<1x8x512xbf16> to vector<8x512xbf16>
    %409 = arith.extf %408 : vector<8x512xbf16> to vector<8x512xf32>
    %410 = arith.truncf %399 : vector<8x128xf32> to vector<8x128xbf16>
    %cst_123 = arith.constant dense<0.000000e+00> : vector<8x512xf32>
    %411 = tpu.matmul %410, %318, %cst_123 {dimension_numbers = #tpu.dot_dimension_numbers<[1], [0], [0], [1], [0, 0, 1, 1], [], []>} : vector<8x128xbf16>, vector<128x512xbf16>, vector<8x512xf32> -> vector<8x512xf32>
    %412 = arith.addf %409, %411 : vector<8x512xf32>
    %413 = vector.extract_strided_slice %412 {offsets = [0, 0], sizes = [8, 128], strides = [1, 1]} : vector<8x512xf32> to vector<8x128xf32>
    %414 = arith.negf %413 : vector<8x128xf32>
    %415 = math.exp %414 : vector<8x128xf32>
    %cst_124 = arith.constant 1.000000e+00 : f32
    %416 = vector.broadcast %cst_124 : f32 to vector<8x128xf32>
    %417 = arith.addf %416, %415 : vector<8x128xf32>
    %418 = arith.divf %416, %417 : vector<8x128xf32>
    %419 = vector.extract_strided_slice %412 {offsets = [0, 128], sizes = [8, 128], strides = [1, 1]} : vector<8x512xf32> to vector<8x128xf32>
    %420 = arith.negf %419 : vector<8x128xf32>
    %421 = math.exp %420 : vector<8x128xf32>
    %cst_125 = arith.constant 1.000000e+00 : f32
    %422 = vector.broadcast %cst_125 : f32 to vector<8x128xf32>
    %423 = arith.addf %422, %421 : vector<8x128xf32>
    %424 = arith.divf %422, %423 : vector<8x128xf32>
    %425 = vector.extract_strided_slice %412 {offsets = [0, 256], sizes = [8, 128], strides = [1, 1]} : vector<8x512xf32> to vector<8x128xf32>
    %426 = math.tanh %425 : vector<8x128xf32>
    %427 = vector.extract_strided_slice %412 {offsets = [0, 384], sizes = [8, 128], strides = [1, 1]} : vector<8x512xf32> to vector<8x128xf32>
    %428 = arith.negf %427 : vector<8x128xf32>
    %429 = math.exp %428 : vector<8x128xf32>
    %cst_126 = arith.constant 1.000000e+00 : f32
    %430 = vector.broadcast %cst_126 : f32 to vector<8x128xf32>
    %431 = arith.addf %430, %429 : vector<8x128xf32>
    %432 = arith.divf %430, %431 : vector<8x128xf32>
    %433 = arith.mulf %424, %397 : vector<8x128xf32>
    %434 = arith.mulf %418, %426 : vector<8x128xf32>
    %435 = arith.addf %433, %434 : vector<8x128xf32>
    %436 = math.tanh %435 : vector<8x128xf32>
    %437 = arith.mulf %432, %436 : vector<8x128xf32>
    %438 = arith.truncf %437 : vector<8x128xf32> to vector<8x128xbf16>
    %c0_i32_127 = arith.constant 0 : i32
    %439 = arith.addi %c0_i32_127, %c2_i32_120 : i32
    %440 = arith.index_cast %439 : i32 to index
    %c0_128 = arith.constant 0 : index
    %c0_129 = arith.constant 0 : index
    %441 = vector.load %arg12[%440, %c0_128, %c0_129] : memref<8x8x128xbf16, #tpu.memory_space<vmem>>, vector<1x8x128xbf16>
    %442 = vector.shape_cast %441 : vector<1x8x128xbf16> to vector<8x128xbf16>
    %443 = vector.shape_cast %438 : vector<8x128xbf16> to vector<1x8x128xbf16>
    tpu.vector_store %arg12[%440, %c0_128, %c0_129], %443 {strides = array<i32>} : memref<8x8x128xbf16, #tpu.memory_space<vmem>>, vector<1x8x128xbf16>,
    %c3_i32_130 = arith.constant 3 : i32
    %444 = arith.index_cast %c3_i32_130 : i32 to index
    %c0_131 = arith.constant 0 : index
    %c0_132 = arith.constant 0 : index
    %445 = vector.load %arg11[%444, %c0_131, %c0_132] : memref<8x8x512xbf16, #tpu.memory_space<vmem>>, vector<1x8x512xbf16>
    %446 = vector.shape_cast %445 : vector<1x8x512xbf16> to vector<8x512xbf16>
    %447 = arith.extf %446 : vector<8x512xbf16> to vector<8x512xf32>
    %448 = arith.truncf %437 : vector<8x128xf32> to vector<8x128xbf16>
    %cst_133 = arith.constant dense<0.000000e+00> : vector<8x512xf32>
    %449 = tpu.matmul %448, %318, %cst_133 {dimension_numbers = #tpu.dot_dimension_numbers<[1], [0], [0], [1], [0, 0, 1, 1], [], []>} : vector<8x128xbf16>, vector<128x512xbf16>, vector<8x512xf32> -> vector<8x512xf32>
    %450 = arith.addf %447, %449 : vector<8x512xf32>
    %451 = vector.extract_strided_slice %450 {offsets = [0, 0], sizes = [8, 128], strides = [1, 1]} : vector<8x512xf32> to vector<8x128xf32>
    %452 = arith.negf %451 : vector<8x128xf32>
    %453 = math.exp %452 : vector<8x128xf32>
    %cst_134 = arith.constant 1.000000e+00 : f32
    %454 = vector.broadcast %cst_134 : f32 to vector<8x128xf32>
    %455 = arith.addf %454, %453 : vector<8x128xf32>
    %456 = arith.divf %454, %455 : vector<8x128xf32>
    %457 = vector.extract_strided_slice %450 {offsets = [0, 128], sizes = [8, 128], strides = [1, 1]} : vector<8x512xf32> to vector<8x128xf32>
    %458 = arith.negf %457 : vector<8x128xf32>
    %459 = math.exp %458 : vector<8x128xf32>
    %cst_135 = arith.constant 1.000000e+00 : f32
    %460 = vector.broadcast %cst_135 : f32 to vector<8x128xf32>
    %461 = arith.addf %460, %459 : vector<8x128xf32>
    %462 = arith.divf %460, %461 : vector<8x128xf32>
    %463 = vector.extract_strided_slice %450 {offsets = [0, 256], sizes = [8, 128], strides = [1, 1]} : vector<8x512xf32> to vector<8x128xf32>
    %464 = math.tanh %463 : vector<8x128xf32>
    %465 = vector.extract_strided_slice %450 {offsets = [0, 384], sizes = [8, 128], strides = [1, 1]} : vector<8x512xf32> to vector<8x128xf32>
    %466 = arith.negf %465 : vector<8x128xf32>
    %467 = math.exp %466 : vector<8x128xf32>
    %cst_136 = arith.constant 1.000000e+00 : f32
    %468 = vector.broadcast %cst_136 : f32 to vector<8x128xf32>
    %469 = arith.addf %468, %467 : vector<8x128xf32>
    %470 = arith.divf %468, %469 : vector<8x128xf32>
    %471 = arith.mulf %462, %435 : vector<8x128xf32>
    %472 = arith.mulf %456, %464 : vector<8x128xf32>
    %473 = arith.addf %471, %472 : vector<8x128xf32>
    %474 = math.tanh %473 : vector<8x128xf32>
    %475 = arith.mulf %470, %474 : vector<8x128xf32>
    %476 = arith.truncf %475 : vector<8x128xf32> to vector<8x128xbf16>
    %c0_i32_137 = arith.constant 0 : i32
    %477 = arith.addi %c0_i32_137, %c3_i32_130 : i32
    %478 = arith.index_cast %477 : i32 to index
    %c0_138 = arith.constant 0 : index
    %c0_139 = arith.constant 0 : index
    %479 = vector.load %arg12[%478, %c0_138, %c0_139] : memref<8x8x128xbf16, #tpu.memory_space<vmem>>, vector<1x8x128xbf16>
    %480 = vector.shape_cast %479 : vector<1x8x128xbf16> to vector<8x128xbf16>
    %481 = vector.shape_cast %476 : vector<8x128xbf16> to vector<1x8x128xbf16>
    tpu.vector_store %arg12[%478, %c0_138, %c0_139], %481 {strides = array<i32>} : memref<8x8x128xbf16, #tpu.memory_space<vmem>>, vector<1x8x128xbf16>,
    %c4_i32_140 = arith.constant 4 : i32
    %482 = arith.index_cast %c4_i32_140 : i32 to index
    %c0_141 = arith.constant 0 : index
    %c0_142 = arith.constant 0 : index
    %483 = vector.load %arg11[%482, %c0_141, %c0_142] : memref<8x8x512xbf16, #tpu.memory_space<vmem>>, vector<1x8x512xbf16>
    %484 = vector.shape_cast %483 : vector<1x8x512xbf16> to vector<8x512xbf16>
    %485 = arith.extf %484 : vector<8x512xbf16> to vector<8x512xf32>
    %486 = arith.truncf %475 : vector<8x128xf32> to vector<8x128xbf16>
    %cst_143 = arith.constant dense<0.000000e+00> : vector<8x512xf32>
    %487 = tpu.matmul %486, %318, %cst_143 {dimension_numbers = #tpu.dot_dimension_numbers<[1], [0], [0], [1], [0, 0, 1, 1], [], []>} : vector<8x128xbf16>, vector<128x512xbf16>, vector<8x512xf32> -> vector<8x512xf32>
    %488 = arith.addf %485, %487 : vector<8x512xf32>
    %489 = vector.extract_strided_slice %488 {offsets = [0, 0], sizes = [8, 128], strides = [1, 1]} : vector<8x512xf32> to vector<8x128xf32>
    %490 = arith.negf %489 : vector<8x128xf32>
    %491 = math.exp %490 : vector<8x128xf32>
    %cst_144 = arith.constant 1.000000e+00 : f32
    %492 = vector.broadcast %cst_144 : f32 to vector<8x128xf32>
    %493 = arith.addf %492, %491 : vector<8x128xf32>
    %494 = arith.divf %492, %493 : vector<8x128xf32>
    %495 = vector.extract_strided_slice %488 {offsets = [0, 128], sizes = [8, 128], strides = [1, 1]} : vector<8x512xf32> to vector<8x128xf32>
    %496 = arith.negf %495 : vector<8x128xf32>
    %497 = math.exp %496 : vector<8x128xf32>
    %cst_145 = arith.constant 1.000000e+00 : f32
    %498 = vector.broadcast %cst_145 : f32 to vector<8x128xf32>
    %499 = arith.addf %498, %497 : vector<8x128xf32>
    %500 = arith.divf %498, %499 : vector<8x128xf32>
    %501 = vector.extract_strided_slice %488 {offsets = [0, 256], sizes = [8, 128], strides = [1, 1]} : vector<8x512xf32> to vector<8x128xf32>
    %502 = math.tanh %501 : vector<8x128xf32>
    %503 = vector.extract_strided_slice %488 {offsets = [0, 384], sizes = [8, 128], strides = [1, 1]} : vector<8x512xf32> to vector<8x128xf32>
    %504 = arith.negf %503 : vector<8x128xf32>
    %505 = math.exp %504 : vector<8x128xf32>
    %cst_146 = arith.constant 1.000000e+00 : f32
    %506 = vector.broadcast %cst_146 : f32 to vector<8x128xf32>
    %507 = arith.addf %506, %505 : vector<8x128xf32>
    %508 = arith.divf %506, %507 : vector<8x128xf32>
    %509 = arith.mulf %500, %473 : vector<8x128xf32>
    %510 = arith.mulf %494, %502 : vector<8x128xf32>
    %511 = arith.addf %509, %510 : vector<8x128xf32>
    %512 = math.tanh %511 : vector<8x128xf32>
    %513 = arith.mulf %508, %512 : vector<8x128xf32>
    %514 = arith.truncf %513 : vector<8x128xf32> to vector<8x128xbf16>
    %c0_i32_147 = arith.constant 0 : i32
    %515 = arith.addi %c0_i32_147, %c4_i32_140 : i32
    %516 = arith.index_cast %515 : i32 to index
    %c0_148 = arith.constant 0 : index
    %c0_149 = arith.constant 0 : index
    %517 = vector.load %arg12[%516, %c0_148, %c0_149] : memref<8x8x128xbf16, #tpu.memory_space<vmem>>, vector<1x8x128xbf16>
    %518 = vector.shape_cast %517 : vector<1x8x128xbf16> to vector<8x128xbf16>
    %519 = vector.shape_cast %514 : vector<8x128xbf16> to vector<1x8x128xbf16>
    tpu.vector_store %arg12[%516, %c0_148, %c0_149], %519 {strides = array<i32>} : memref<8x8x128xbf16, #tpu.memory_space<vmem>>, vector<1x8x128xbf16>,
    %c5_i32_150 = arith.constant 5 : i32
    %520 = arith.index_cast %c5_i32_150 : i32 to index
    %c0_151 = arith.constant 0 : index
    %c0_152 = arith.constant 0 : index
    %521 = vector.load %arg11[%520, %c0_151, %c0_152] : memref<8x8x512xbf16, #tpu.memory_space<vmem>>, vector<1x8x512xbf16>
    %522 = vector.shape_cast %521 : vector<1x8x512xbf16> to vector<8x512xbf16>
    %523 = arith.extf %522 : vector<8x512xbf16> to vector<8x512xf32>
    %524 = arith.truncf %513 : vector<8x128xf32> to vector<8x128xbf16>
    %cst_153 = arith.constant dense<0.000000e+00> : vector<8x512xf32>
    %525 = tpu.matmul %524, %318, %cst_153 {dimension_numbers = #tpu.dot_dimension_numbers<[1], [0], [0], [1], [0, 0, 1, 1], [], []>} : vector<8x128xbf16>, vector<128x512xbf16>, vector<8x512xf32> -> vector<8x512xf32>
    %526 = arith.addf %523, %525 : vector<8x512xf32>
    %527 = vector.extract_strided_slice %526 {offsets = [0, 0], sizes = [8, 128], strides = [1, 1]} : vector<8x512xf32> to vector<8x128xf32>
    %528 = arith.negf %527 : vector<8x128xf32>
    %529 = math.exp %528 : vector<8x128xf32>
    %cst_154 = arith.constant 1.000000e+00 : f32
    %530 = vector.broadcast %cst_154 : f32 to vector<8x128xf32>
    %531 = arith.addf %530, %529 : vector<8x128xf32>
    %532 = arith.divf %530, %531 : vector<8x128xf32>
    %533 = vector.extract_strided_slice %526 {offsets = [0, 128], sizes = [8, 128], strides = [1, 1]} : vector<8x512xf32> to vector<8x128xf32>
    %534 = arith.negf %533 : vector<8x128xf32>
    %535 = math.exp %534 : vector<8x128xf32>
    %cst_155 = arith.constant 1.000000e+00 : f32
    %536 = vector.broadcast %cst_155 : f32 to vector<8x128xf32>
    %537 = arith.addf %536, %535 : vector<8x128xf32>
    %538 = arith.divf %536, %537 : vector<8x128xf32>
    %539 = vector.extract_strided_slice %526 {offsets = [0, 256], sizes = [8, 128], strides = [1, 1]} : vector<8x512xf32> to vector<8x128xf32>
    %540 = math.tanh %539 : vector<8x128xf32>
    %541 = vector.extract_strided_slice %526 {offsets = [0, 384], sizes = [8, 128], strides = [1, 1]} : vector<8x512xf32> to vector<8x128xf32>
    %542 = arith.negf %541 : vector<8x128xf32>
    %543 = math.exp %542 : vector<8x128xf32>
    %cst_156 = arith.constant 1.000000e+00 : f32
    %544 = vector.broadcast %cst_156 : f32 to vector<8x128xf32>
    %545 = arith.addf %544, %543 : vector<8x128xf32>
    %546 = arith.divf %544, %545 : vector<8x128xf32>
    %547 = arith.mulf %538, %511 : vector<8x128xf32>
    %548 = arith.mulf %532, %540 : vector<8x128xf32>
    %549 = arith.addf %547, %548 : vector<8x128xf32>
    %550 = math.tanh %549 : vector<8x128xf32>
    %551 = arith.mulf %546, %550 : vector<8x128xf32>
    %552 = arith.truncf %551 : vector<8x128xf32> to vector<8x128xbf16>
    %c0_i32_157 = arith.constant 0 : i32
    %553 = arith.addi %c0_i32_157, %c5_i32_150 : i32
    %554 = arith.index_cast %553 : i32 to index
    %c0_158 = arith.constant 0 : index
    %c0_159 = arith.constant 0 : index
    %555 = vector.load %arg12[%554, %c0_158, %c0_159] : memref<8x8x128xbf16, #tpu.memory_space<vmem>>, vector<1x8x128xbf16>
    %556 = vector.shape_cast %555 : vector<1x8x128xbf16> to vector<8x128xbf16>
    %557 = vector.shape_cast %552 : vector<8x128xbf16> to vector<1x8x128xbf16>
    tpu.vector_store %arg12[%554, %c0_158, %c0_159], %557 {strides = array<i32>} : memref<8x8x128xbf16, #tpu.memory_space<vmem>>, vector<1x8x128xbf16>,
    %c6_i32_160 = arith.constant 6 : i32
    %558 = arith.index_cast %c6_i32_160 : i32 to index
    %c0_161 = arith.constant 0 : index
    %c0_162 = arith.constant 0 : index
    %559 = vector.load %arg11[%558, %c0_161, %c0_162] : memref<8x8x512xbf16, #tpu.memory_space<vmem>>, vector<1x8x512xbf16>
    %560 = vector.shape_cast %559 : vector<1x8x512xbf16> to vector<8x512xbf16>
    %561 = arith.extf %560 : vector<8x512xbf16> to vector<8x512xf32>
    %562 = arith.truncf %551 : vector<8x128xf32> to vector<8x128xbf16>
    %cst_163 = arith.constant dense<0.000000e+00> : vector<8x512xf32>
    %563 = tpu.matmul %562, %318, %cst_163 {dimension_numbers = #tpu.dot_dimension_numbers<[1], [0], [0], [1], [0, 0, 1, 1], [], []>} : vector<8x128xbf16>, vector<128x512xbf16>, vector<8x512xf32> -> vector<8x512xf32>
    %564 = arith.addf %561, %563 : vector<8x512xf32>
    %565 = vector.extract_strided_slice %564 {offsets = [0, 0], sizes = [8, 128], strides = [1, 1]} : vector<8x512xf32> to vector<8x128xf32>
    %566 = arith.negf %565 : vector<8x128xf32>
    %567 = math.exp %566 : vector<8x128xf32>
    %cst_164 = arith.constant 1.000000e+00 : f32
    %568 = vector.broadcast %cst_164 : f32 to vector<8x128xf32>
    %569 = arith.addf %568, %567 : vector<8x128xf32>
    %570 = arith.divf %568, %569 : vector<8x128xf32>
    %571 = vector.extract_strided_slice %564 {offsets = [0, 128], sizes = [8, 128], strides = [1, 1]} : vector<8x512xf32> to vector<8x128xf32>
    %572 = arith.negf %571 : vector<8x128xf32>
    %573 = math.exp %572 : vector<8x128xf32>
    %cst_165 = arith.constant 1.000000e+00 : f32
    %574 = vector.broadcast %cst_165 : f32 to vector<8x128xf32>
    %575 = arith.addf %574, %573 : vector<8x128xf32>
    %576 = arith.divf %574, %575 : vector<8x128xf32>
    %577 = vector.extract_strided_slice %564 {offsets = [0, 256], sizes = [8, 128], strides = [1, 1]} : vector<8x512xf32> to vector<8x128xf32>
    %578 = math.tanh %577 : vector<8x128xf32>
    %579 = vector.extract_strided_slice %564 {offsets = [0, 384], sizes = [8, 128], strides = [1, 1]} : vector<8x512xf32> to vector<8x128xf32>
    %580 = arith.negf %579 : vector<8x128xf32>
    %581 = math.exp %580 : vector<8x128xf32>
    %cst_166 = arith.constant 1.000000e+00 : f32
    %582 = vector.broadcast %cst_166 : f32 to vector<8x128xf32>
    %583 = arith.addf %582, %581 : vector<8x128xf32>
    %584 = arith.divf %582, %583 : vector<8x128xf32>
    %585 = arith.mulf %576, %549 : vector<8x128xf32>
    %586 = arith.mulf %570, %578 : vector<8x128xf32>
    %587 = arith.addf %585, %586 : vector<8x128xf32>
    %588 = math.tanh %587 : vector<8x128xf32>
    %589 = arith.mulf %584, %588 : vector<8x128xf32>
    %590 = arith.truncf %589 : vector<8x128xf32> to vector<8x128xbf16>
    %c0_i32_167 = arith.constant 0 : i32
    %591 = arith.addi %c0_i32_167, %c6_i32_160 : i32
    %592 = arith.index_cast %591 : i32 to index
    %c0_168 = arith.constant 0 : index
    %c0_169 = arith.constant 0 : index
    %593 = vector.load %arg12[%592, %c0_168, %c0_169] : memref<8x8x128xbf16, #tpu.memory_space<vmem>>, vector<1x8x128xbf16>
    %594 = vector.shape_cast %593 : vector<1x8x128xbf16> to vector<8x128xbf16>
    %595 = vector.shape_cast %590 : vector<8x128xbf16> to vector<1x8x128xbf16>
    tpu.vector_store %arg12[%592, %c0_168, %c0_169], %595 {strides = array<i32>} : memref<8x8x128xbf16, #tpu.memory_space<vmem>>, vector<1x8x128xbf16>,
    %c7_i32_170 = arith.constant 7 : i32
    %596 = arith.index_cast %c7_i32_170 : i32 to index
    %c0_171 = arith.constant 0 : index
    %c0_172 = arith.constant 0 : index
    %597 = vector.load %arg11[%596, %c0_171, %c0_172] : memref<8x8x512xbf16, #tpu.memory_space<vmem>>, vector<1x8x512xbf16>
    %598 = vector.shape_cast %597 : vector<1x8x512xbf16> to vector<8x512xbf16>
    %599 = arith.extf %598 : vector<8x512xbf16> to vector<8x512xf32>
    %600 = arith.truncf %589 : vector<8x128xf32> to vector<8x128xbf16>
    %cst_173 = arith.constant dense<0.000000e+00> : vector<8x512xf32>
    %601 = tpu.matmul %600, %318, %cst_173 {dimension_numbers = #tpu.dot_dimension_numbers<[1], [0], [0], [1], [0, 0, 1, 1], [], []>} : vector<8x128xbf16>, vector<128x512xbf16>, vector<8x512xf32> -> vector<8x512xf32>
    %602 = arith.addf %599, %601 : vector<8x512xf32>
    %603 = vector.extract_strided_slice %602 {offsets = [0, 0], sizes = [8, 128], strides = [1, 1]} : vector<8x512xf32> to vector<8x128xf32>
    %604 = arith.negf %603 : vector<8x128xf32>
    %605 = math.exp %604 : vector<8x128xf32>
    %cst_174 = arith.constant 1.000000e+00 : f32
    %606 = vector.broadcast %cst_174 : f32 to vector<8x128xf32>
    %607 = arith.addf %606, %605 : vector<8x128xf32>
    %608 = arith.divf %606, %607 : vector<8x128xf32>
    %609 = vector.extract_strided_slice %602 {offsets = [0, 128], sizes = [8, 128], strides = [1, 1]} : vector<8x512xf32> to vector<8x128xf32>
    %610 = arith.negf %609 : vector<8x128xf32>
    %611 = math.exp %610 : vector<8x128xf32>
    %cst_175 = arith.constant 1.000000e+00 : f32
    %612 = vector.broadcast %cst_175 : f32 to vector<8x128xf32>
    %613 = arith.addf %612, %611 : vector<8x128xf32>
    %614 = arith.divf %612, %613 : vector<8x128xf32>
    %615 = vector.extract_strided_slice %602 {offsets = [0, 256], sizes = [8, 128], strides = [1, 1]} : vector<8x512xf32> to vector<8x128xf32>
    %616 = math.tanh %615 : vector<8x128xf32>
    %617 = vector.extract_strided_slice %602 {offsets = [0, 384], sizes = [8, 128], strides = [1, 1]} : vector<8x512xf32> to vector<8x128xf32>
    %618 = arith.negf %617 : vector<8x128xf32>
    %619 = math.exp %618 : vector<8x128xf32>
    %cst_176 = arith.constant 1.000000e+00 : f32
    %620 = vector.broadcast %cst_176 : f32 to vector<8x128xf32>
    %621 = arith.addf %620, %619 : vector<8x128xf32>
    %622 = arith.divf %620, %621 : vector<8x128xf32>
    %623 = arith.mulf %614, %587 : vector<8x128xf32>
    %624 = arith.mulf %608, %616 : vector<8x128xf32>
    %625 = arith.addf %623, %624 : vector<8x128xf32>
    %626 = math.tanh %625 : vector<8x128xf32>
    %627 = arith.mulf %622, %626 : vector<8x128xf32>
    %628 = arith.truncf %627 : vector<8x128xf32> to vector<8x128xbf16>
    %c0_i32_177 = arith.constant 0 : i32
    %629 = arith.addi %c0_i32_177, %c7_i32_170 : i32
    %630 = arith.index_cast %629 : i32 to index
    %c0_178 = arith.constant 0 : index
    %c0_179 = arith.constant 0 : index
    %631 = vector.load %arg12[%630, %c0_178, %c0_179] : memref<8x8x128xbf16, #tpu.memory_space<vmem>>, vector<1x8x128xbf16>
    %632 = vector.shape_cast %631 : vector<1x8x128xbf16> to vector<8x128xbf16>
    %633 = vector.shape_cast %628 : vector<8x128xbf16> to vector<1x8x128xbf16>
    tpu.vector_store %arg12[%630, %c0_178, %c0_179], %633 {strides = array<i32>} : memref<8x8x128xbf16, #tpu.memory_space<vmem>>, vector<1x8x128xbf16>,
    %c8_i32_180 = arith.constant 8 : i32
    %c0_181 = arith.constant 0 : index
    %c0_182 = arith.constant 0 : index
    %634 = vector.load %arg8[%c0_181, %c0_182] : memref<128x128xbf16, #tpu.memory_space<vmem>>, vector<128x128xbf16>
    %c0_183 = arith.constant 0 : index
    %c0_184 = arith.constant 0 : index
    %635 = vector.load %arg9[%c0_183, %c0_184] : memref<1x128xf32, #tpu.memory_space<vmem>>, vector<1x128xf32>
    %c0_185 = arith.constant 0 : index
    %c0_186 = arith.constant 0 : index
    %c0_187 = arith.constant 0 : index
    %636 = vector.load %arg12[%c0_185, %c0_186, %c0_187] : memref<8x8x128xbf16, #tpu.memory_space<vmem>>, vector<8x8x128xbf16>
    %637 = vector.shape_cast %636 : vector<8x8x128xbf16> to vector<64x128xbf16>
    %cst_188 = arith.constant dense<0.000000e+00> : vector<64x128xf32>
    %638 = tpu.matmul %637, %634, %cst_188 {dimension_numbers = #tpu.dot_dimension_numbers<[1], [0], [0], [1], [0, 0, 1, 1], [], []>} : vector<64x128xbf16>, vector<128x128xbf16>, vector<64x128xf32> -> vector<64x128xf32>
    %639 = vector.broadcast %635 : vector<1x128xf32> to vector<64x128xf32>
    %640 = arith.addf %638, %639 : vector<64x128xf32>
    %641 = vector.shape_cast %640 : vector<64x128xf32> to vector<8x8x128xf32>
    %642 = arith.truncf %641 : vector<8x8x128xf32> to vector<8x8x128xbf16>
    %c0_189 = arith.constant 0 : index
    %c0_190 = arith.constant 0 : index
    %c0_191 = arith.constant 0 : index
    %643 = vector.load %arg10[%c0_189, %c0_190, %c0_191] : memref<8x8x128xbf16, #tpu.memory_space<vmem>>, vector<8x8x128xbf16>
    tpu.vector_store %arg10[%c0_189, %c0_190, %c0_191], %642 {strides = array<i32>} : memref<8x8x128xbf16, #tpu.memory_space<vmem>>, vector<8x8x128xbf16>,
    return
  }
  func.func @transform_0(%arg0: i32) -> (i32, i32, i32) {
    %c0_i32 = arith.constant 0 : i32
    %c0_i32_0 = arith.constant 0 : i32
    %c0_i32_1 = arith.constant 0 : i32
    return %c0_i32, %arg0, %c0_i32_0 : i32, i32, i32
  }
  func.func @transform_1(%arg0: i32) -> (i32, i32) {
    %c0_i32 = arith.constant 0 : i32
    %c0_i32_0 = arith.constant 0 : i32
    %c0_i32_1 = arith.constant 0 : i32
    return %c0_i32, %c0_i32_0 : i32, i32
  }
  func.func @transform_2(%arg0: i32) -> (i32, i32) {
    %c0_i32 = arith.constant 0 : i32
    %c0_i32_0 = arith.constant 0 : i32
    %c0_i32_1 = arith.constant 0 : i32
    return %c0_i32, %c0_i32_0 : i32, i32
  }
  func.func @transform_3(%arg0: i32) -> (i32, i32) {
    %c0_i32 = arith.constant 0 : i32
    %c0_i32_0 = arith.constant 0 : i32
    %c0_i32_1 = arith.constant 0 : i32
    return %c0_i32, %c0_i32_0 : i32, i32
  }
  func.func @transform_4(%arg0: i32) -> (i32, i32) {
    %c0_i32 = arith.constant 0 : i32
    %c0_i32_0 = arith.constant 0 : i32
    %c0_i32_1 = arith.constant 0 : i32
    return %c0_i32, %c0_i32_0 : i32, i32
  }
  func.func @transform_5(%arg0: i32) -> (i32, i32) {
    %c0_i32 = arith.constant 0 : i32
    %c0_i32_0 = arith.constant 0 : i32
    %c0_i32_1 = arith.constant 0 : i32
    return %c0_i32, %c0_i32_0 : i32, i32
  }
  func.func @transform_6(%arg0: i32) -> (i32, i32) {
    %c0_i32 = arith.constant 0 : i32
    %c0_i32_0 = arith.constant 0 : i32
    %c0_i32_1 = arith.constant 0 : i32
    return %c0_i32, %c0_i32_0 : i32, i32
  }
  func.func @transform_7(%arg0: i32) -> (i32, i32) {
    %c0_i32 = arith.constant 0 : i32
    %c0_i32_0 = arith.constant 0 : i32
    %c0_i32_1 = arith.constant 0 : i32
    return %c0_i32, %c0_i32_0 : i32, i32
  }
  func.func @transform_8(%arg0: i32) -> (i32, i32) {
    %c0_i32 = arith.constant 0 : i32
    %c0_i32_0 = arith.constant 0 : i32
    %c0_i32_1 = arith.constant 0 : i32
    return %c0_i32, %c0_i32_0 : i32, i32
  }
  func.func @transform_9(%arg0: i32) -> (i32, i32, i32) {
    %c0_i32 = arith.constant 0 : i32
    %c0_i32_0 = arith.constant 0 : i32
    %c0_i32_1 = arith.constant 0 : i32
    return %c0_i32, %arg0, %c0_i32_0 : i32, i32, i32
  }
}

</mosaic_0001>

<llo_original>
// kernel: lstm_forward.1
$region0: #{lstm_forward.1}
  #allocation0 [shape = 'u32[]', space=smem, size = 0x4, offset = 0x4, fixed_abs, tag = 'smem constant byte address 0x4 - core index']
  #allocation1 [shape = 'u32[144,128]{1,0:T(1,128)}', space=vmem, size = 0x12000, scoped, tag = 'internal scratch']
  #allocation2 [shape = 'bf16[8,8,512]{2,1,0:T(8,128)(2,1)}', space=vmem, size = 0x10000, scoped, tag = 'scratch operand']
  #allocation3 [shape = 'bf16[8,8,128]{2,1,0:T(8,128)(2,1)}', space=vmem, size = 0x4000, scoped, tag = 'scratch operand']
  %s0 = inlined_call_operand.vmem [shape: bf16[8,16,128], index: 0, kind: input, shape index: {}]
  %s1 = inlined_call_operand.hbm [shape: bf16[128,512], index: 1, kind: input, shape index: {}]
  %s2 = inlined_call_operand.hbm [shape: bf16[128,512], index: 2, kind: input, shape index: {}]
  %s3 = inlined_call_operand.vmem [shape: f32[1,512], index: 3, kind: input, shape index: {}]
  %s4 = inlined_call_operand.hbm [shape: bf16[128,512], index: 4, kind: input, shape index: {}]
  %s5 = inlined_call_operand.hbm [shape: bf16[128,512], index: 5, kind: input, shape index: {}]
  %s6 = inlined_call_operand.vmem [shape: f32[1,512], index: 6, kind: input, shape index: {}]
  %s7 = inlined_call_operand.vmem [shape: bf16[128,128], index: 7, kind: input, shape index: {}]
  %s8 = inlined_call_operand.vmem [shape: f32[1,128], index: 8, kind: input, shape index: {}]
  %s9 = inlined_call_operand.vmem [shape: bf16[8,16,128], index: 9, kind: output, shape index: {}]
  %s10 = sld [smem:[#allocation0]]
  $region163: #{lstm_forward.1} parent=0
    _
  %s12 = ssub.s32 1, %s10
  %s13 = scalar_select 0, %s12, %s10
  $region1: #{lstm_forward.1} parent=0
    #allocation4 [shape = 'u8[32768]{0}', space=vmem, size = 0x8000, scoped, tag = 'input window, operand 0']
    #allocation5 [shape = 'u8[131072]{0}', space=vmem, size = 0x20000, scoped, tag = 'input window, operand 1, single buffered']
    #allocation6 [shape = 's32[2]{0}', space=sflag, size = 0x8, scoped, tag = 'scoped memory for lstm_forward.1']
    #allocation7 [shape = 'u8[131072]{0}', space=vmem, size = 0x20000, scoped, tag = 'input window, operand 2, single buffered']
    #allocation8 [shape = 's32[1]{0}', space=sflag, size = 0x4, scoped, tag = 'scoped memory for lstm_forward.1']
    #allocation9 [shape = 'u8[131072]{0}', space=vmem, size = 0x20000, scoped, tag = 'input window, operand 4, single buffered']
    #allocation10 [shape = 'u8[131072]{0}', space=vmem, size = 0x20000, scoped, tag = 'input window, operand 5, single buffered']
    #allocation11 [shape = 's32[1]{0}', space=sflag, size = 0x4, scoped, tag = 'scoped memory for lstm_forward.1']
    #allocation12 [shape = 'u8[32768]{0}', space=vmem, size = 0x8000, scoped, tag = 'output window, operand 0']
    %14 = vsyncpa [#allocation6], 0
    %15 = vsyncpa [#allocation8], 0
    %16 = vsyncpa [#allocation11], 0
    loop: start=0, step=1, limit=4
    $region2: #{lstm_forward.1} parent=1 // loop_pre_header
      _
    $region3: #{lstm_forward.1} parent=1 // loop_header
      %s18 = sphi 0, %s22
      %p19 = scmp.ge.s32.totalorder %s18, 4
      %s28 = sphi 0, %s30
      %s31 = sphi 0, %s28
      %s32 = sphi 0, %s31
      %s48 = sphi 0, %s32
      %s52 = sphi 0, %s52
      %s54 = sphi 0, %s52
      %s55 = sphi 0, %s54
      %s69 = sphi 0, %s55
      %s73 = sphi 0, %s73
      %s75 = sphi 0, %s73
      %s76 = sphi 0, %s75
      %s90 = sphi 0, %s76
      %s94 = sphi 0, %s94
      %s96 = sphi 0, %s94
      %s97 = sphi 0, %s96
      %s111 = sphi 0, %s97
      %s115 = sphi 0, %s115
      %s117 = sphi 0, %s115
      %s118 = sphi 0, %s117
      %s132 = sphi 0, %s118
      %s136 = sphi 0, %s136
      %s138 = sphi 0, %s136
      %s139 = sphi 0, %s138
      %s153 = sphi 0, %s139
      %s157 = sphi 0, %s157
      %s159 = sphi 0, %s157
      %s160 = sphi 0, %s159
      %s174 = sphi 0, %s160
      %s178 = sphi 0, %s178
      %s180 = sphi 0, %s178
      %s181 = sphi 0, %s180
      %s195 = sphi 0, %s181
      %s199 = sphi 0, %s199
      %s201 = sphi 0, %s199
      %s202 = sphi 0, %s201
      %s216 = sphi 0, %s202
      %s222 = sphi 0, %s224
      %s225 = sphi 0, %s222
      %s226 = sphi 0, %s225
      %s242 = sphi 0, %s226
    $region4: #{lstm_forward.1} parent=1 // loop_header_branch
      %21 = sbr.rel (%p19) target = $region8
    $region5: #{lstm_forward.1} parent=1 // loop_body
      %s23 = ssub.s32 %s18, 1
      %s24 = ssub.s32 %s18, 2
      %s25 = sadd.s32 %s18, 1
      %s26 = ssub.s32 %s18, %s25
      %p27 = scmp.eq.s32.totalorder %s26, 0
      %s29 = sadd.s32 %s28, 1
      %s30 = scalar_select %p27, %s28, %s29
      %p33 = pneg %p27
      %p34 = scmp.eq.s32.totalorder %s18, 1
      %p35 = por %p33, %p34
      %p36 = scmp.ne.s32.totalorder %s28, %s31
      %p37 = scmp.eq.s32.totalorder %s18, 0
      %p38 = por %p36, %p37
      %p39 = scmp.ne.s32.totalorder %s28, %s31
      %p40 = scmp.eq.s32.totalorder %s23, 1
      %p41 = por %p39, %p40
      %p42 = scmp.ne.s32.totalorder %s31, %s32
      %p43 = scmp.eq.s32.totalorder %s23, 0
      %p44 = por %p42, %p43
      %p45 = scmp.ne.s32.totalorder %s31, %s32
      %p46 = scmp.eq.s32.totalorder %s24, 1
      %p47 = por %p45, %p46
      %p49 = scmp.ne.s32.totalorder %s32, %s48
      %p50 = scmp.eq.s32.totalorder %s24, 0
      %p51 = por %p49, %p50
      %s53 = sadd.s32 %s52, 1
      %p56 = scmp.eq.s32.totalorder %s18, 1
      %p57 = scmp.ne.s32.totalorder %s52, %s54
      %p58 = scmp.eq.s32.totalorder %s18, 0
      %p59 = por %p57, %p58
      %p60 = scmp.ne.s32.totalorder %s52, %s54
      %p61 = scmp.eq.s32.totalorder %s23, 1
      %p62 = por %p60, %p61
      %p63 = scmp.ne.s32.totalorder %s54, %s55
      %p64 = scmp.eq.s32.totalorder %s23, 0
      %p65 = por %p63, %p64
      %p66 = scmp.ne.s32.totalorder %s54, %s55
      %p67 = scmp.eq.s32.totalorder %s24, 1
      %p68 = por %p66, %p67
      %p70 = scmp.ne.s32.totalorder %s55, %s69
      %p71 = scmp.eq.s32.totalorder %s24, 0
      %p72 = por %p70, %p71
      %s74 = sadd.s32 %s73, 1
      %p77 = scmp.eq.s32.totalorder %s18, 1
      %p78 = scmp.ne.s32.totalorder %s73, %s75
      %p79 = scmp.eq.s32.totalorder %s18, 0
      %p80 = por %p78, %p79
      %p81 = scmp.ne.s32.totalorder %s73, %s75
      %p82 = scmp.eq.s32.totalorder %s23, 1
      %p83 = por %p81, %p82
      %p84 = scmp.ne.s32.totalorder %s75, %s76
      %p85 = scmp.eq.s32.totalorder %s23, 0
      %p86 = por %p84, %p85
      %p87 = scmp.ne.s32.totalorder %s75, %s76
      %p88 = scmp.eq.s32.totalorder %s24, 1
      %p89 = por %p87, %p88
      %p91 = scmp.ne.s32.totalorder %s76, %s90
      %p92 = scmp.eq.s32.totalorder %s24, 0
      %p93 = por %p91, %p92
      %s95 = sadd.s32 %s94, 1
      %p98 = scmp.eq.s32.totalorder %s18, 1
      %p99 = scmp.ne.s32.totalorder %s94, %s96
      %p100 = scmp.eq.s32.totalorder %s18, 0
      %p101 = por %p99, %p100
      %p102 = scmp.ne.s32.totalorder %s94, %s96
      %p103 = scmp.eq.s32.totalorder %s23, 1
      %p104 = por %p102, %p103
      %p105 = scmp.ne.s32.totalorder %s96, %s97
      %p106 = scmp.eq.s32.totalorder %s23, 0
      %p107 = por %p105, %p106
      %p108 = scmp.ne.s32.totalorder %s96, %s97
      %p109 = scmp.eq.s32.totalorder %s24, 1
      %p110 = por %p108, %p109
      %p112 = scmp.ne.s32.totalorder %s97, %s111
      %p113 = scmp.eq.s32.totalorder %s24, 0
      %p114 = por %p112, %p113
      %s116 = sadd.s32 %s115, 1
      %p119 = scmp.eq.s32.totalorder %s18, 1
      %p120 = scmp.ne.s32.totalorder %s115, %s117
      %p121 = scmp.eq.s32.totalorder %s18, 0
      %p122 = por %p120, %p121
      %p123 = scmp.ne.s32.totalorder %s115, %s117
      %p124 = scmp.eq.s32.totalorder %s23, 1
      %p125 = por %p123, %p124
      %p126 = scmp.ne.s32.totalorder %s117, %s118
      %p127 = scmp.eq.s32.totalorder %s23, 0
      %p128 = por %p126, %p127
      %p129 = scmp.ne.s32.totalorder %s117, %s118
      %p130 = scmp.eq.s32.totalorder %s24, 1
      %p131 = por %p129, %p130
      %p133 = scmp.ne.s32.totalorder %s118, %s132
      %p134 = scmp.eq.s32.totalorder %s24, 0
      %p135 = por %p133, %p134
      %s137 = sadd.s32 %s136, 1
      %p140 = scmp.eq.s32.totalorder %s18, 1
      %p141 = scmp.ne.s32.totalorder %s136, %s138
      %p142 = scmp.eq.s32.totalorder %s18, 0
      %p143 = por %p141, %p142
      %p144 = scmp.ne.s32.totalorder %s136, %s138
      %p145 = scmp.eq.s32.totalorder %s23, 1
      %p146 = por %p144, %p145
      %p147 = scmp.ne.s32.totalorder %s138, %s139
      %p148 = scmp.eq.s32.totalorder %s23, 0
      %p149 = por %p147, %p148
      %p150 = scmp.ne.s32.totalorder %s138, %s139
      %p151 = scmp.eq.s32.totalorder %s24, 1
      %p152 = por %p150, %p151
      %p154 = scmp.ne.s32.totalorder %s139, %s153
      %p155 = scmp.eq.s32.totalorder %s24, 0
      %p156 = por %p154, %p155
      %s158 = sadd.s32 %s157, 1
      %p161 = scmp.eq.s32.totalorder %s18, 1
      %p162 = scmp.ne.s32.totalorder %s157, %s159
      %p163 = scmp.eq.s32.totalorder %s18, 0
      %p164 = por %p162, %p163
      %p165 = scmp.ne.s32.totalorder %s157, %s159
      %p166 = scmp.eq.s32.totalorder %s23, 1
      %p167 = por %p165, %p166
      %p168 = scmp.ne.s32.totalorder %s159, %s160
      %p169 = scmp.eq.s32.totalorder %s23, 0
      %p170 = por %p168, %p169
      %p171 = scmp.ne.s32.totalorder %s159, %s160
      %p172 = scmp.eq.s32.totalorder %s24, 1
      %p173 = por %p171, %p172
      %p175 = scmp.ne.s32.totalorder %s160, %s174
      %p176 = scmp.eq.s32.totalorder %s24, 0
      %p177 = por %p175, %p176
      %s179 = sadd.s32 %s178, 1
      %p182 = scmp.eq.s32.totalorder %s18, 1
      %p183 = scmp.ne.s32.totalorder %s178, %s180
      %p184 = scmp.eq.s32.totalorder %s18, 0
      %p185 = por %p183, %p184
      %p186 = scmp.ne.s32.totalorder %s178, %s180
      %p187 = scmp.eq.s32.totalorder %s23, 1
      %p188 = por %p186, %p187
      %p189 = scmp.ne.s32.totalorder %s180, %s181
      %p190 = scmp.eq.s32.totalorder %s23, 0
      %p191 = por %p189, %p190
      %p192 = scmp.ne.s32.totalorder %s180, %s181
      %p193 = scmp.eq.s32.totalorder %s24, 1
      %p194 = por %p192, %p193
      %p196 = scmp.ne.s32.totalorder %s181, %s195
      %p197 = scmp.eq.s32.totalorder %s24, 0
      %p198 = por %p196, %p197
      %s200 = sadd.s32 %s199, 1
      %p203 = scmp.eq.s32.totalorder %s18, 1
      %p204 = scmp.ne.s32.totalorder %s199, %s201
      %p205 = scmp.eq.s32.totalorder %s18, 0
      %p206 = por %p204, %p205
      %p207 = scmp.ne.s32.totalorder %s199, %s201
      %p208 = scmp.eq.s32.totalorder %s23, 1
      %p209 = por %p207, %p208
      %p210 = scmp.ne.s32.totalorder %s201, %s202
      %p211 = scmp.eq.s32.totalorder %s23, 0
      %p212 = por %p210, %p211
      %p213 = scmp.ne.s32.totalorder %s201, %s202
      %p214 = scmp.eq.s32.totalorder %s24, 1
      %p215 = por %p213, %p214
      %p217 = scmp.ne.s32.totalorder %s202, %s216
      %p218 = scmp.eq.s32.totalorder %s24, 0
      %p219 = por %p217, %p218
      %s220 = ssub.s32 %s18, %s25
      %p221 = scmp.eq.s32.totalorder %s220, 0
      %s223 = sadd.s32 %s222, 1
      %s224 = scalar_select %p221, %s222, %s223
      %p227 = pneg %p221
      %p228 = scmp.eq.s32.totalorder %s18, 1
      %p229 = por %p227, %p228
      %p230 = scmp.ne.s32.totalorder %s222, %s225
      %p231 = scmp.eq.s32.totalorder %s18, 0
      %p232 = por %p230, %p231
      %p233 = scmp.ne.s32.totalorder %s222, %s225
      %p234 = scmp.eq.s32.totalorder %s23, 1
      %p235 = por %p233, %p234
      %p236 = scmp.ne.s32.totalorder %s225, %s226
      %p237 = scmp.eq.s32.totalorder %s23, 0
      %p238 = por %p236, %p237
      %p239 = scmp.ne.s32.totalorder %s225, %s226
      %p240 = scmp.eq.s32.totalorder %s24, 1
      %p241 = por %p239, %p240
      %p243 = scmp.ne.s32.totalorder %s226, %s242
      %p244 = scmp.eq.s32.totalorder %s24, 0
      %p245 = por %p243, %p244
      %p246 = scmp.le.s32.totalorder 1, %s18
      %p247 = scmp.lt.s32.totalorder %s18, 3
      %p248 = pnand %p246, %p247
      %p249 = pneg %p248
      // Predicated region
      $region9: #{lstm_forward.1} parent=5 // pred_check
        _
      $region10: #{lstm_forward.1} parent=5 // pred_check_branch
        %251 = sbr.rel (%p248) target = $region12
      $region11: #{lstm_forward.1} parent=5 // pred_region
        %s252 = ssub.s32 %s18, 1
        // Predicated region
        $region13: #{lstm_forward.1} parent=11 // pred_check
          %p253 = pneg %p65
        $region14: #{lstm_forward.1} parent=11 // pred_check_branch
          %255 = sbr.rel (%p253) target = $region16
        $region15: #{lstm_forward.1} parent=11 // pred_region
          %s257 = ssub.s32 4096, 4096
          %258 = vsyncadd [#allocation6], %s257
          %s259 = sshll.u32 [#allocation5], 4
          %s260 = int_to_ptr.vmem [resolvable:$true] %s259
          %265 = dma.hbm_to_vmem [thread:$0]  %s1, 4096, %s260, [#allocation6], 256, 256, 16
        $region16: #{lstm_forward.1} parent=11 // pred_fallthru
          _
        // Predicated region
        $region17: #{lstm_forward.1} parent=11 // pred_check
          %p266 = pneg %p86
        $region18: #{lstm_forward.1} parent=11 // pred_check_branch
          %268 = sbr.rel (%p266) target = $region20
        $region19: #{lstm_forward.1} parent=11 // pred_region
          %s270 = ssub.s32 4096, 4096
          %271 = vsyncadd [#allocation8], %s270
          %s272 = sshll.u32 [#allocation7], 4
          %s273 = int_to_ptr.vmem [resolvable:$true] %s272
          %278 = dma.hbm_to_vmem [thread:$0]  %s2, 4096, %s273, [#allocation8], 256, 256, 16
        $region20: #{lstm_forward.1} parent=11 // pred_fallthru
          _
        // Predicated region
        $region21: #{lstm_forward.1} parent=11 // pred_check
          %p279 = pneg %p107
        $region22: #{lstm_forward.1} parent=11 // pred_check_branch
          %281 = sbr.rel (%p279) target = $region24
        $region23: #{lstm_forward.1} parent=11 // pred_region
          _
        $region24: #{lstm_forward.1} parent=11 // pred_fallthru
          _
        // Predicated region
        $region25: #{lstm_forward.1} parent=11 // pred_check
          %p282 = pneg %p128
        $region26: #{lstm_forward.1} parent=11 // pred_check_branch
          %284 = sbr.rel (%p282) target = $region28
        $region27: #{lstm_forward.1} parent=11 // pred_region
          %s286 = ssub.s32 4096, 4096
          %287 = vsyncadd [#allocation8], %s286
          %s288 = sshll.u32 [#allocation9], 4
          %s289 = int_to_ptr.vmem [resolvable:$true] %s288
          %294 = dma.hbm_to_vmem [thread:$0]  %s4, 4096, %s289, [#allocation8], 256, 256, 16
        $region28: #{lstm_forward.1} parent=11 // pred_fallthru
          _
        // Predicated region
        $region29: #{lstm_forward.1} parent=11 // pred_check
          %p295 = pneg %p149
        $region30: #{lstm_forward.1} parent=11 // pred_check_branch
          %297 = sbr.rel (%p295) target = $region32
        $region31: #{lstm_forward.1} parent=11 // pred_region
          %s299 = ssub.s32 4096, 4096
          %300 = vsyncadd [#allocation11], %s299
          %s301 = sshll.u32 [#allocation10], 4
          %s302 = int_to_ptr.vmem [resolvable:$true] %s301
          %307 = dma.hbm_to_vmem [thread:$0]  %s5, 4096, %s302, [#allocation11], 256, 256, 16
        $region32: #{lstm_forward.1} parent=11 // pred_fallthru
          _
        // Predicated region
        $region33: #{lstm_forward.1} parent=11 // pred_check
          %p308 = pneg %p170
        $region34: #{lstm_forward.1} parent=11 // pred_check_branch
          %310 = sbr.rel (%p308) target = $region36
        $region35: #{lstm_forward.1} parent=11 // pred_region
          _
        $region36: #{lstm_forward.1} parent=11 // pred_fallthru
          _
        // Predicated region
        $region37: #{lstm_forward.1} parent=11 // pred_check
          %p311 = pneg %p191
        $region38: #{lstm_forward.1} parent=11 // pred_check_branch
          %313 = sbr.rel (%p311) target = $region40
        $region39: #{lstm_forward.1} parent=11 // pred_region
          _
        $region40: #{lstm_forward.1} parent=11 // pred_fallthru
          _
        // Predicated region
        $region41: #{lstm_forward.1} parent=11 // pred_check
          %p314 = pneg %p212
        $region42: #{lstm_forward.1} parent=11 // pred_check_branch
          %316 = sbr.rel (%p314) target = $region44
        $region43: #{lstm_forward.1} parent=11 // pred_region
          _
        $region44: #{lstm_forward.1} parent=11 // pred_fallthru
          _
      $region12: #{lstm_forward.1} parent=5 // pred_fallthru
        _
      %p317 = scmp.lt.s32.totalorder %s18, 2
      // Predicated region
      $region45: #{lstm_forward.1} parent=5 // pred_check
        %p318 = pneg %p317
      $region46: #{lstm_forward.1} parent=5 // pred_check_branch
        %320 = sbr.rel (%p318) target = $region48
      $region47: #{lstm_forward.1} parent=5 // pred_region
        // Predicated region
        $region49: #{lstm_forward.1} parent=47 // pred_check
          %p321 = pneg %p38
        $region50: #{lstm_forward.1} parent=47 // pred_check_branch
          %323 = sbr.rel (%p321) target = $region52
        $region51: #{lstm_forward.1} parent=47 // pred_region
          %s324 = sand.u32 %s28, 1
          %s325 = sand.u32 %s28, 1
          %s326 = smul.addr %s325, 32
          %s327 = scalar_lea.vmem [#allocation4], %s326
          %s328 = smul.addr %s18, 4
          %s329 = scalar_lea.vmem %s0, %s328
          // Predicated region
          $region53: #{lstm_forward.1} parent=51 // pred_check
            _
          $region54: #{lstm_forward.1} parent=51 // pred_check_branch
            %331 = sbr.rel (0) target = $region56
          $region55: #{lstm_forward.1} parent=51 // pred_region
            // Predicated region
            $region57: #{lstm_forward.1} parent=55 // pred_check
              _
            $region58: #{lstm_forward.1} parent=55 // pred_check_branch
              %333 = sbr.rel target = $region60
            $region59: #{lstm_forward.1} parent=55 // pred_region
              // Predicated region
              $region72: #{lstm_forward.1} parent=59 // pred_check
                _
              $region73: #{lstm_forward.1} parent=59 // pred_check_branch
                %362 = sbr.rel (0) target = $region75
              $region74: #{lstm_forward.1} parent=59 // pred_region
                loop: start=0, step=1, limit=1
                $region76: #{lstm_forward.1} parent=74 // loop_pre_header
                  _
                $region77: #{lstm_forward.1} parent=74 // loop_header
                  %s364 = sphi 0, %s368
                  %p365 = scmp.ge.s32.totalorder %s364, 1
                  %s369 = sphi %s329, %s329
                  %s370 = sphi %s327, %s327
                $region78: #{lstm_forward.1} parent=74 // loop_header_branch
                  %367 = sbr.rel (%p365) target = $region82
                $region79: #{lstm_forward.1} parent=74 // loop_body
                  _
                $region80: #{lstm_forward.1} parent=74 // loop_footer
                  %s368 = sadd.s32 1, %s364
                $region81: #{lstm_forward.1} parent=74 // loop_footer_branch
                  %363 = sbr.rel target = $region77
                $region82: #{lstm_forward.1} parent=74 // loop_exit
                  _
                loop: start=0, step=1, limit=1
                $region83: #{lstm_forward.1} parent=74 // loop_pre_header
                  _
                $region84: #{lstm_forward.1} parent=74 // loop_header
                  %s373 = sphi 0, %s377
                  %p374 = scmp.ge.s32.totalorder %s373, 1
                  %s378 = sphi %s329, %s329
                  %s379 = sphi %s327, %s327
                $region85: #{lstm_forward.1} parent=74 // loop_header_branch
                  %376 = sbr.rel (%p374) target = $region89
                $region86: #{lstm_forward.1} parent=74 // loop_body
                  %v380 = vld [vmem:[%s378] sm:$0xf]
                  %381 = vst [vmem:[%s379] sm:$0xf] %v380
                  %v382 = vld [vmem:[%s378 + $0x8] sm:$0xf]
                  %383 = vst [vmem:[%s379 + $0x4] sm:$0xf] %v382
                  %v384 = vld [vmem:[%s378 + $0x10] sm:$0xf]
                  %385 = vst [vmem:[%s379 + $0x8] sm:$0xf] %v384
                  %v386 = vld [vmem:[%s378 + $0x18] sm:$0xf]
                  %387 = vst [vmem:[%s379 + $0xc] sm:$0xf] %v386
                  %v388 = vld [vmem:[%s378 + $0x20] sm:$0xf]
                  %389 = vst [vmem:[%s379 + $0x10] sm:$0xf] %v388
                  %v390 = vld [vmem:[%s378 + $0x28] sm:$0xf]
                  %391 = vst [vmem:[%s379 + $0x14] sm:$0xf] %v390
                  %v392 = vld [vmem:[%s378 + $0x30] sm:$0xf]
                  %393 = vst [vmem:[%s379 + $0x18] sm:$0xf] %v392
                  %v394 = vld [vmem:[%s378 + $0x38] sm:$0xf]
                  %395 = vst [vmem:[%s379 + $0x1c] sm:$0xf] %v394
                $region87: #{lstm_forward.1} parent=74 // loop_footer
                  %s377 = sadd.s32 1, %s373
                $region88: #{lstm_forward.1} parent=74 // loop_footer_branch
                  %372 = sbr.rel target = $region84
                $region89: #{lstm_forward.1} parent=74 // loop_exit
                  _
              $region75: #{lstm_forward.1} parent=59 // pred_fallthru
                _
            $region60: #{lstm_forward.1} parent=55 // pred_fallthru
              _
            // Predicated region
            $region61: #{lstm_forward.1} parent=55 // pred_check
              _
            $region62: #{lstm_forward.1} parent=55 // pred_check_branch
              %335 = sbr.rel (0) target = $region64
            $region63: #{lstm_forward.1} parent=55 // pred_region
              loop: start=0, step=1, limit=1
              $region65: #{lstm_forward.1} parent=63 // loop_pre_header
                _
              $region66: #{lstm_forward.1} parent=63 // loop_header
                %s338 = sphi 0, %s342
                %p339 = scmp.ge.s32.totalorder %s338, 1
                %s343 = sphi %s329, %s329
                %s344 = sphi %s327, %s327
              $region67: #{lstm_forward.1} parent=63 // loop_header_branch
                %341 = sbr.rel (%p339) target = $region71
              $region68: #{lstm_forward.1} parent=63 // loop_body
                %v345 = vld [vmem:[%s343] sm:$0xf]
                %346 = vst [vmem:[%s344] sm:$0xf] %v345
                %v347 = vld [vmem:[%s343 + $0x8] sm:$0xf]
                %348 = vst [vmem:[%s344 + $0x4] sm:$0xf] %v347
                %v349 = vld [vmem:[%s343 + $0x10] sm:$0xf]
                %350 = vst [vmem:[%s344 + $0x8] sm:$0xf] %v349
                %v351 = vld [vmem:[%s343 + $0x18] sm:$0xf]
                %352 = vst [vmem:[%s344 + $0xc] sm:$0xf] %v351
                %v353 = vld [vmem:[%s343 + $0x20] sm:$0xf]
                %354 = vst [vmem:[%s344 + $0x10] sm:$0xf] %v353
                %v355 = vld [vmem:[%s343 + $0x28] sm:$0xf]
                %356 = vst [vmem:[%s344 + $0x14] sm:$0xf] %v355
                %v357 = vld [vmem:[%s343 + $0x30] sm:$0xf]
                %358 = vst [vmem:[%s344 + $0x18] sm:$0xf] %v357
                %v359 = vld [vmem:[%s343 + $0x38] sm:$0xf]
                %360 = vst [vmem:[%s344 + $0x1c] sm:$0xf] %v359
              $region69: #{lstm_forward.1} parent=63 // loop_footer
                %s342 = sadd.s32 1, %s338
              $region70: #{lstm_forward.1} parent=63 // loop_footer_branch
                %337 = sbr.rel target = $region66
              $region71: #{lstm_forward.1} parent=63 // loop_exit
                _
            $region64: #{lstm_forward.1} parent=55 // pred_fallthru
              _
          $region56: #{lstm_forward.1} parent=51 // pred_fallthru
            _
          %396 = vnop
        $region52: #{lstm_forward.1} parent=47 // pred_fallthru
          _
      $region48: #{lstm_forward.1} parent=5 // pred_fallthru
        _
      %p397 = scmp.le.s32.totalorder 1, %s18
      %p398 = scmp.lt.s32.totalorder %s18, 3
      %p399 = pnand %p397, %p398
      %p400 = pneg %p399
      // Predicated region
      $region90: #{lstm_forward.1} parent=5 // pred_check
        _
      $region91: #{lstm_forward.1} parent=5 // pred_check_branch
        %402 = sbr.rel (%p399) target = $region93
      $region92: #{lstm_forward.1} parent=5 // pred_region
        %s403 = ssub.s32 %s18, 1
        %s404 = sand.u32 %s31, 1
        %s405 = sand.u32 %s31, 1
        %s406 = smul.addr %s405, 32
        %s407 = scalar_lea.vmem [#allocation4], %s406
        // Predicated region
        $region94: #{lstm_forward.1} parent=92 // pred_check
          %p408 = pneg %p44
        $region95: #{lstm_forward.1} parent=92 // pred_check_branch
          %410 = sbr.rel (%p408) target = $region97
        $region96: #{lstm_forward.1} parent=92 // pred_region
          _
        $region97: #{lstm_forward.1} parent=92 // pred_fallthru
          _
        // Predicated region
        $region98: #{lstm_forward.1} parent=92 // pred_check
          %p411 = pneg %p65
        $region99: #{lstm_forward.1} parent=92 // pred_check_branch
          %413 = sbr.rel (%p411) target = $region101
        $region100: #{lstm_forward.1} parent=92 // pred_region
          %414 = dma.done [#allocation6], 4096
        $region101: #{lstm_forward.1} parent=92 // pred_fallthru
          _
        // Predicated region
        $region102: #{lstm_forward.1} parent=92 // pred_check
          %p415 = pneg %p86
        $region103: #{lstm_forward.1} parent=92 // pred_check_branch
          %417 = sbr.rel (%p415) target = $region105
        $region104: #{lstm_forward.1} parent=92 // pred_region
          %418 = dma.done [#allocation8], 4096
        $region105: #{lstm_forward.1} parent=92 // pred_fallthru
          _
        // Predicated region
        $region106: #{lstm_forward.1} parent=92 // pred_check
          %p419 = pneg %p128
        $region107: #{lstm_forward.1} parent=92 // pred_check_branch
          %421 = sbr.rel (%p419) target = $region109
        $region108: #{lstm_forward.1} parent=92 // pred_region
          %422 = dma.done [#allocation8], 4096
        $region109: #{lstm_forward.1} parent=92 // pred_fallthru
          _
        // Predicated region
        $region110: #{lstm_forward.1} parent=92 // pred_check
          %p423 = pneg %p149
        $region111: #{lstm_forward.1} parent=92 // pred_check_branch
          %425 = sbr.rel (%p423) target = $region113
        $region112: #{lstm_forward.1} parent=92 // pred_region
          %426 = dma.done [#allocation11], 4096
        $region113: #{lstm_forward.1} parent=92 // pred_fallthru
          _
        %s427 = sand.u32 %s31, 1
        %s428 = sand.u32 %s31, 1
        %s429 = smul.addr %s428, 32
        %s430 = scalar_lea.vmem [#allocation4], %s429
        %p431 = pneg %p44
        %p432 = pneg %p41
        %p433 = pneg %p65
        %p434 = pneg %p62
        %p435 = pneg %p86
        %p436 = pneg %p83
        %p437 = pneg %p107
        %p438 = pneg %p104
        %p439 = pneg %p128
        %p440 = pneg %p125
        %p441 = pneg %p149
        %p442 = pneg %p146
        %p443 = pneg %p170
        %p444 = pneg %p167
        %p445 = pneg %p191
        %p446 = pneg %p188
        %p447 = pneg %p212
        %p448 = pneg %p209
        %p449 = pneg %p238
        %p450 = pneg %p235
        %s451 = sand.u32 %s225, 1
        %s452 = sand.u32 %s225, 1
        %s453 = smul.addr %s452, 32
        %s454 = scalar_lea.vmem [#allocation12], %s453
        %v456 = vld [vmem:[#allocation5] sm:$0xff]
        %v457 = vld [vmem:[#allocation5 + $0x8] sm:$0xff]
        %v458 = vld [vmem:[#allocation5 + $0x10] sm:$0xff]
        %v459 = vld [vmem:[#allocation5 + $0x18] sm:$0xff]
        %v460 = vld [vmem:[#allocation5 + $0x20] sm:$0xff]
        %v461 = vld [vmem:[#allocation5 + $0x28] sm:$0xff]
        %v462 = vld [vmem:[#allocation5 + $0x30] sm:$0xff]
        %v463 = vld [vmem:[#allocation5 + $0x38] sm:$0xff]
        %v464 = vld [vmem:[#allocation5 + $0x40] sm:$0xff]
        %v465 = vld [vmem:[#allocation5 + $0x48] sm:$0xff]
        %v466 = vld [vmem:[#allocation5 + $0x50] sm:$0xff]
        %v467 = vld [vmem:[#allocation5 + $0x58] sm:$0xff]
        %v468 = vld [vmem:[#allocation5 + $0x60] sm:$0xff]
        %v469 = vld [vmem:[#allocation5 + $0x68] sm:$0xff]
        %v470 = vld [vmem:[#allocation5 + $0x70] sm:$0xff]
        %v471 = vld [vmem:[#allocation5 + $0x78] sm:$0xff]
        %v472 = vld [vmem:[#allocation5 + $0x80] sm:$0xff]
        %v473 = vld [vmem:[#allocation5 + $0x88] sm:$0xff]
        %v474 = vld [vmem:[#allocation5 + $0x90] sm:$0xff]
        %v475 = vld [vmem:[#allocation5 + $0x98] sm:$0xff]
        %v476 = vld [vmem:[#allocation5 + $0xa0] sm:$0xff]
        %v477 = vld [vmem:[#allocation5 + $0xa8] sm:$0xff]
        %v478 = vld [vmem:[#allocation5 + $0xb0] sm:$0xff]
        %v479 = vld [vmem:[#allocation5 + $0xb8] sm:$0xff]
        %v480 = vld [vmem:[#allocation5 + $0xc0] sm:$0xff]
        %v481 = vld [vmem:[#allocation5 + $0xc8] sm:$0xff]
        %v482 = vld [vmem:[#allocation5 + $0xd0] sm:$0xff]
        %v483 = vld [vmem:[#allocation5 + $0xd8] sm:$0xff]
        %v484 = vld [vmem:[#allocation5 + $0xe0] sm:$0xff]
        %v485 = vld [vmem:[#allocation5 + $0xe8] sm:$0xff]
        %v486 = vld [vmem:[#allocation5 + $0xf0] sm:$0xff]
        %v487 = vld [vmem:[#allocation5 + $0xf8] sm:$0xff]
        %v488 = vld [vmem:[#allocation7] sm:$0xff]
        %v489 = vld [vmem:[#allocation7 + $0x8] sm:$0xff]
        %v490 = vld [vmem:[#allocation7 + $0x10] sm:$0xff]
        %v491 = vld [vmem:[#allocation7 + $0x18] sm:$0xff]
        %v492 = vld [vmem:[#allocation7 + $0x20] sm:$0xff]
        %v493 = vld [vmem:[#allocation7 + $0x28] sm:$0xff]
        %v494 = vld [vmem:[#allocation7 + $0x30] sm:$0xff]
        %v495 = vld [vmem:[#allocation7 + $0x38] sm:$0xff]
        %v496 = vld [vmem:[#allocation7 + $0x40] sm:$0xff]
        %v497 = vld [vmem:[#allocation7 + $0x48] sm:$0xff]
        %v498 = vld [vmem:[#allocation7 + $0x50] sm:$0xff]
        %v499 = vld [vmem:[#allocation7 + $0x58] sm:$0xff]
        %v500 = vld [vmem:[#allocation7 + $0x60] sm:$0xff]
        %v501 = vld [vmem:[#allocation7 + $0x68] sm:$0xff]
        %v502 = vld [vmem:[#allocation7 + $0x70] sm:$0xff]
        %v503 = vld [vmem:[#allocation7 + $0x78] sm:$0xff]
        %v504 = vld [vmem:[#allocation7 + $0x80] sm:$0xff]
        %v505 = vld [vmem:[#allocation7 + $0x88] sm:$0xff]
        %v506 = vld [vmem:[#allocation7 + $0x90] sm:$0xff]
        %v507 = vld [vmem:[#allocation7 + $0x98] sm:$0xff]
        %v508 = vld [vmem:[#allocation7 + $0xa0] sm:$0xff]
        %v509 = vld [vmem:[#allocation7 + $0xa8] sm:$0xff]
        %v510 = vld [vmem:[#allocation7 + $0xb0] sm:$0xff]
        %v511 = vld [vmem:[#allocation7 + $0xb8] sm:$0xff]
        %v512 = vld [vmem:[#allocation7 + $0xc0] sm:$0xff]
        %v513 = vld [vmem:[#allocation7 + $0xc8] sm:$0xff]
        %v514 = vld [vmem:[#allocation7 + $0xd0] sm:$0xff]
        %v515 = vld [vmem:[#allocation7 + $0xd8] sm:$0xff]
        %v516 = vld [vmem:[#allocation7 + $0xe0] sm:$0xff]
        %v517 = vld [vmem:[#allocation7 + $0xe8] sm:$0xff]
        %v518 = vld [vmem:[#allocation7 + $0xf0] sm:$0xff]
        %v519 = vld [vmem:[#allocation7 + $0xf8] sm:$0xff]
        %v520 = vld [vmem:[%s3] sm:$0xf]
        %v521 = vld [vmem:[%s407] sm:$0xf]
        %v522 = vld [vmem:[%s407 + $0x4] sm:$0xf]
        %v523 = vld [vmem:[%s407 + $0x8] sm:$0xf]
        %v524 = vld [vmem:[%s407 + $0xc] sm:$0xf]
        %v525 = vld [vmem:[%s407 + $0x10] sm:$0xf]
        %v526 = vld [vmem:[%s407 + $0x14] sm:$0xf]
        %v527 = vld [vmem:[%s407 + $0x18] sm:$0xf]
        %v528 = vld [vmem:[%s407 + $0x1c] sm:$0xf]
        %v530 = vlaneseq
        %v531 = vshrl.u32 %v530, 7
        %v532 = vsub.s32 0, %v531
        %v533 = vrot.slane %v520, %v532
        %v534 = vlaneseq
        %v535 = vshrl.u32 %v534, 7
        %v536 = vsub.s32 1, %v535
        %v537 = vrot.slane %v520, %v536
        %v538 = vlaneseq
        %v539 = vshrl.u32 %v538, 7
        %v540 = vsub.s32 2, %v539
        %v541 = vrot.slane %v520, %v540
        %v542 = vlaneseq
        %v543 = vshrl.u32 %v542, 7
        %v544 = vsub.s32 3, %v543
        %v545 = vrot.slane %v520, %v544
        %v558 = vunpack.c.l.b16 %v521
        %v559 = vunpack.c.l.b16 %v522
        %v560 = vunpack.c.l.b16 %v523
        %v561 = vunpack.c.l.b16 %v524
        %v562 = vunpack.c.l.b16 %v525
        %v563 = vunpack.c.l.b16 %v526
        %v564 = vunpack.c.l.b16 %v527
        %v565 = vunpack.c.l.b16 %v528
        %v566 = vpack.c.b16 %v559, %v558
        %v567 = vpack.c.b16 %v561, %v560
        %v568 = vpack.c.b16 %v563, %v562
        %v569 = vpack.c.b16 %v565, %v564
        %v606 = vunpack.c.l.b16 %v456
        %v607 = vunpack.c.h.b16 %v456
        %v608 = vunpack.c.l.b16 %v457
        %v609 = vunpack.c.h.b16 %v457
        %v610 = vunpack.c.l.b16 %v458
        %v611 = vunpack.c.h.b16 %v458
        %v612 = vunpack.c.l.b16 %v459
        %v613 = vunpack.c.h.b16 %v459
        %v614 = vunpack.c.l.b16 %v460
        %v615 = vunpack.c.h.b16 %v460
        %v616 = vunpack.c.l.b16 %v461
        %v617 = vunpack.c.h.b16 %v461
        %v618 = vunpack.c.l.b16 %v462
        %v619 = vunpack.c.h.b16 %v462
        %v620 = vunpack.c.l.b16 %v463
        %v621 = vunpack.c.h.b16 %v463
        %v622 = vunpack.c.l.b16 %v464
        %v623 = vunpack.c.h.b16 %v464
        %v624 = vunpack.c.l.b16 %v465
        %v625 = vunpack.c.h.b16 %v465
        %v626 = vunpack.c.l.b16 %v466
        %v627 = vunpack.c.h.b16 %v466
        %v628 = vunpack.c.l.b16 %v467
        %v629 = vunpack.c.h.b16 %v467
        %v630 = vunpack.c.l.b16 %v468
        %v631 = vunpack.c.h.b16 %v468
        %v632 = vunpack.c.l.b16 %v469
        %v633 = vunpack.c.h.b16 %v469
        %v634 = vunpack.c.l.b16 %v470
        %v635 = vunpack.c.h.b16 %v470
        %v636 = vunpack.c.l.b16 %v471
        %v637 = vunpack.c.h.b16 %v471
        %v638 = vunpack.c.l.b16 %v472
        %v639 = vunpack.c.h.b16 %v472
        %v640 = vunpack.c.l.b16 %v473
        %v641 = vunpack.c.h.b16 %v473
        %v642 = vunpack.c.l.b16 %v474
        %v643 = vunpack.c.h.b16 %v474
        %v644 = vunpack.c.l.b16 %v475
        %v645 = vunpack.c.h.b16 %v475
        %v646 = vunpack.c.l.b16 %v476
        %v647 = vunpack.c.h.b16 %v476
        %v648 = vunpack.c.l.b16 %v477
        %v649 = vunpack.c.h.b16 %v477
        %v650 = vunpack.c.l.b16 %v478
        %v651 = vunpack.c.h.b16 %v478
        %v652 = vunpack.c.l.b16 %v479
        %v653 = vunpack.c.h.b16 %v479
        %v654 = vunpack.c.l.b16 %v480
        %v655 = vunpack.c.h.b16 %v480
        %v656 = vunpack.c.l.b16 %v481
        %v657 = vunpack.c.h.b16 %v481
        %v658 = vunpack.c.l.b16 %v482
        %v659 = vunpack.c.h.b16 %v482
        %v660 = vunpack.c.l.b16 %v483
        %v661 = vunpack.c.h.b16 %v483
        %v662 = vunpack.c.l.b16 %v484
        %v663 = vunpack.c.h.b16 %v484
        %v664 = vunpack.c.l.b16 %v485
        %v665 = vunpack.c.h.b16 %v485
        %v666 = vunpack.c.l.b16 %v486
        %v667 = vunpack.c.h.b16 %v486
        %v668 = vunpack.c.l.b16 %v487
        %v669 = vunpack.c.h.b16 %v487
        %v670 = vpack.c.b16 %v610, %v606
        %v671 = vpack.c.b16 %v611, %v607
        %v672 = vpack.c.b16 %v612, %v608
        %v673 = vpack.c.b16 %v613, %v609
        %v674 = vpack.c.b16 %v618, %v614
        %v675 = vpack.c.b16 %v619, %v615
        %v676 = vpack.c.b16 %v620, %v616
        %v677 = vpack.c.b16 %v621, %v617
        %v678 = vpack.c.b16 %v626, %v622
        %v679 = vpack.c.b16 %v627, %v623
        %v680 = vpack.c.b16 %v628, %v624
        %v681 = vpack.c.b16 %v629, %v625
        %v682 = vpack.c.b16 %v634, %v630
        %v683 = vpack.c.b16 %v635, %v631
        %v684 = vpack.c.b16 %v636, %v632
        %v685 = vpack.c.b16 %v637, %v633
        %v686 = vpack.c.b16 %v642, %v638
        %v687 = vpack.c.b16 %v643, %v639
        %v688 = vpack.c.b16 %v644, %v640
        %v689 = vpack.c.b16 %v645, %v641
        %v690 = vpack.c.b16 %v650, %v646
        %v691 = vpack.c.b16 %v651, %v647
        %v692 = vpack.c.b16 %v652, %v648
        %v693 = vpack.c.b16 %v653, %v649
        %v694 = vpack.c.b16 %v658, %v654
        %v695 = vpack.c.b16 %v659, %v655
        %v696 = vpack.c.b16 %v660, %v656
        %v697 = vpack.c.b16 %v661, %v657
        %v698 = vpack.c.b16 %v666, %v662
        %v699 = vpack.c.b16 %v667, %v663
        %v700 = vpack.c.b16 %v668, %v664
        %v701 = vpack.c.b16 %v669, %v665
        %734 = vmatprep.subr.bf16.mxu0 %v671
        %735 = vmatpush1.bf16.msra.mxu0 %v670
        %736 = vmatprep.subr.bf16.mxu0 %v675
        %737 = vmatpush1.bf16.msra.mxu0 %v674
        %738 = vmatprep.subr.bf16.mxu0 %v679
        %739 = vmatpush1.bf16.msra.mxu0 %v678
        %740 = vmatprep.subr.bf16.mxu0 %v683
        %741 = vmatpush1.bf16.msra.mxu0 %v682
        %742 = vmatprep.subr.bf16.mxu0 %v687
        %743 = vmatpush1.bf16.msra.mxu0 %v686
        %744 = vmatprep.subr.bf16.mxu0 %v691
        %745 = vmatpush1.bf16.msra.mxu0 %v690
        %746 = vmatprep.subr.bf16.mxu0 %v695
        %747 = vmatpush1.bf16.msra.mxu0 %v694
        %748 = vmatprep.subr.bf16.mxu0 %v699
        %749 = vmatpush1.bf16.msra.mxu0 %v698
        %750 = vmatprep.subr.bf16.mxu0 0
        %751 = vmatpush1.bf16.msra.mxu0 0
        %752 = vmatprep.subr.bf16.mxu0 0
        %753 = vmatpush1.bf16.msra.mxu0 0
        %754 = vmatprep.subr.bf16.mxu0 0
        %755 = vmatpush1.bf16.msra.mxu0 0
        %756 = vmatprep.subr.bf16.mxu0 0
        %757 = vmatpush1.bf16.msra.mxu0 0
        %758 = vmatprep.subr.bf16.mxu0 0
        %759 = vmatpush1.bf16.msra.mxu0 0
        %760 = vmatprep.subr.bf16.mxu0 0
        %761 = vmatpush1.bf16.msra.mxu0 0
        %762 = vmatprep.subr.bf16.mxu0 0
        %763 = vmatpush1.bf16.msra.mxu0 0
        %764 = vmatprep.subr.bf16.mxu0 0
        %765 = vmatpush1.bf16.msra.mxu0 0
        %766 = vmatprep.mubr.bf16.mxu0 0
        %767 = vmatmul.mubr.bf16.gmra.mrb[0].mxu0 %v566
        %v768 = vpop.f32.mrb[0].mxu0
        %v769 = vadd.f32 %v533, %v768
        %v770 = vpop.f32.mrb[0].mxu0
        %v771 = vadd.f32 %v537, %v770
        %v772 = vpop.f32.mrb[0].mxu0
        %v773 = vadd.f32 %v533, %v772
        %v774 = vpop.f32.mrb[0].mxu0
        %v775 = vadd.f32 %v537, %v774
        %776 = vmatprep.mubr.bf16.mxu0 0
        %777 = vmatmul.mubr.bf16.gmra.mrb[0].mxu0 %v567
        %v778 = vpop.f32.mrb[0].mxu0
        %v779 = vadd.f32 %v533, %v778
        %v780 = vpop.f32.mrb[0].mxu0
        %v781 = vadd.f32 %v537, %v780
        %v782 = vpop.f32.mrb[0].mxu0
        %v783 = vadd.f32 %v533, %v782
        %v784 = vpop.f32.mrb[0].mxu0
        %v785 = vadd.f32 %v537, %v784
        %786 = vmatprep.mubr.bf16.mxu0 0
        %787 = vmatmul.mubr.bf16.gmra.mrb[0].mxu0 %v568
        %v788 = vpop.f32.mrb[0].mxu0
        %v789 = vadd.f32 %v533, %v788
        %v790 = vpop.f32.mrb[0].mxu0
        %v791 = vadd.f32 %v537, %v790
        %v792 = vpop.f32.mrb[0].mxu0
        %v793 = vadd.f32 %v533, %v792
        %v794 = vpop.f32.mrb[0].mxu0
        %v795 = vadd.f32 %v537, %v794
        %796 = vmatprep.mubr.bf16.mxu0 0
        %797 = vmatmul.mubr.bf16.gmra.mrb[0].mxu0 %v569
        %v798 = vpop.f32.mrb[0].mxu0
        %v799 = vadd.f32 %v533, %v798
        %v800 = vpop.f32.mrb[0].mxu0
        %v801 = vadd.f32 %v537, %v800
        %v802 = vpop.f32.mrb[0].mxu0
        %v803 = vadd.f32 %v533, %v802
        %v804 = vpop.f32.mrb[0].mxu0
        %v805 = vadd.f32 %v537, %v804
        %806 = vdwg.mxu0
        %807 = vmatprep.subr.bf16.mxu0 %v673
        %808 = vmatpush1.bf16.msra.mxu0 %v672
        %809 = vmatprep.subr.bf16.mxu0 %v677
        %810 = vmatpush1.bf16.msra.mxu0 %v676
        %811 = vmatprep.subr.bf16.mxu0 %v681
        %812 = vmatpush1.bf16.msra.mxu0 %v680
        %813 = vmatprep.subr.bf16.mxu0 %v685
        %814 = vmatpush1.bf16.msra.mxu0 %v684
        %815 = vmatprep.subr.bf16.mxu0 %v689
        %816 = vmatpush1.bf16.msra.mxu0 %v688
        %817 = vmatprep.subr.bf16.mxu0 %v693
        %818 = vmatpush1.bf16.msra.mxu0 %v692
        %819 = vmatprep.subr.bf16.mxu0 %v697
        %820 = vmatpush1.bf16.msra.mxu0 %v696
        %821 = vmatprep.subr.bf16.mxu0 %v701
        %822 = vmatpush1.bf16.msra.mxu0 %v700
        %823 = vmatprep.subr.bf16.mxu0 0
        %824 = vmatpush1.bf16.msra.mxu0 0
        %825 = vmatprep.subr.bf16.mxu0 0
        %826 = vmatpush1.bf16.msra.mxu0 0
        %827 = vmatprep.subr.bf16.mxu0 0
        %828 = vmatpush1.bf16.msra.mxu0 0
        %829 = vmatprep.subr.bf16.mxu0 0
        %830 = vmatpush1.bf16.msra.mxu0 0
        %831 = vmatprep.subr.bf16.mxu0 0
        %832 = vmatpush1.bf16.msra.mxu0 0
        %833 = vmatprep.subr.bf16.mxu0 0
        %834 = vmatpush1.bf16.msra.mxu0 0
        %835 = vmatprep.subr.bf16.mxu0 0
        %836 = vmatpush1.bf16.msra.mxu0 0
        %837 = vmatprep.subr.bf16.mxu0 0
        %838 = vmatpush1.bf16.msra.mxu0 0
        %839 = vmatprep.mubr.bf16.mxu0 0
        %840 = vmatmul.mubr.bf16.gmra.mrb[0].mxu0 %v566
        %v841 = vpop.f32.mrb[0].mxu0
        %v842 = vadd.f32 %v541, %v841
        %v843 = vpop.f32.mrb[0].mxu0
        %v844 = vadd.f32 %v545, %v843
        %v845 = vpop.f32.mrb[0].mxu0
        %v846 = vadd.f32 %v541, %v845
        %v847 = vpop.f32.mrb[0].mxu0
        %v848 = vadd.f32 %v545, %v847
        %849 = vmatprep.mubr.bf16.mxu0 0
        %850 = vmatmul.mubr.bf16.gmra.mrb[0].mxu0 %v567
        %v851 = vpop.f32.mrb[0].mxu0
        %v852 = vadd.f32 %v541, %v851
        %v853 = vpop.f32.mrb[0].mxu0
        %v854 = vadd.f32 %v545, %v853
        %v855 = vpop.f32.mrb[0].mxu0
        %v856 = vadd.f32 %v541, %v855
        %v857 = vpop.f32.mrb[0].mxu0
        %v858 = vadd.f32 %v545, %v857
        %859 = vmatprep.mubr.bf16.mxu0 0
        %860 = vmatmul.mubr.bf16.gmra.mrb[0].mxu0 %v568
        %v861 = vpop.f32.mrb[0].mxu0
        %v862 = vadd.f32 %v541, %v861
        %v863 = vpop.f32.mrb[0].mxu0
        %v864 = vadd.f32 %v545, %v863
        %v865 = vpop.f32.mrb[0].mxu0
        %v866 = vadd.f32 %v541, %v865
        %v867 = vpop.f32.mrb[0].mxu0
        %v868 = vadd.f32 %v545, %v867
        %869 = vmatprep.mubr.bf16.mxu0 0
        %870 = vmatmul.mubr.bf16.gmra.mrb[0].mxu0 %v569
        %v871 = vpop.f32.mrb[0].mxu0
        %v872 = vadd.f32 %v541, %v871
        %v873 = vpop.f32.mrb[0].mxu0
        %v874 = vadd.f32 %v545, %v873
        %v875 = vpop.f32.mrb[0].mxu0
        %v876 = vadd.f32 %v541, %v875
        %v877 = vpop.f32.mrb[0].mxu0
        %v878 = vadd.f32 %v545, %v877
        %879 = vdwg.mxu0
        %v880 = vpack.c.bf16 %v769, %v769
        %v881 = vpack.c.bf16 %v771, %v771
        %v882 = vpack.c.bf16 %v842, %v842
        %v883 = vpack.c.bf16 %v844, %v844
        %v884 = vpack.c.bf16 %v773, %v773
        %v885 = vpack.c.bf16 %v775, %v775
        %v886 = vpack.c.bf16 %v846, %v846
        %v887 = vpack.c.bf16 %v848, %v848
        %v888 = vpack.c.bf16 %v779, %v779
        %v889 = vpack.c.bf16 %v781, %v781
        %v890 = vpack.c.bf16 %v852, %v852
        %v891 = vpack.c.bf16 %v854, %v854
        %v892 = vpack.c.bf16 %v783, %v783
        %v893 = vpack.c.bf16 %v785, %v785
        %v894 = vpack.c.bf16 %v856, %v856
        %v895 = vpack.c.bf16 %v858, %v858
        %v896 = vpack.c.bf16 %v789, %v789
        %v897 = vpack.c.bf16 %v791, %v791
        %v898 = vpack.c.bf16 %v862, %v862
        %v899 = vpack.c.bf16 %v864, %v864
        %v900 = vpack.c.bf16 %v793, %v793
        %v901 = vpack.c.bf16 %v795, %v795
        %v902 = vpack.c.bf16 %v866, %v866
        %v903 = vpack.c.bf16 %v868, %v868
        %v904 = vpack.c.bf16 %v799, %v799
        %v905 = vpack.c.bf16 %v801, %v801
        %v906 = vpack.c.bf16 %v872, %v872
        %v907 = vpack.c.bf16 %v874, %v874
        %v908 = vpack.c.bf16 %v803, %v803
        %v909 = vpack.c.bf16 %v805, %v805
        %v910 = vpack.c.bf16 %v876, %v876
        %v911 = vpack.c.bf16 %v878, %v878
        %v944 = vunpack.c.l.b16 %v880
        %v945 = vunpack.c.l.b16 %v881
        %v946 = vunpack.c.l.b16 %v882
        %v947 = vunpack.c.l.b16 %v883
        %v948 = vunpack.c.l.b16 %v884
        %v949 = vunpack.c.l.b16 %v885
        %v950 = vunpack.c.l.b16 %v886
        %v951 = vunpack.c.l.b16 %v887
        %v952 = vunpack.c.l.b16 %v888
        %v953 = vunpack.c.l.b16 %v889
        %v954 = vunpack.c.l.b16 %v890
        %v955 = vunpack.c.l.b16 %v891
        %v956 = vunpack.c.l.b16 %v892
        %v957 = vunpack.c.l.b16 %v893
        %v958 = vunpack.c.l.b16 %v894
        %v959 = vunpack.c.l.b16 %v895
        %v960 = vunpack.c.l.b16 %v896
        %v961 = vunpack.c.l.b16 %v897
        %v962 = vunpack.c.l.b16 %v898
        %v963 = vunpack.c.l.b16 %v899
        %v964 = vunpack.c.l.b16 %v900
        %v965 = vunpack.c.l.b16 %v901
        %v966 = vunpack.c.l.b16 %v902
        %v967 = vunpack.c.l.b16 %v903
        %v968 = vunpack.c.l.b16 %v904
        %v969 = vunpack.c.l.b16 %v905
        %v970 = vunpack.c.l.b16 %v906
        %v971 = vunpack.c.l.b16 %v907
        %v972 = vunpack.c.l.b16 %v908
        %v973 = vunpack.c.l.b16 %v909
        %v974 = vunpack.c.l.b16 %v910
        %v975 = vunpack.c.l.b16 %v911
        %v976 = vpack.c.b16 %v945, %v944
        %v977 = vpack.c.b16 %v947, %v946
        %v978 = vpack.c.b16 %v949, %v948
        %v979 = vpack.c.b16 %v951, %v950
        %v980 = vpack.c.b16 %v953, %v952
        %v981 = vpack.c.b16 %v955, %v954
        %v982 = vpack.c.b16 %v957, %v956
        %v983 = vpack.c.b16 %v959, %v958
        %v984 = vpack.c.b16 %v961, %v960
        %v985 = vpack.c.b16 %v963, %v962
        %v986 = vpack.c.b16 %v965, %v964
        %v987 = vpack.c.b16 %v967, %v966
        %v988 = vpack.c.b16 %v969, %v968
        %v989 = vpack.c.b16 %v971, %v970
        %v990 = vpack.c.b16 %v973, %v972
        %v991 = vpack.c.b16 %v975, %v974
        %1008 = vst [vmem:[#allocation2] sm:$0xff] %v976
        %1009 = vst [vmem:[#allocation2 + $0x8] sm:$0xff] %v977
        %1010 = vst [vmem:[#allocation2 + $0x10] sm:$0xff] %v978
        %1011 = vst [vmem:[#allocation2 + $0x18] sm:$0xff] %v979
        %1012 = vst [vmem:[#allocation2 + $0x20] sm:$0xff] %v980
        %1013 = vst [vmem:[#allocation2 + $0x28] sm:$0xff] %v981
        %1014 = vst [vmem:[#allocation2 + $0x30] sm:$0xff] %v982
        %1015 = vst [vmem:[#allocation2 + $0x38] sm:$0xff] %v983
        %1016 = vst [vmem:[#allocation2 + $0x40] sm:$0xff] %v984
        %1017 = vst [vmem:[#allocation2 + $0x48] sm:$0xff] %v985
        %1018 = vst [vmem:[#allocation2 + $0x50] sm:$0xff] %v986
        %1019 = vst [vmem:[#allocation2 + $0x58] sm:$0xff] %v987
        %1020 = vst [vmem:[#allocation2 + $0x60] sm:$0xff] %v988
        %1021 = vst [vmem:[#allocation2 + $0x68] sm:$0xff] %v989
        %1022 = vst [vmem:[#allocation2 + $0x70] sm:$0xff] %v990
        %1023 = vst [vmem:[#allocation2 + $0x78] sm:$0xff] %v991
        %v1024 = vld [vmem:[#allocation2] sm:$0xff]
        %v1025 = vld [vmem:[#allocation2 + $0x8] sm:$0xff]
        %v1026 = vunpack.c.l.bf16 %v1024
        %v1027 = vunpack.c.h.bf16 %v1024
        %v1028 = vunpack.c.l.bf16 %v1025
        %v1029 = vunpack.c.h.bf16 %v1025
        %v1062 = vunpack.c.l.b16 %v488
        %v1063 = vunpack.c.h.b16 %v488
        %v1064 = vunpack.c.l.b16 %v489
        %v1065 = vunpack.c.h.b16 %v489
        %v1066 = vunpack.c.l.b16 %v490
        %v1067 = vunpack.c.h.b16 %v490
        %v1068 = vunpack.c.l.b16 %v491
        %v1069 = vunpack.c.h.b16 %v491
        %v1070 = vunpack.c.l.b16 %v492
        %v1071 = vunpack.c.h.b16 %v492
        %v1072 = vunpack.c.l.b16 %v493
        %v1073 = vunpack.c.h.b16 %v493
        %v1074 = vunpack.c.l.b16 %v494
        %v1075 = vunpack.c.h.b16 %v494
        %v1076 = vunpack.c.l.b16 %v495
        %v1077 = vunpack.c.h.b16 %v495
        %v1078 = vunpack.c.l.b16 %v496
        %v1079 = vunpack.c.h.b16 %v496
        %v1080 = vunpack.c.l.b16 %v497
        %v1081 = vunpack.c.h.b16 %v497
        %v1082 = vunpack.c.l.b16 %v498
        %v1083 = vunpack.c.h.b16 %v498
        %v1084 = vunpack.c.l.b16 %v499
        %v1085 = vunpack.c.h.b16 %v499
        %v1086 = vunpack.c.l.b16 %v500
        %v1087 = vunpack.c.h.b16 %v500
        %v1088 = vunpack.c.l.b16 %v501
        %v1089 = vunpack.c.h.b16 %v501
        %v1090 = vunpack.c.l.b16 %v502
        %v1091 = vunpack.c.h.b16 %v502
        %v1092 = vunpack.c.l.b16 %v503
        %v1093 = vunpack.c.h.b16 %v503
        %v1094 = vunpack.c.l.b16 %v504
        %v1095 = vunpack.c.h.b16 %v504
        %v1096 = vunpack.c.l.b16 %v505
        %v1097 = vunpack.c.h.b16 %v505
        %v1098 = vunpack.c.l.b16 %v506
        %v1099 = vunpack.c.h.b16 %v506
        %v1100 = vunpack.c.l.b16 %v507
        %v1101 = vunpack.c.h.b16 %v507
        %v1102 = vunpack.c.l.b16 %v508
        %v1103 = vunpack.c.h.b16 %v508
        %v1104 = vunpack.c.l.b16 %v509
        %v1105 = vunpack.c.h.b16 %v509
        %v1106 = vunpack.c.l.b16 %v510
        %v1107 = vunpack.c.h.b16 %v510
        %v1108 = vunpack.c.l.b16 %v511
        %v1109 = vunpack.c.h.b16 %v511
        %v1110 = vunpack.c.l.b16 %v512
        %v1111 = vunpack.c.h.b16 %v512
        %v1112 = vunpack.c.l.b16 %v513
        %v1113 = vunpack.c.h.b16 %v513
        %v1114 = vunpack.c.l.b16 %v514
        %v1115 = vunpack.c.h.b16 %v514
        %v1116 = vunpack.c.l.b16 %v515
        %v1117 = vunpack.c.h.b16 %v515
        %v1118 = vunpack.c.l.b16 %v516
        %v1119 = vunpack.c.h.b16 %v516
        %v1120 = vunpack.c.l.b16 %v517
        %v1121 = vunpack.c.h.b16 %v517
        %v1122 = vunpack.c.l.b16 %v518
        %v1123 = vunpack.c.h.b16 %v518
        %v1124 = vunpack.c.l.b16 %v519
        %v1125 = vunpack.c.h.b16 %v519
        %v1126 = vpack.c.b16 %v1066, %v1062
        %v1127 = vpack.c.b16 %v1067, %v1063
        %v1128 = vpack.c.b16 %v1068, %v1064
        %v1129 = vpack.c.b16 %v1069, %v1065
        %v1130 = vpack.c.b16 %v1074, %v1070
        %v1131 = vpack.c.b16 %v1075, %v1071
        %v1132 = vpack.c.b16 %v1076, %v1072
        %v1133 = vpack.c.b16 %v1077, %v1073
        %v1134 = vpack.c.b16 %v1082, %v1078
        %v1135 = vpack.c.b16 %v1083, %v1079
        %v1136 = vpack.c.b16 %v1084, %v1080
        %v1137 = vpack.c.b16 %v1085, %v1081
        %v1138 = vpack.c.b16 %v1090, %v1086
        %v1139 = vpack.c.b16 %v1091, %v1087
        %v1140 = vpack.c.b16 %v1092, %v1088
        %v1141 = vpack.c.b16 %v1093, %v1089
        %v1142 = vpack.c.b16 %v1098, %v1094
        %v1143 = vpack.c.b16 %v1099, %v1095
        %v1144 = vpack.c.b16 %v1100, %v1096
        %v1145 = vpack.c.b16 %v1101, %v1097
        %v1146 = vpack.c.b16 %v1106, %v1102
        %v1147 = vpack.c.b16 %v1107, %v1103
        %v1148 = vpack.c.b16 %v1108, %v1104
        %v1149 = vpack.c.b16 %v1109, %v1105
        %v1150 = vpack.c.b16 %v1114, %v1110
        %v1151 = vpack.c.b16 %v1115, %v1111
        %v1152 = vpack.c.b16 %v1116, %v1112
        %v1153 = vpack.c.b16 %v1117, %v1113
        %v1154 = vpack.c.b16 %v1122, %v1118
        %v1155 = vpack.c.b16 %v1123, %v1119
        %v1156 = vpack.c.b16 %v1124, %v1120
        %v1157 = vpack.c.b16 %v1125, %v1121
        %1190 = vmatprep.subr.bf16.mxu0 %v1127
        %1191 = vmatpush1.bf16.msra.mxu0 %v1126
        %1192 = vmatprep.subr.bf16.mxu0 %v1131
        %1193 = vmatpush1.bf16.msra.mxu0 %v1130
        %1194 = vmatprep.subr.bf16.mxu0 %v1135
        %1195 = vmatpush1.bf16.msra.mxu0 %v1134
        %1196 = vmatprep.subr.bf16.mxu0 %v1139
        %1197 = vmatpush1.bf16.msra.mxu0 %v1138
        %1198 = vmatprep.subr.bf16.mxu0 %v1143
        %1199 = vmatpush1.bf16.msra.mxu0 %v1142
        %1200 = vmatprep.subr.bf16.mxu0 %v1147
        %1201 = vmatpush1.bf16.msra.mxu0 %v1146
        %1202 = vmatprep.subr.bf16.mxu0 %v1151
        %1203 = vmatpush1.bf16.msra.mxu0 %v1150
        %1204 = vmatprep.subr.bf16.mxu0 %v1155
        %1205 = vmatpush1.bf16.msra.mxu0 %v1154
        %1206 = vmatprep.subr.bf16.mxu0 0
        %1207 = vmatpush1.bf16.msra.mxu0 0
        %1208 = vmatprep.subr.bf16.mxu0 0
        %1209 = vmatpush1.bf16.msra.mxu0 0
        %1210 = vmatprep.subr.bf16.mxu0 0
        %1211 = vmatpush1.bf16.msra.mxu0 0
        %1212 = vmatprep.subr.bf16.mxu0 0
        %1213 = vmatpush1.bf16.msra.mxu0 0
        %1214 = vmatprep.subr.bf16.mxu0 0
        %1215 = vmatpush1.bf16.msra.mxu0 0
        %1216 = vmatprep.subr.bf16.mxu0 0
        %1217 = vmatpush1.bf16.msra.mxu0 0
        %1218 = vmatprep.subr.bf16.mxu0 0
        %1219 = vmatpush1.bf16.msra.mxu0 0
        %1220 = vmatprep.subr.bf16.mxu0 0
        %1221 = vmatpush1.bf16.msra.mxu0 0
        %1222 = vmatprep.mubr.bf16.mxu0 0
        %1223 = vmatmul.mubr.bf16.gmra.mrb[0].mxu0 0
        %v1224 = vpop.f32.mrb[0].mxu0
        %v1225 = vadd.f32 0.0, %v1224
        %v1226 = vpop.f32.mrb[0].mxu0
        %v1227 = vadd.f32 0.0, %v1226
        %v1228 = vpop.f32.mrb[0].mxu0
        %v1229 = vpop.f32.mrb[0].mxu0
        %1230 = vdwg.mxu0
        %1231 = vmatprep.subr.bf16.mxu0 %v1129
        %1232 = vmatpush1.bf16.msra.mxu0 %v1128
        %1233 = vmatprep.subr.bf16.mxu0 %v1133
        %1234 = vmatpush1.bf16.msra.mxu0 %v1132
        %1235 = vmatprep.subr.bf16.mxu0 %v1137
        %1236 = vmatpush1.bf16.msra.mxu0 %v1136
        %1237 = vmatprep.subr.bf16.mxu0 %v1141
        %1238 = vmatpush1.bf16.msra.mxu0 %v1140
        %1239 = vmatprep.subr.bf16.mxu0 %v1145
        %1240 = vmatpush1.bf16.msra.mxu0 %v1144
        %1241 = vmatprep.subr.bf16.mxu0 %v1149
        %1242 = vmatpush1.bf16.msra.mxu0 %v1148
        %1243 = vmatprep.subr.bf16.mxu0 %v1153
        %1244 = vmatpush1.bf16.msra.mxu0 %v1152
        %1245 = vmatprep.subr.bf16.mxu0 %v1157
        %1246 = vmatpush1.bf16.msra.mxu0 %v1156
        %1247 = vmatprep.subr.bf16.mxu0 0
        %1248 = vmatpush1.bf16.msra.mxu0 0
        %1249 = vmatprep.subr.bf16.mxu0 0
        %1250 = vmatpush1.bf16.msra.mxu0 0
        %1251 = vmatprep.subr.bf16.mxu0 0
        %1252 = vmatpush1.bf16.msra.mxu0 0
        %1253 = vmatprep.subr.bf16.mxu0 0
        %1254 = vmatpush1.bf16.msra.mxu0 0
        %1255 = vmatprep.subr.bf16.mxu0 0
        %1256 = vmatpush1.bf16.msra.mxu0 0
        %1257 = vmatprep.subr.bf16.mxu0 0
        %1258 = vmatpush1.bf16.msra.mxu0 0
        %1259 = vmatprep.subr.bf16.mxu0 0
        %1260 = vmatpush1.bf16.msra.mxu0 0
        %1261 = vmatprep.subr.bf16.mxu0 0
        %1262 = vmatpush1.bf16.msra.mxu0 0
        %1263 = vmatprep.mubr.bf16.mxu0 0
        %1264 = vmatmul.mubr.bf16.gmra.mrb[0].mxu0 0
        %v1265 = vpop.f32.mrb[0].mxu0
        %v1266 = vadd.f32 0.0, %v1265
        %v1267 = vpop.f32.mrb[0].mxu0
        %v1268 = vadd.f32 0.0, %v1267
        %v1269 = vpop.f32.mrb[0].mxu0
        %v1270 = vpop.f32.mrb[0].mxu0
        %1271 = vdwg.mxu0
        %v1272 = vadd.f32 %v1026, %v1225
        %v1273 = vadd.f32 %v1027, %v1227
        %v1274 = vadd.f32 %v1028, %v1266
        %v1275 = vadd.f32 %v1029, %v1268
        %v1276 = vxor.u32 %v1272, 2147483648
        %v1277 = vmul.f32 %v1276, 1.442695
        %v1278 = vpow.pop %v1277
        %v1279 = vadd.f32 %v1278, 1.0
        %v1280 = vrcp.pop %v1279
        %v1281 = vmul.f32 1.0, %v1280
        %v1282 = vxor.u32 %v1273, 2147483648
        %v1283 = vmul.f32 %v1282, 1.442695
        %v1284 = vpow.pop %v1283
        %v1285 = vadd.f32 %v1284, 1.0
        %v1286 = vrcp.pop %v1285
        %v1287 = vmul.f32 1.0, %v1286
        %v1288 = vtanh.pop %v1274
        %v1289 = vxor.u32 %v1275, 2147483648
        %v1290 = vmul.f32 %v1289, 1.442695
        %v1291 = vpow.pop %v1290
        %v1292 = vadd.f32 %v1291, 1.0
        %v1293 = vrcp.pop %v1292
        %v1294 = vmul.f32 1.0, %v1293
        %v1295 = vmul.f32 %v1287, 0.0
        %v1296 = vmul.f32 %v1281, %v1288
        %v1297 = vadd.f32 %v1295, %v1296
        %v1298 = vtanh.pop %v1297
        %v1299 = vmul.f32 %v1294, %v1298
        %v1300 = vpack.c.bf16 %v1299, %v1299
        %1301 = vst [vmem:[#allocation3] sm:$0xf] %v1300
        %s1302 = scalar_lea.vmem [#allocation2], 16
        %v1303 = vld [vmem:[%s1302] sm:$0xff]
        %v1304 = vld [vmem:[%s1302 + $0x8] sm:$0xff]
        %v1305 = vunpack.c.l.bf16 %v1303
        %v1306 = vunpack.c.h.bf16 %v1303
        %v1307 = vunpack.c.l.bf16 %v1304
        %v1308 = vunpack.c.h.bf16 %v1304
        %1309 = vmatprep.subr.bf16.mxu0 %v1127
        %1310 = vmatpush1.bf16.msra.mxu0 %v1126
        %1311 = vmatprep.subr.bf16.mxu0 %v1131
        %1312 = vmatpush1.bf16.msra.mxu0 %v1130
        %1313 = vmatprep.subr.bf16.mxu0 %v1135
        %1314 = vmatpush1.bf16.msra.mxu0 %v1134
        %1315 = vmatprep.subr.bf16.mxu0 %v1139
        %1316 = vmatpush1.bf16.msra.mxu0 %v1138
        %1317 = vmatprep.subr.bf16.mxu0 %v1143
        %1318 = vmatpush1.bf16.msra.mxu0 %v1142
        %1319 = vmatprep.subr.bf16.mxu0 %v1147
        %1320 = vmatpush1.bf16.msra.mxu0 %v1146
        %1321 = vmatprep.subr.bf16.mxu0 %v1151
        %1322 = vmatpush1.bf16.msra.mxu0 %v1150
        %1323 = vmatprep.subr.bf16.mxu0 %v1155
        %1324 = vmatpush1.bf16.msra.mxu0 %v1154
        %1325 = vmatprep.subr.bf16.mxu0 0
        %1326 = vmatpush1.bf16.msra.mxu0 0
        %1327 = vmatprep.subr.bf16.mxu0 0
        %1328 = vmatpush1.bf16.msra.mxu0 0
        %1329 = vmatprep.subr.bf16.mxu0 0
        %1330 = vmatpush1.bf16.msra.mxu0 0
        %1331 = vmatprep.subr.bf16.mxu0 0
        %1332 = vmatpush1.bf16.msra.mxu0 0
        %1333 = vmatprep.subr.bf16.mxu0 0
        %1334 = vmatpush1.bf16.msra.mxu0 0
        %1335 = vmatprep.subr.bf16.mxu0 0
        %1336 = vmatpush1.bf16.msra.mxu0 0
        %1337 = vmatprep.subr.bf16.mxu0 0
        %1338 = vmatpush1.bf16.msra.mxu0 0
        %1339 = vmatprep.subr.bf16.mxu0 0
        %1340 = vmatpush1.bf16.msra.mxu0 0
        %1341 = vmatprep.mubr.bf16.mxu0 0
        %1342 = vmatmul.mubr.bf16.gmra.mrb[0].mxu0 %v1300
        %v1343 = vpop.f32.mrb[0].mxu0
        %v1344 = vadd.f32 0.0, %v1343
        %v1345 = vpop.f32.mrb[0].mxu0
        %v1346 = vadd.f32 0.0, %v1345
        %v1347 = vpop.f32.mrb[0].mxu0
        %v1348 = vpop.f32.mrb[0].mxu0
        %1349 = vdwg.mxu0
        %1350 = vmatprep.subr.bf16.mxu0 %v1129
        %1351 = vmatpush1.bf16.msra.mxu0 %v1128
        %1352 = vmatprep.subr.bf16.mxu0 %v1133
        %1353 = vmatpush1.bf16.msra.mxu0 %v1132
        %1354 = vmatprep.subr.bf16.mxu0 %v1137
        %1355 = vmatpush1.bf16.msra.mxu0 %v1136
        %1356 = vmatprep.subr.bf16.mxu0 %v1141
        %1357 = vmatpush1.bf16.msra.mxu0 %v1140
        %1358 = vmatprep.subr.bf16.mxu0 %v1145
        %1359 = vmatpush1.bf16.msra.mxu0 %v1144
        %1360 = vmatprep.subr.bf16.mxu0 %v1149
        %1361 = vmatpush1.bf16.msra.mxu0 %v1148
        %1362 = vmatprep.subr.bf16.mxu0 %v1153
        %1363 = vmatpush1.bf16.msra.mxu0 %v1152
        %1364 = vmatprep.subr.bf16.mxu0 %v1157
        %1365 = vmatpush1.bf16.msra.mxu0 %v1156
        %1366 = vmatprep.subr.bf16.mxu0 0
        %1367 = vmatpush1.bf16.msra.mxu0 0
        %1368 = vmatprep.subr.bf16.mxu0 0
        %1369 = vmatpush1.bf16.msra.mxu0 0
        %1370 = vmatprep.subr.bf16.mxu0 0
        %1371 = vmatpush1.bf16.msra.mxu0 0
        %1372 = vmatprep.subr.bf16.mxu0 0
        %1373 = vmatpush1.bf16.msra.mxu0 0
        %1374 = vmatprep.subr.bf16.mxu0 0
        %1375 = vmatpush1.bf16.msra.mxu0 0
        %1376 = vmatprep.subr.bf16.mxu0 0
        %1377 = vmatpush1.bf16.msra.mxu0 0
        %1378 = vmatprep.subr.bf16.mxu0 0
        %1379 = vmatpush1.bf16.msra.mxu0 0
        %1380 = vmatprep.subr.bf16.mxu0 0
        %1381 = vmatpush1.bf16.msra.mxu0 0
        %1382 = vmatprep.mubr.bf16.mxu0 0
        %1383 = vmatmul.mubr.bf16.gmra.mrb[0].mxu0 %v1300
        %v1384 = vpop.f32.mrb[0].mxu0
        %v1385 = vadd.f32 0.0, %v1384
        %v1386 = vpop.f32.mrb[0].mxu0
        %v1387 = vadd.f32 0.0, %v1386
        %v1388 = vpop.f32.mrb[0].mxu0
        %v1389 = vpop.f32.mrb[0].mxu0
        %1390 = vdwg.mxu0
        %v1391 = vadd.f32 %v1305, %v1344
        %v1392 = vadd.f32 %v1306, %v1346
        %v1393 = vadd.f32 %v1307, %v1385
        %v1394 = vadd.f32 %v1308, %v1387
        %v1395 = vxor.u32 %v1391, 2147483648
        %v1396 = vmul.f32 %v1395, 1.442695
        %v1397 = vpow.pop %v1396
        %v1398 = vadd.f32 %v1397, 1.0
        %v1399 = vrcp.pop %v1398
        %v1400 = vmul.f32 1.0, %v1399
        %v1401 = vxor.u32 %v1392, 2147483648
        %v1402 = vmul.f32 %v1401, 1.442695
        %v1403 = vpow.pop %v1402
        %v1404 = vadd.f32 %v1403, 1.0
        %v1405 = vrcp.pop %v1404
        %v1406 = vmul.f32 1.0, %v1405
        %v1407 = vtanh.pop %v1393
        %v1408 = vxor.u32 %v1394, 2147483648
        %v1409 = vmul.f32 %v1408, 1.442695
        %v1410 = vpow.pop %v1409
        %v1411 = vadd.f32 %v1410, 1.0
        %v1412 = vrcp.pop %v1411
        %v1413 = vmul.f32 1.0, %v1412
        %v1414 = vmul.f32 %v1406, %v1297
        %v1415 = vmul.f32 %v1400, %v1407
        %v1416 = vadd.f32 %v1414, %v1415
        %v1417 = vtanh.pop %v1416
        %v1418 = vmul.f32 %v1413, %v1417
        %v1419 = vpack.c.bf16 %v1418, %v1418
        %s1420 = scalar_lea.vmem [#allocation3], 4
        %1421 = vst [vmem:[%s1420] sm:$0xf] %v1419
        %s1422 = scalar_lea.vmem [#allocation2], 32
        %v1423 = vld [vmem:[%s1422] sm:$0xff]
        %v1424 = vld [vmem:[%s1422 + $0x8] sm:$0xff]
        %v1425 = vunpack.c.l.bf16 %v1423
        %v1426 = vunpack.c.h.bf16 %v1423
        %v1427 = vunpack.c.l.bf16 %v1424
        %v1428 = vunpack.c.h.bf16 %v1424
        %1429 = vmatprep.subr.bf16.mxu0 %v1127
        %1430 = vmatpush1.bf16.msra.mxu0 %v1126
        %1431 = vmatprep.subr.bf16.mxu0 %v1131
        %1432 = vmatpush1.bf16.msra.mxu0 %v1130
        %1433 = vmatprep.subr.bf16.mxu0 %v1135
        %1434 = vmatpush1.bf16.msra.mxu0 %v1134
        %1435 = vmatprep.subr.bf16.mxu0 %v1139
        %1436 = vmatpush1.bf16.msra.mxu0 %v1138
        %1437 = vmatprep.subr.bf16.mxu0 %v1143
        %1438 = vmatpush1.bf16.msra.mxu0 %v1142
        %1439 = vmatprep.subr.bf16.mxu0 %v1147
        %1440 = vmatpush1.bf16.msra.mxu0 %v1146
        %1441 = vmatprep.subr.bf16.mxu0 %v1151
        %1442 = vmatpush1.bf16.msra.mxu0 %v1150
        %1443 = vmatprep.subr.bf16.mxu0 %v1155
        %1444 = vmatpush1.bf16.msra.mxu0 %v1154
        %1445 = vmatprep.subr.bf16.mxu0 0
        %1446 = vmatpush1.bf16.msra.mxu0 0
        %1447 = vmatprep.subr.bf16.mxu0 0
        %1448 = vmatpush1.bf16.msra.mxu0 0
        %1449 = vmatprep.subr.bf16.mxu0 0
        %1450 = vmatpush1.bf16.msra.mxu0 0
        %1451 = vmatprep.subr.bf16.mxu0 0
        %1452 = vmatpush1.bf16.msra.mxu0 0
        %1453 = vmatprep.subr.bf16.mxu0 0
        %1454 = vmatpush1.bf16.msra.mxu0 0
        %1455 = vmatprep.subr.bf16.mxu0 0
        %1456 = vmatpush1.bf16.msra.mxu0 0
        %1457 = vmatprep.subr.bf16.mxu0 0
        %1458 = vmatpush1.bf16.msra.mxu0 0
        %1459 = vmatprep.subr.bf16.mxu0 0
        %1460 = vmatpush1.bf16.msra.mxu0 0
        %1461 = vmatprep.mubr.bf16.mxu0 0
        %1462 = vmatmul.mubr.bf16.gmra.mrb[0].mxu0 %v1419
        %v1463 = vpop.f32.mrb[0].mxu0
        %v1464 = vadd.f32 0.0, %v1463
        %v1465 = vpop.f32.mrb[0].mxu0
        %v1466 = vadd.f32 0.0, %v1465
        %v1467 = vpop.f32.mrb[0].mxu0
        %v1468 = vpop.f32.mrb[0].mxu0
        %1469 = vdwg.mxu0
        %1470 = vmatprep.subr.bf16.mxu0 %v1129
        %1471 = vmatpush1.bf16.msra.mxu0 %v1128
        %1472 = vmatprep.subr.bf16.mxu0 %v1133
        %1473 = vmatpush1.bf16.msra.mxu0 %v1132
        %1474 = vmatprep.subr.bf16.mxu0 %v1137
        %1475 = vmatpush1.bf16.msra.mxu0 %v1136
        %1476 = vmatprep.subr.bf16.mxu0 %v1141
        %1477 = vmatpush1.bf16.msra.mxu0 %v1140
        %1478 = vmatprep.subr.bf16.mxu0 %v1145
        %1479 = vmatpush1.bf16.msra.mxu0 %v1144
        %1480 = vmatprep.subr.bf16.mxu0 %v1149
        %1481 = vmatpush1.bf16.msra.mxu0 %v1148
        %1482 = vmatprep.subr.bf16.mxu0 %v1153
        %1483 = vmatpush1.bf16.msra.mxu0 %v1152
        %1484 = vmatprep.subr.bf16.mxu0 %v1157
        %1485 = vmatpush1.bf16.msra.mxu0 %v1156
        %1486 = vmatprep.subr.bf16.mxu0 0
        %1487 = vmatpush1.bf16.msra.mxu0 0
        %1488 = vmatprep.subr.bf16.mxu0 0
        %1489 = vmatpush1.bf16.msra.mxu0 0
        %1490 = vmatprep.subr.bf16.mxu0 0
        %1491 = vmatpush1.bf16.msra.mxu0 0
        %1492 = vmatprep.subr.bf16.mxu0 0
        %1493 = vmatpush1.bf16.msra.mxu0 0
        %1494 = vmatprep.subr.bf16.mxu0 0
        %1495 = vmatpush1.bf16.msra.mxu0 0
        %1496 = vmatprep.subr.bf16.mxu0 0
        %1497 = vmatpush1.bf16.msra.mxu0 0
        %1498 = vmatprep.subr.bf16.mxu0 0
        %1499 = vmatpush1.bf16.msra.mxu0 0
        %1500 = vmatprep.subr.bf16.mxu0 0
        %1501 = vmatpush1.bf16.msra.mxu0 0
        %1502 = vmatprep.mubr.bf16.mxu0 0
        %1503 = vmatmul.mubr.bf16.gmra.mrb[0].mxu0 %v1419
        %v1504 = vpop.f32.mrb[0].mxu0
        %v1505 = vadd.f32 0.0, %v1504
        %v1506 = vpop.f32.mrb[0].mxu0
        %v1507 = vadd.f32 0.0, %v1506
        %v1508 = vpop.f32.mrb[0].mxu0
        %v1509 = vpop.f32.mrb[0].mxu0
        %1510 = vdwg.mxu0
        %v1511 = vadd.f32 %v1425, %v1464
        %v1512 = vadd.f32 %v1426, %v1466
        %v1513 = vadd.f32 %v1427, %v1505
        %v1514 = vadd.f32 %v1428, %v1507
        %v1515 = vxor.u32 %v1511, 2147483648
        %v1516 = vmul.f32 %v1515, 1.442695
        %v1517 = vpow.pop %v1516
        %v1518 = vadd.f32 %v1517, 1.0
        %v1519 = vrcp.pop %v1518
        %v1520 = vmul.f32 1.0, %v1519
        %v1521 = vxor.u32 %v1512, 2147483648
        %v1522 = vmul.f32 %v1521, 1.442695
        %v1523 = vpow.pop %v1522
        %v1524 = vadd.f32 %v1523, 1.0
        %v1525 = vrcp.pop %v1524
        %v1526 = vmul.f32 1.0, %v1525
        %v1527 = vtanh.pop %v1513
        %v1528 = vxor.u32 %v1514, 2147483648
        %v1529 = vmul.f32 %v1528, 1.442695
        %v1530 = vpow.pop %v1529
        %v1531 = vadd.f32 %v1530, 1.0
        %v1532 = vrcp.pop %v1531
        %v1533 = vmul.f32 1.0, %v1532
        %v1534 = vmul.f32 %v1526, %v1416
        %v1535 = vmul.f32 %v1520, %v1527
        %v1536 = vadd.f32 %v1534, %v1535
        %v1537 = vtanh.pop %v1536
        %v1538 = vmul.f32 %v1533, %v1537
        %v1539 = vpack.c.bf16 %v1538, %v1538
        %s1540 = scalar_lea.vmem [#allocation3], 8
        %1541 = vst [vmem:[%s1540] sm:$0xf] %v1539
        %s1542 = scalar_lea.vmem [#allocation2], 48
        %v1543 = vld [vmem:[%s1542] sm:$0xff]
        %v1544 = vld [vmem:[%s1542 + $0x8] sm:$0xff]
        %v1545 = vunpack.c.l.bf16 %v1543
        %v1546 = vunpack.c.h.bf16 %v1543
        %v1547 = vunpack.c.l.bf16 %v1544
        %v1548 = vunpack.c.h.bf16 %v1544
        %1549 = vmatprep.subr.bf16.mxu0 %v1127
        %1550 = vmatpush1.bf16.msra.mxu0 %v1126
        %1551 = vmatprep.subr.bf16.mxu0 %v1131
        %1552 = vmatpush1.bf16.msra.mxu0 %v1130
        %1553 = vmatprep.subr.bf16.mxu0 %v1135
        %1554 = vmatpush1.bf16.msra.mxu0 %v1134
        %1555 = vmatprep.subr.bf16.mxu0 %v1139
        %1556 = vmatpush1.bf16.msra.mxu0 %v1138
        %1557 = vmatprep.subr.bf16.mxu0 %v1143
        %1558 = vmatpush1.bf16.msra.mxu0 %v1142
        %1559 = vmatprep.subr.bf16.mxu0 %v1147
        %1560 = vmatpush1.bf16.msra.mxu0 %v1146
        %1561 = vmatprep.subr.bf16.mxu0 %v1151
        %1562 = vmatpush1.bf16.msra.mxu0 %v1150
        %1563 = vmatprep.subr.bf16.mxu0 %v1155
        %1564 = vmatpush1.bf16.msra.mxu0 %v1154
        %1565 = vmatprep.subr.bf16.mxu0 0
        %1566 = vmatpush1.bf16.msra.mxu0 0
        %1567 = vmatprep.subr.bf16.mxu0 0
        %1568 = vmatpush1.bf16.msra.mxu0 0
        %1569 = vmatprep.subr.bf16.mxu0 0
        %1570 = vmatpush1.bf16.msra.mxu0 0
        %1571 = vmatprep.subr.bf16.mxu0 0
        %1572 = vmatpush1.bf16.msra.mxu0 0
        %1573 = vmatprep.subr.bf16.mxu0 0
        %1574 = vmatpush1.bf16.msra.mxu0 0
        %1575 = vmatprep.subr.bf16.mxu0 0
        %1576 = vmatpush1.bf16.msra.mxu0 0
        %1577 = vmatprep.subr.bf16.mxu0 0
        %1578 = vmatpush1.bf16.msra.mxu0 0
        %1579 = vmatprep.subr.bf16.mxu0 0
        %1580 = vmatpush1.bf16.msra.mxu0 0
        %1581 = vmatprep.mubr.bf16.mxu0 0
        %1582 = vmatmul.mubr.bf16.gmra.mrb[0].mxu0 %v1539
        %v1583 = vpop.f32.mrb[0].mxu0
        %v1584 = vadd.f32 0.0, %v1583
        %v1585 = vpop.f32.mrb[0].mxu0
        %v1586 = vadd.f32 0.0, %v1585
        %v1587 = vpop.f32.mrb[0].mxu0
        %v1588 = vpop.f32.mrb[0].mxu0
        %1589 = vdwg.mxu0
        %1590 = vmatprep.subr.bf16.mxu0 %v1129
        %1591 = vmatpush1.bf16.msra.mxu0 %v1128
        %1592 = vmatprep.subr.bf16.mxu0 %v1133
        %1593 = vmatpush1.bf16.msra.mxu0 %v1132
        %1594 = vmatprep.subr.bf16.mxu0 %v1137
        %1595 = vmatpush1.bf16.msra.mxu0 %v1136
        %1596 = vmatprep.subr.bf16.mxu0 %v1141
        %1597 = vmatpush1.bf16.msra.mxu0 %v1140
        %1598 = vmatprep.subr.bf16.mxu0 %v1145
        %1599 = vmatpush1.bf16.msra.mxu0 %v1144
        %1600 = vmatprep.subr.bf16.mxu0 %v1149
        %1601 = vmatpush1.bf16.msra.mxu0 %v1148
        %1602 = vmatprep.subr.bf16.mxu0 %v1153
        %1603 = vmatpush1.bf16.msra.mxu0 %v1152
        %1604 = vmatprep.subr.bf16.mxu0 %v1157
        %1605 = vmatpush1.bf16.msra.mxu0 %v1156
        %1606 = vmatprep.subr.bf16.mxu0 0
        %1607 = vmatpush1.bf16.msra.mxu0 0
        %1608 = vmatprep.subr.bf16.mxu0 0
        %1609 = vmatpush1.bf16.msra.mxu0 0
        %1610 = vmatprep.subr.bf16.mxu0 0
        %1611 = vmatpush1.bf16.msra.mxu0 0
        %1612 = vmatprep.subr.bf16.mxu0 0
        %1613 = vmatpush1.bf16.msra.mxu0 0
        %1614 = vmatprep.subr.bf16.mxu0 0
        %1615 = vmatpush1.bf16.msra.mxu0 0
        %1616 = vmatprep.subr.bf16.mxu0 0
        %1617 = vmatpush1.bf16.msra.mxu0 0
        %1618 = vmatprep.subr.bf16.mxu0 0
        %1619 = vmatpush1.bf16.msra.mxu0 0
        %1620 = vmatprep.subr.bf16.mxu0 0
        %1621 = vmatpush1.bf16.msra.mxu0 0
        %1622 = vmatprep.mubr.bf16.mxu0 0
        %1623 = vmatmul.mubr.bf16.gmra.mrb[0].mxu0 %v1539
        %v1624 = vpop.f32.mrb[0].mxu0
        %v1625 = vadd.f32 0.0, %v1624
        %v1626 = vpop.f32.mrb[0].mxu0
        %v1627 = vadd.f32 0.0, %v1626
        %v1628 = vpop.f32.mrb[0].mxu0
        %v1629 = vpop.f32.mrb[0].mxu0
        %1630 = vdwg.mxu0
        %v1631 = vadd.f32 %v1545, %v1584
        %v1632 = vadd.f32 %v1546, %v1586
        %v1633 = vadd.f32 %v1547, %v1625
        %v1634 = vadd.f32 %v1548, %v1627
        %v1635 = vxor.u32 %v1631, 2147483648
        %v1636 = vmul.f32 %v1635, 1.442695
        %v1637 = vpow.pop %v1636
        %v1638 = vadd.f32 %v1637, 1.0
        %v1639 = vrcp.pop %v1638
        %v1640 = vmul.f32 1.0, %v1639
        %v1641 = vxor.u32 %v1632, 2147483648
        %v1642 = vmul.f32 %v1641, 1.442695
        %v1643 = vpow.pop %v1642
        %v1644 = vadd.f32 %v1643, 1.0
        %v1645 = vrcp.pop %v1644
        %v1646 = vmul.f32 1.0, %v1645
        %v1647 = vtanh.pop %v1633
        %v1648 = vxor.u32 %v1634, 2147483648
        %v1649 = vmul.f32 %v1648, 1.442695
        %v1650 = vpow.pop %v1649
        %v1651 = vadd.f32 %v1650, 1.0
        %v1652 = vrcp.pop %v1651
        %v1653 = vmul.f32 1.0, %v1652
        %v1654 = vmul.f32 %v1646, %v1536
        %v1655 = vmul.f32 %v1640, %v1647
        %v1656 = vadd.f32 %v1654, %v1655
        %v1657 = vtanh.pop %v1656
        %v1658 = vmul.f32 %v1653, %v1657
        %v1659 = vpack.c.bf16 %v1658, %v1658
        %s1660 = scalar_lea.vmem [#allocation3], 12
        %1661 = vst [vmem:[%s1660] sm:$0xf] %v1659
        %s1662 = scalar_lea.vmem [#allocation2], 64
        %v1663 = vld [vmem:[%s1662] sm:$0xff]
        %v1664 = vld [vmem:[%s1662 + $0x8] sm:$0xff]
        %v1665 = vunpack.c.l.bf16 %v1663
        %v1666 = vunpack.c.h.bf16 %v1663
        %v1667 = vunpack.c.l.bf16 %v1664
        %v1668 = vunpack.c.h.bf16 %v1664
        %1669 = vmatprep.subr.bf16.mxu0 %v1127
        %1670 = vmatpush1.bf16.msra.mxu0 %v1126
        %1671 = vmatprep.subr.bf16.mxu0 %v1131
        %1672 = vmatpush1.bf16.msra.mxu0 %v1130
        %1673 = vmatprep.subr.bf16.mxu0 %v1135
        %1674 = vmatpush1.bf16.msra.mxu0 %v1134
        %1675 = vmatprep.subr.bf16.mxu0 %v1139
        %1676 = vmatpush1.bf16.msra.mxu0 %v1138
        %1677 = vmatprep.subr.bf16.mxu0 %v1143
        %1678 = vmatpush1.bf16.msra.mxu0 %v1142
        %1679 = vmatprep.subr.bf16.mxu0 %v1147
        %1680 = vmatpush1.bf16.msra.mxu0 %v1146
        %1681 = vmatprep.subr.bf16.mxu0 %v1151
        %1682 = vmatpush1.bf16.msra.mxu0 %v1150
        %1683 = vmatprep.subr.bf16.mxu0 %v1155
        %1684 = vmatpush1.bf16.msra.mxu0 %v1154
        %1685 = vmatprep.subr.bf16.mxu0 0
        %1686 = vmatpush1.bf16.msra.mxu0 0
        %1687 = vmatprep.subr.bf16.mxu0 0
        %1688 = vmatpush1.bf16.msra.mxu0 0
        %1689 = vmatprep.subr.bf16.mxu0 0
        %1690 = vmatpush1.bf16.msra.mxu0 0
        %1691 = vmatprep.subr.bf16.mxu0 0
        %1692 = vmatpush1.bf16.msra.mxu0 0
        %1693 = vmatprep.subr.bf16.mxu0 0
        %1694 = vmatpush1.bf16.msra.mxu0 0
        %1695 = vmatprep.subr.bf16.mxu0 0
        %1696 = vmatpush1.bf16.msra.mxu0 0
        %1697 = vmatprep.subr.bf16.mxu0 0
        %1698 = vmatpush1.bf16.msra.mxu0 0
        %1699 = vmatprep.subr.bf16.mxu0 0
        %1700 = vmatpush1.bf16.msra.mxu0 0
        %1701 = vmatprep.mubr.bf16.mxu0 0
        %1702 = vmatmul.mubr.bf16.gmra.mrb[0].mxu0 %v1659
        %v1703 = vpop.f32.mrb[0].mxu0
        %v1704 = vadd.f32 0.0, %v1703
        %v1705 = vpop.f32.mrb[0].mxu0
        %v1706 = vadd.f32 0.0, %v1705
        %v1707 = vpop.f32.mrb[0].mxu0
        %v1708 = vpop.f32.mrb[0].mxu0
        %1709 = vdwg.mxu0
        %1710 = vmatprep.subr.bf16.mxu0 %v1129
        %1711 = vmatpush1.bf16.msra.mxu0 %v1128
        %1712 = vmatprep.subr.bf16.mxu0 %v1133
        %1713 = vmatpush1.bf16.msra.mxu0 %v1132
        %1714 = vmatprep.subr.bf16.mxu0 %v1137
        %1715 = vmatpush1.bf16.msra.mxu0 %v1136
        %1716 = vmatprep.subr.bf16.mxu0 %v1141
        %1717 = vmatpush1.bf16.msra.mxu0 %v1140
        %1718 = vmatprep.subr.bf16.mxu0 %v1145
        %1719 = vmatpush1.bf16.msra.mxu0 %v1144
        %1720 = vmatprep.subr.bf16.mxu0 %v1149
        %1721 = vmatpush1.bf16.msra.mxu0 %v1148
        %1722 = vmatprep.subr.bf16.mxu0 %v1153
        %1723 = vmatpush1.bf16.msra.mxu0 %v1152
        %1724 = vmatprep.subr.bf16.mxu0 %v1157
        %1725 = vmatpush1.bf16.msra.mxu0 %v1156
        %1726 = vmatprep.subr.bf16.mxu0 0
        %1727 = vmatpush1.bf16.msra.mxu0 0
        %1728 = vmatprep.subr.bf16.mxu0 0
        %1729 = vmatpush1.bf16.msra.mxu0 0
        %1730 = vmatprep.subr.bf16.mxu0 0
        %1731 = vmatpush1.bf16.msra.mxu0 0
        %1732 = vmatprep.subr.bf16.mxu0 0
        %1733 = vmatpush1.bf16.msra.mxu0 0
        %1734 = vmatprep.subr.bf16.mxu0 0
        %1735 = vmatpush1.bf16.msra.mxu0 0
        %1736 = vmatprep.subr.bf16.mxu0 0
        %1737 = vmatpush1.bf16.msra.mxu0 0
        %1738 = vmatprep.subr.bf16.mxu0 0
        %1739 = vmatpush1.bf16.msra.mxu0 0
        %1740 = vmatprep.subr.bf16.mxu0 0
        %1741 = vmatpush1.bf16.msra.mxu0 0
        %1742 = vmatprep.mubr.bf16.mxu0 0
        %1743 = vmatmul.mubr.bf16.gmra.mrb[0].mxu0 %v1659
        %v1744 = vpop.f32.mrb[0].mxu0
        %v1745 = vadd.f32 0.0, %v1744
        %v1746 = vpop.f32.mrb[0].mxu0
        %v1747 = vadd.f32 0.0, %v1746
        %v1748 = vpop.f32.mrb[0].mxu0
        %v1749 = vpop.f32.mrb[0].mxu0
        %1750 = vdwg.mxu0
        %v1751 = vadd.f32 %v1665, %v1704
        %v1752 = vadd.f32 %v1666, %v1706
        %v1753 = vadd.f32 %v1667, %v1745
        %v1754 = vadd.f32 %v1668, %v1747
        %v1755 = vxor.u32 %v1751, 2147483648
        %v1756 = vmul.f32 %v1755, 1.442695
        %v1757 = vpow.pop %v1756
        %v1758 = vadd.f32 %v1757, 1.0
        %v1759 = vrcp.pop %v1758
        %v1760 = vmul.f32 1.0, %v1759
        %v1761 = vxor.u32 %v1752, 2147483648
        %v1762 = vmul.f32 %v1761, 1.442695
        %v1763 = vpow.pop %v1762
        %v1764 = vadd.f32 %v1763, 1.0
        %v1765 = vrcp.pop %v1764
        %v1766 = vmul.f32 1.0, %v1765
        %v1767 = vtanh.pop %v1753
        %v1768 = vxor.u32 %v1754, 2147483648
        %v1769 = vmul.f32 %v1768, 1.442695
        %v1770 = vpow.pop %v1769
        %v1771 = vadd.f32 %v1770, 1.0
        %v1772 = vrcp.pop %v1771
        %v1773 = vmul.f32 1.0, %v1772
        %v1774 = vmul.f32 %v1766, %v1656
        %v1775 = vmul.f32 %v1760, %v1767
        %v1776 = vadd.f32 %v1774, %v1775
        %v1777 = vtanh.pop %v1776
        %v1778 = vmul.f32 %v1773, %v1777
        %v1779 = vpack.c.bf16 %v1778, %v1778
        %s1780 = scalar_lea.vmem [#allocation3], 16
        %1781 = vst [vmem:[%s1780] sm:$0xf] %v1779
        %s1782 = scalar_lea.vmem [#allocation2], 80
        %v1783 = vld [vmem:[%s1782] sm:$0xff]
        %v1784 = vld [vmem:[%s1782 + $0x8] sm:$0xff]
        %v1785 = vunpack.c.l.bf16 %v1783
        %v1786 = vunpack.c.h.bf16 %v1783
        %v1787 = vunpack.c.l.bf16 %v1784
        %v1788 = vunpack.c.h.bf16 %v1784
        %1789 = vmatprep.subr.bf16.mxu0 %v1127
        %1790 = vmatpush1.bf16.msra.mxu0 %v1126
        %1791 = vmatprep.subr.bf16.mxu0 %v1131
        %1792 = vmatpush1.bf16.msra.mxu0 %v1130
        %1793 = vmatprep.subr.bf16.mxu0 %v1135
        %1794 = vmatpush1.bf16.msra.mxu0 %v1134
        %1795 = vmatprep.subr.bf16.mxu0 %v1139
        %1796 = vmatpush1.bf16.msra.mxu0 %v1138
        %1797 = vmatprep.subr.bf16.mxu0 %v1143
        %1798 = vmatpush1.bf16.msra.mxu0 %v1142
        %1799 = vmatprep.subr.bf16.mxu0 %v1147
        %1800 = vmatpush1.bf16.msra.mxu0 %v1146
        %1801 = vmatprep.subr.bf16.mxu0 %v1151
        %1802 = vmatpush1.bf16.msra.mxu0 %v1150
        %1803 = vmatprep.subr.bf16.mxu0 %v1155
        %1804 = vmatpush1.bf16.msra.mxu0 %v1154
        %1805 = vmatprep.subr.bf16.mxu0 0
        %1806 = vmatpush1.bf16.msra.mxu0 0
        %1807 = vmatprep.subr.bf16.mxu0 0
        %1808 = vmatpush1.bf16.msra.mxu0 0
        %1809 = vmatprep.subr.bf16.mxu0 0
        %1810 = vmatpush1.bf16.msra.mxu0 0
        %1811 = vmatprep.subr.bf16.mxu0 0
        %1812 = vmatpush1.bf16.msra.mxu0 0
        %1813 = vmatprep.subr.bf16.mxu0 0
        %1814 = vmatpush1.bf16.msra.mxu0 0
        %1815 = vmatprep.subr.bf16.mxu0 0
        %1816 = vmatpush1.bf16.msra.mxu0 0
        %1817 = vmatprep.subr.bf16.mxu0 0
        %1818 = vmatpush1.bf16.msra.mxu0 0
        %1819 = vmatprep.subr.bf16.mxu0 0
        %1820 = vmatpush1.bf16.msra.mxu0 0
        %1821 = vmatprep.mubr.bf16.mxu0 0
        %1822 = vmatmul.mubr.bf16.gmra.mrb[0].mxu0 %v1779
        %v1823 = vpop.f32.mrb[0].mxu0
        %v1824 = vadd.f32 0.0, %v1823
        %v1825 = vpop.f32.mrb[0].mxu0
        %v1826 = vadd.f32 0.0, %v1825
        %v1827 = vpop.f32.mrb[0].mxu0
        %v1828 = vpop.f32.mrb[0].mxu0
        %1829 = vdwg.mxu0
        %1830 = vmatprep.subr.bf16.mxu0 %v1129
        %1831 = vmatpush1.bf16.msra.mxu0 %v1128
        %1832 = vmatprep.subr.bf16.mxu0 %v1133
        %1833 = vmatpush1.bf16.msra.mxu0 %v1132
        %1834 = vmatprep.subr.bf16.mxu0 %v1137
        %1835 = vmatpush1.bf16.msra.mxu0 %v1136
        %1836 = vmatprep.subr.bf16.mxu0 %v1141
        %1837 = vmatpush1.bf16.msra.mxu0 %v1140
        %1838 = vmatprep.subr.bf16.mxu0 %v1145
        %1839 = vmatpush1.bf16.msra.mxu0 %v1144
        %1840 = vmatprep.subr.bf16.mxu0 %v1149
        %1841 = vmatpush1.bf16.msra.mxu0 %v1148
        %1842 = vmatprep.subr.bf16.mxu0 %v1153
        %1843 = vmatpush1.bf16.msra.mxu0 %v1152
        %1844 = vmatprep.subr.bf16.mxu0 %v1157
        %1845 = vmatpush1.bf16.msra.mxu0 %v1156
        %1846 = vmatprep.subr.bf16.mxu0 0
        %1847 = vmatpush1.bf16.msra.mxu0 0
        %1848 = vmatprep.subr.bf16.mxu0 0
        %1849 = vmatpush1.bf16.msra.mxu0 0
        %1850 = vmatprep.subr.bf16.mxu0 0
        %1851 = vmatpush1.bf16.msra.mxu0 0
        %1852 = vmatprep.subr.bf16.mxu0 0
        %1853 = vmatpush1.bf16.msra.mxu0 0
        %1854 = vmatprep.subr.bf16.mxu0 0
        %1855 = vmatpush1.bf16.msra.mxu0 0
        %1856 = vmatprep.subr.bf16.mxu0 0
        %1857 = vmatpush1.bf16.msra.mxu0 0
        %1858 = vmatprep.subr.bf16.mxu0 0
        %1859 = vmatpush1.bf16.msra.mxu0 0
        %1860 = vmatprep.subr.bf16.mxu0 0
        %1861 = vmatpush1.bf16.msra.mxu0 0
        %1862 = vmatprep.mubr.bf16.mxu0 0
        %1863 = vmatmul.mubr.bf16.gmra.mrb[0].mxu0 %v1779
        %v1864 = vpop.f32.mrb[0].mxu0
        %v1865 = vadd.f32 0.0, %v1864
        %v1866 = vpop.f32.mrb[0].mxu0
        %v1867 = vadd.f32 0.0, %v1866
        %v1868 = vpop.f32.mrb[0].mxu0
        %v1869 = vpop.f32.mrb[0].mxu0
        %1870 = vdwg.mxu0
        %v1871 = vadd.f32 %v1785, %v1824
        %v1872 = vadd.f32 %v1786, %v1826
        %v1873 = vadd.f32 %v1787, %v1865
        %v1874 = vadd.f32 %v1788, %v1867
        %v1875 = vxor.u32 %v1871, 2147483648
        %v1876 = vmul.f32 %v1875, 1.442695
        %v1877 = vpow.pop %v1876
        %v1878 = vadd.f32 %v1877, 1.0
        %v1879 = vrcp.pop %v1878
        %v1880 = vmul.f32 1.0, %v1879
        %v1881 = vxor.u32 %v1872, 2147483648
        %v1882 = vmul.f32 %v1881, 1.442695
        %v1883 = vpow.pop %v1882
        %v1884 = vadd.f32 %v1883, 1.0
        %v1885 = vrcp.pop %v1884
        %v1886 = vmul.f32 1.0, %v1885
        %v1887 = vtanh.pop %v1873
        %v1888 = vxor.u32 %v1874, 2147483648
        %v1889 = vmul.f32 %v1888, 1.442695
        %v1890 = vpow.pop %v1889
        %v1891 = vadd.f32 %v1890, 1.0
        %v1892 = vrcp.pop %v1891
        %v1893 = vmul.f32 1.0, %v1892
        %v1894 = vmul.f32 %v1886, %v1776
        %v1895 = vmul.f32 %v1880, %v1887
        %v1896 = vadd.f32 %v1894, %v1895
        %v1897 = vtanh.pop %v1896
        %v1898 = vmul.f32 %v1893, %v1897
        %v1899 = vpack.c.bf16 %v1898, %v1898
        %s1900 = scalar_lea.vmem [#allocation3], 20
        %1901 = vst [vmem:[%s1900] sm:$0xf] %v1899
        %s1902 = scalar_lea.vmem [#allocation2], 96
        %v1903 = vld [vmem:[%s1902] sm:$0xff]
        %v1904 = vld [vmem:[%s1902 + $0x8] sm:$0xff]
        %v1905 = vunpack.c.l.bf16 %v1903
        %v1906 = vunpack.c.h.bf16 %v1903
        %v1907 = vunpack.c.l.bf16 %v1904
        %v1908 = vunpack.c.h.bf16 %v1904
        %1909 = vmatprep.subr.bf16.mxu0 %v1127
        %1910 = vmatpush1.bf16.msra.mxu0 %v1126
        %1911 = vmatprep.subr.bf16.mxu0 %v1131
        %1912 = vmatpush1.bf16.msra.mxu0 %v1130
        %1913 = vmatprep.subr.bf16.mxu0 %v1135
        %1914 = vmatpush1.bf16.msra.mxu0 %v1134
        %1915 = vmatprep.subr.bf16.mxu0 %v1139
        %1916 = vmatpush1.bf16.msra.mxu0 %v1138
        %1917 = vmatprep.subr.bf16.mxu0 %v1143
        %1918 = vmatpush1.bf16.msra.mxu0 %v1142
        %1919 = vmatprep.subr.bf16.mxu0 %v1147
        %1920 = vmatpush1.bf16.msra.mxu0 %v1146
        %1921 = vmatprep.subr.bf16.mxu0 %v1151
        %1922 = vmatpush1.bf16.msra.mxu0 %v1150
        %1923 = vmatprep.subr.bf16.mxu0 %v1155
        %1924 = vmatpush1.bf16.msra.mxu0 %v1154
        %1925 = vmatprep.subr.bf16.mxu0 0
        %1926 = vmatpush1.bf16.msra.mxu0 0
        %1927 = vmatprep.subr.bf16.mxu0 0
        %1928 = vmatpush1.bf16.msra.mxu0 0
        %1929 = vmatprep.subr.bf16.mxu0 0
        %1930 = vmatpush1.bf16.msra.mxu0 0
        %1931 = vmatprep.subr.bf16.mxu0 0
        %1932 = vmatpush1.bf16.msra.mxu0 0
        %1933 = vmatprep.subr.bf16.mxu0 0
        %1934 = vmatpush1.bf16.msra.mxu0 0
        %1935 = vmatprep.subr.bf16.mxu0 0
        %1936 = vmatpush1.bf16.msra.mxu0 0
        %1937 = vmatprep.subr.bf16.mxu0 0
        %1938 = vmatpush1.bf16.msra.mxu0 0
        %1939 = vmatprep.subr.bf16.mxu0 0
        %1940 = vmatpush1.bf16.msra.mxu0 0
        %1941 = vmatprep.mubr.bf16.mxu0 0
        %1942 = vmatmul.mubr.bf16.gmra.mrb[0].mxu0 %v1899
        %v1943 = vpop.f32.mrb[0].mxu0
        %v1944 = vadd.f32 0.0, %v1943
        %v1945 = vpop.f32.mrb[0].mxu0
        %v1946 = vadd.f32 0.0, %v1945
        %v1947 = vpop.f32.mrb[0].mxu0
        %v1948 = vpop.f32.mrb[0].mxu0
        %1949 = vdwg.mxu0
        %1950 = vmatprep.subr.bf16.mxu0 %v1129
        %1951 = vmatpush1.bf16.msra.mxu0 %v1128
        %1952 = vmatprep.subr.bf16.mxu0 %v1133
        %1953 = vmatpush1.bf16.msra.mxu0 %v1132
        %1954 = vmatprep.subr.bf16.mxu0 %v1137
        %1955 = vmatpush1.bf16.msra.mxu0 %v1136
        %1956 = vmatprep.subr.bf16.mxu0 %v1141
        %1957 = vmatpush1.bf16.msra.mxu0 %v1140
        %1958 = vmatprep.subr.bf16.mxu0 %v1145
        %1959 = vmatpush1.bf16.msra.mxu0 %v1144
        %1960 = vmatprep.subr.bf16.mxu0 %v1149
        %1961 = vmatpush1.bf16.msra.mxu0 %v1148
        %1962 = vmatprep.subr.bf16.mxu0 %v1153
        %1963 = vmatpush1.bf16.msra.mxu0 %v1152
        %1964 = vmatprep.subr.bf16.mxu0 %v1157
        %1965 = vmatpush1.bf16.msra.mxu0 %v1156
        %1966 = vmatprep.subr.bf16.mxu0 0
        %1967 = vmatpush1.bf16.msra.mxu0 0
        %1968 = vmatprep.subr.bf16.mxu0 0
        %1969 = vmatpush1.bf16.msra.mxu0 0
        %1970 = vmatprep.subr.bf16.mxu0 0
        %1971 = vmatpush1.bf16.msra.mxu0 0
        %1972 = vmatprep.subr.bf16.mxu0 0
        %1973 = vmatpush1.bf16.msra.mxu0 0
        %1974 = vmatprep.subr.bf16.mxu0 0
        %1975 = vmatpush1.bf16.msra.mxu0 0
        %1976 = vmatprep.subr.bf16.mxu0 0
        %1977 = vmatpush1.bf16.msra.mxu0 0
        %1978 = vmatprep.subr.bf16.mxu0 0
        %1979 = vmatpush1.bf16.msra.mxu0 0
        %1980 = vmatprep.subr.bf16.mxu0 0
        %1981 = vmatpush1.bf16.msra.mxu0 0
        %1982 = vmatprep.mubr.bf16.mxu0 0
        %1983 = vmatmul.mubr.bf16.gmra.mrb[0].mxu0 %v1899
        %v1984 = vpop.f32.mrb[0].mxu0
        %v1985 = vadd.f32 0.0, %v1984
        %v1986 = vpop.f32.mrb[0].mxu0
        %v1987 = vadd.f32 0.0, %v1986
        %v1988 = vpop.f32.mrb[0].mxu0
        %v1989 = vpop.f32.mrb[0].mxu0
        %1990 = vdwg.mxu0
        %v1991 = vadd.f32 %v1905, %v1944
        %v1992 = vadd.f32 %v1906, %v1946
        %v1993 = vadd.f32 %v1907, %v1985
        %v1994 = vadd.f32 %v1908, %v1987
        %v1995 = vxor.u32 %v1991, 2147483648
        %v1996 = vmul.f32 %v1995, 1.442695
        %v1997 = vpow.pop %v1996
        %v1998 = vadd.f32 %v1997, 1.0
        %v1999 = vrcp.pop %v1998
        %v2000 = vmul.f32 1.0, %v1999
        %v2001 = vxor.u32 %v1992, 2147483648
        %v2002 = vmul.f32 %v2001, 1.442695
        %v2003 = vpow.pop %v2002
        %v2004 = vadd.f32 %v2003, 1.0
        %v2005 = vrcp.pop %v2004
        %v2006 = vmul.f32 1.0, %v2005
        %v2007 = vtanh.pop %v1993
        %v2008 = vxor.u32 %v1994, 2147483648
        %v2009 = vmul.f32 %v2008, 1.442695
        %v2010 = vpow.pop %v2009
        %v2011 = vadd.f32 %v2010, 1.0
        %v2012 = vrcp.pop %v2011
        %v2013 = vmul.f32 1.0, %v2012
        %v2014 = vmul.f32 %v2006, %v1896
        %v2015 = vmul.f32 %v2000, %v2007
        %v2016 = vadd.f32 %v2014, %v2015
        %v2017 = vtanh.pop %v2016
        %v2018 = vmul.f32 %v2013, %v2017
        %v2019 = vpack.c.bf16 %v2018, %v2018
        %s2020 = scalar_lea.vmem [#allocation3], 24
        %2021 = vst [vmem:[%s2020] sm:$0xf] %v2019
        %s2022 = scalar_lea.vmem [#allocation2], 112
        %v2023 = vld [vmem:[%s2022] sm:$0xff]
        %v2024 = vld [vmem:[%s2022 + $0x8] sm:$0xff]
        %v2025 = vunpack.c.l.bf16 %v2023
        %v2026 = vunpack.c.h.bf16 %v2023
        %v2027 = vunpack.c.l.bf16 %v2024
        %v2028 = vunpack.c.h.bf16 %v2024
        %2029 = vmatprep.subr.bf16.mxu0 %v1127
        %2030 = vmatpush1.bf16.msra.mxu0 %v1126
        %2031 = vmatprep.subr.bf16.mxu0 %v1131
        %2032 = vmatpush1.bf16.msra.mxu0 %v1130
        %2033 = vmatprep.subr.bf16.mxu0 %v1135
        %2034 = vmatpush1.bf16.msra.mxu0 %v1134
        %2035 = vmatprep.subr.bf16.mxu0 %v1139
        %2036 = vmatpush1.bf16.msra.mxu0 %v1138
        %2037 = vmatprep.subr.bf16.mxu0 %v1143
        %2038 = vmatpush1.bf16.msra.mxu0 %v1142
        %2039 = vmatprep.subr.bf16.mxu0 %v1147
        %2040 = vmatpush1.bf16.msra.mxu0 %v1146
        %2041 = vmatprep.subr.bf16.mxu0 %v1151
        %2042 = vmatpush1.bf16.msra.mxu0 %v1150
        %2043 = vmatprep.subr.bf16.mxu0 %v1155
        %2044 = vmatpush1.bf16.msra.mxu0 %v1154
        %2045 = vmatprep.subr.bf16.mxu0 0
        %2046 = vmatpush1.bf16.msra.mxu0 0
        %2047 = vmatprep.subr.bf16.mxu0 0
        %2048 = vmatpush1.bf16.msra.mxu0 0
        %2049 = vmatprep.subr.bf16.mxu0 0
        %2050 = vmatpush1.bf16.msra.mxu0 0
        %2051 = vmatprep.subr.bf16.mxu0 0
        %2052 = vmatpush1.bf16.msra.mxu0 0
        %2053 = vmatprep.subr.bf16.mxu0 0
        %2054 = vmatpush1.bf16.msra.mxu0 0
        %2055 = vmatprep.subr.bf16.mxu0 0
        %2056 = vmatpush1.bf16.msra.mxu0 0
        %2057 = vmatprep.subr.bf16.mxu0 0
        %2058 = vmatpush1.bf16.msra.mxu0 0
        %2059 = vmatprep.subr.bf16.mxu0 0
        %2060 = vmatpush1.bf16.msra.mxu0 0
        %2061 = vmatprep.mubr.bf16.mxu0 0
        %2062 = vmatmul.mubr.bf16.gmra.mrb[0].mxu0 %v2019
        %v2063 = vpop.f32.mrb[0].mxu0
        %v2064 = vadd.f32 0.0, %v2063
        %v2065 = vpop.f32.mrb[0].mxu0
        %v2066 = vadd.f32 0.0, %v2065
        %v2067 = vpop.f32.mrb[0].mxu0
        %v2068 = vpop.f32.mrb[0].mxu0
        %2069 = vdwg.mxu0
        %2070 = vmatprep.subr.bf16.mxu0 %v1129
        %2071 = vmatpush1.bf16.msra.mxu0 %v1128
        %2072 = vmatprep.subr.bf16.mxu0 %v1133
        %2073 = vmatpush1.bf16.msra.mxu0 %v1132
        %2074 = vmatprep.subr.bf16.mxu0 %v1137
        %2075 = vmatpush1.bf16.msra.mxu0 %v1136
        %2076 = vmatprep.subr.bf16.mxu0 %v1141
        %2077 = vmatpush1.bf16.msra.mxu0 %v1140
        %2078 = vmatprep.subr.bf16.mxu0 %v1145
        %2079 = vmatpush1.bf16.msra.mxu0 %v1144
        %2080 = vmatprep.subr.bf16.mxu0 %v1149
        %2081 = vmatpush1.bf16.msra.mxu0 %v1148
        %2082 = vmatprep.subr.bf16.mxu0 %v1153
        %2083 = vmatpush1.bf16.msra.mxu0 %v1152
        %2084 = vmatprep.subr.bf16.mxu0 %v1157
        %2085 = vmatpush1.bf16.msra.mxu0 %v1156
        %2086 = vmatprep.subr.bf16.mxu0 0
        %2087 = vmatpush1.bf16.msra.mxu0 0
        %2088 = vmatprep.subr.bf16.mxu0 0
        %2089 = vmatpush1.bf16.msra.mxu0 0
        %2090 = vmatprep.subr.bf16.mxu0 0
        %2091 = vmatpush1.bf16.msra.mxu0 0
        %2092 = vmatprep.subr.bf16.mxu0 0
        %2093 = vmatpush1.bf16.msra.mxu0 0
        %2094 = vmatprep.subr.bf16.mxu0 0
        %2095 = vmatpush1.bf16.msra.mxu0 0
        %2096 = vmatprep.subr.bf16.mxu0 0
        %2097 = vmatpush1.bf16.msra.mxu0 0
        %2098 = vmatprep.subr.bf16.mxu0 0
        %2099 = vmatpush1.bf16.msra.mxu0 0
        %2100 = vmatprep.subr.bf16.mxu0 0
        %2101 = vmatpush1.bf16.msra.mxu0 0
        %2102 = vmatprep.mubr.bf16.mxu0 0
        %2103 = vmatmul.mubr.bf16.gmra.mrb[0].mxu0 %v2019
        %v2104 = vpop.f32.mrb[0].mxu0
        %v2105 = vadd.f32 0.0, %v2104
        %v2106 = vpop.f32.mrb[0].mxu0
        %v2107 = vadd.f32 0.0, %v2106
        %v2108 = vpop.f32.mrb[0].mxu0
        %v2109 = vpop.f32.mrb[0].mxu0
        %2110 = vdwg.mxu0
        %v2111 = vadd.f32 %v2025, %v2064
        %v2112 = vadd.f32 %v2026, %v2066
        %v2113 = vadd.f32 %v2027, %v2105
        %v2114 = vadd.f32 %v2028, %v2107
        %v2115 = vxor.u32 %v2111, 2147483648
        %v2116 = vmul.f32 %v2115, 1.442695
        %v2117 = vpow.pop %v2116
        %v2118 = vadd.f32 %v2117, 1.0
        %v2119 = vrcp.pop %v2118
        %v2120 = vmul.f32 1.0, %v2119
        %v2121 = vxor.u32 %v2112, 2147483648
        %v2122 = vmul.f32 %v2121, 1.442695
        %v2123 = vpow.pop %v2122
        %v2124 = vadd.f32 %v2123, 1.0
        %v2125 = vrcp.pop %v2124
        %v2126 = vmul.f32 1.0, %v2125
        %v2127 = vtanh.pop %v2113
        %v2128 = vxor.u32 %v2114, 2147483648
        %v2129 = vmul.f32 %v2128, 1.442695
        %v2130 = vpow.pop %v2129
        %v2131 = vadd.f32 %v2130, 1.0
        %v2132 = vrcp.pop %v2131
        %v2133 = vmul.f32 1.0, %v2132
        %v2134 = vmul.f32 %v2126, %v2016
        %v2135 = vmul.f32 %v2120, %v2127
        %v2136 = vadd.f32 %v2134, %v2135
        %v2137 = vtanh.pop %v2136
        %v2138 = vmul.f32 %v2133, %v2137
        %v2139 = vpack.c.bf16 %v2138, %v2138
        %s2140 = scalar_lea.vmem [#allocation3], 28
        %2141 = vst [vmem:[%s2140] sm:$0xf] %v2139
        %v2142 = vld [vmem:[#allocation9] sm:$0xff]
        %v2143 = vld [vmem:[#allocation9 + $0x8] sm:$0xff]
        %v2144 = vld [vmem:[#allocation9 + $0x10] sm:$0xff]
        %v2145 = vld [vmem:[#allocation9 + $0x18] sm:$0xff]
        %v2146 = vld [vmem:[#allocation9 + $0x20] sm:$0xff]
        %v2147 = vld [vmem:[#allocation9 + $0x28] sm:$0xff]
        %v2148 = vld [vmem:[#allocation9 + $0x30] sm:$0xff]
        %v2149 = vld [vmem:[#allocation9 + $0x38] sm:$0xff]
        %v2150 = vld [vmem:[#allocation9 + $0x40] sm:$0xff]
        %v2151 = vld [vmem:[#allocation9 + $0x48] sm:$0xff]
        %v2152 = vld [vmem:[#allocation9 + $0x50] sm:$0xff]
        %v2153 = vld [vmem:[#allocation9 + $0x58] sm:$0xff]
        %v2154 = vld [vmem:[#allocation9 + $0x60] sm:$0xff]
        %v2155 = vld [vmem:[#allocation9 + $0x68] sm:$0xff]
        %v2156 = vld [vmem:[#allocation9 + $0x70] sm:$0xff]
        %v2157 = vld [vmem:[#allocation9 + $0x78] sm:$0xff]
        %v2158 = vld [vmem:[#allocation9 + $0x80] sm:$0xff]
        %v2159 = vld [vmem:[#allocation9 + $0x88] sm:$0xff]
        %v2160 = vld [vmem:[#allocation9 + $0x90] sm:$0xff]
        %v2161 = vld [vmem:[#allocation9 + $0x98] sm:$0xff]
        %v2162 = vld [vmem:[#allocation9 + $0xa0] sm:$0xff]
        %v2163 = vld [vmem:[#allocation9 + $0xa8] sm:$0xff]
        %v2164 = vld [vmem:[#allocation9 + $0xb0] sm:$0xff]
        %v2165 = vld [vmem:[#allocation9 + $0xb8] sm:$0xff]
        %v2166 = vld [vmem:[#allocation9 + $0xc0] sm:$0xff]
        %v2167 = vld [vmem:[#allocation9 + $0xc8] sm:$0xff]
        %v2168 = vld [vmem:[#allocation9 + $0xd0] sm:$0xff]
        %v2169 = vld [vmem:[#allocation9 + $0xd8] sm:$0xff]
        %v2170 = vld [vmem:[#allocation9 + $0xe0] sm:$0xff]
        %v2171 = vld [vmem:[#allocation9 + $0xe8] sm:$0xff]
        %v2172 = vld [vmem:[#allocation9 + $0xf0] sm:$0xff]
        %v2173 = vld [vmem:[#allocation9 + $0xf8] sm:$0xff]
        %v2174 = vld [vmem:[#allocation10] sm:$0xff]
        %v2175 = vld [vmem:[#allocation10 + $0x8] sm:$0xff]
        %v2176 = vld [vmem:[#allocation10 + $0x10] sm:$0xff]
        %v2177 = vld [vmem:[#allocation10 + $0x18] sm:$0xff]
        %v2178 = vld [vmem:[#allocation10 + $0x20] sm:$0xff]
        %v2179 = vld [vmem:[#allocation10 + $0x28] sm:$0xff]
        %v2180 = vld [vmem:[#allocation10 + $0x30] sm:$0xff]
        %v2181 = vld [vmem:[#allocation10 + $0x38] sm:$0xff]
        %v2182 = vld [vmem:[#allocation10 + $0x40] sm:$0xff]
        %v2183 = vld [vmem:[#allocation10 + $0x48] sm:$0xff]
        %v2184 = vld [vmem:[#allocation10 + $0x50] sm:$0xff]
        %v2185 = vld [vmem:[#allocation10 + $0x58] sm:$0xff]
        %v2186 = vld [vmem:[#allocation10 + $0x60] sm:$0xff]
        %v2187 = vld [vmem:[#allocation10 + $0x68] sm:$0xff]
        %v2188 = vld [vmem:[#allocation10 + $0x70] sm:$0xff]
        %v2189 = vld [vmem:[#allocation10 + $0x78] sm:$0xff]
        %v2190 = vld [vmem:[#allocation10 + $0x80] sm:$0xff]
        %v2191 = vld [vmem:[#allocation10 + $0x88] sm:$0xff]
        %v2192 = vld [vmem:[#allocation10 + $0x90] sm:$0xff]
        %v2193 = vld [vmem:[#allocation10 + $0x98] sm:$0xff]
        %v2194 = vld [vmem:[#allocation10 + $0xa0] sm:$0xff]
        %v2195 = vld [vmem:[#allocation10 + $0xa8] sm:$0xff]
        %v2196 = vld [vmem:[#allocation10 + $0xb0] sm:$0xff]
        %v2197 = vld [vmem:[#allocation10 + $0xb8] sm:$0xff]
        %v2198 = vld [vmem:[#allocation10 + $0xc0] sm:$0xff]
        %v2199 = vld [vmem:[#allocation10 + $0xc8] sm:$0xff]
        %v2200 = vld [vmem:[#allocation10 + $0xd0] sm:$0xff]
        %v2201 = vld [vmem:[#allocation10 + $0xd8] sm:$0xff]
        %v2202 = vld [vmem:[#allocation10 + $0xe0] sm:$0xff]
        %v2203 = vld [vmem:[#allocation10 + $0xe8] sm:$0xff]
        %v2204 = vld [vmem:[#allocation10 + $0xf0] sm:$0xff]
        %v2205 = vld [vmem:[#allocation10 + $0xf8] sm:$0xff]
        %v2206 = vld [vmem:[%s6] sm:$0xf]
        %v2207 = vld [vmem:[#allocation3] sm:$0xf]
        %v2208 = vld [vmem:[#allocation3 + $0x4] sm:$0xf]
        %v2209 = vld [vmem:[#allocation3 + $0x8] sm:$0xf]
        %v2210 = vld [vmem:[#allocation3 + $0xc] sm:$0xf]
        %v2211 = vld [vmem:[#allocation3 + $0x10] sm:$0xf]
        %v2212 = vld [vmem:[#allocation3 + $0x14] sm:$0xf]
        %v2213 = vld [vmem:[#allocation3 + $0x18] sm:$0xf]
        %v2214 = vld [vmem:[#allocation3 + $0x1c] sm:$0xf]
        %v2216 = vlaneseq
        %v2217 = vshrl.u32 %v2216, 7
        %v2218 = vsub.s32 0, %v2217
        %v2219 = vrot.slane %v2206, %v2218
        %v2220 = vlaneseq
        %v2221 = vshrl.u32 %v2220, 7
        %v2222 = vsub.s32 1, %v2221
        %v2223 = vrot.slane %v2206, %v2222
        %v2224 = vlaneseq
        %v2225 = vshrl.u32 %v2224, 7
        %v2226 = vsub.s32 2, %v2225
        %v2227 = vrot.slane %v2206, %v2226
        %v2228 = vlaneseq
        %v2229 = vshrl.u32 %v2228, 7
        %v2230 = vsub.s32 3, %v2229
        %v2231 = vrot.slane %v2206, %v2230
        %v2244 = vunpack.c.l.b16 %v2207
        %v2245 = vunpack.c.l.b16 %v2208
        %v2246 = vunpack.c.l.b16 %v2209
        %v2247 = vunpack.c.l.b16 %v2210
        %v2248 = vunpack.c.l.b16 %v2211
        %v2249 = vunpack.c.l.b16 %v2212
        %v2250 = vunpack.c.l.b16 %v2213
        %v2251 = vunpack.c.l.b16 %v2214
        %v2252 = vpack.c.b16 %v2245, %v2244
        %v2253 = vpack.c.b16 %v2247, %v2246
        %v2254 = vpack.c.b16 %v2249, %v2248
        %v2255 = vpack.c.b16 %v2251, %v2250
        %v2292 = vunpack.c.l.b16 %v2142
        %v2293 = vunpack.c.h.b16 %v2142
        %v2294 = vunpack.c.l.b16 %v2143
        %v2295 = vunpack.c.h.b16 %v2143
        %v2296 = vunpack.c.l.b16 %v2144
        %v2297 = vunpack.c.h.b16 %v2144
        %v2298 = vunpack.c.l.b16 %v2145
        %v2299 = vunpack.c.h.b16 %v2145
        %v2300 = vunpack.c.l.b16 %v2146
        %v2301 = vunpack.c.h.b16 %v2146
        %v2302 = vunpack.c.l.b16 %v2147
        %v2303 = vunpack.c.h.b16 %v2147
        %v2304 = vunpack.c.l.b16 %v2148
        %v2305 = vunpack.c.h.b16 %v2148
        %v2306 = vunpack.c.l.b16 %v2149
        %v2307 = vunpack.c.h.b16 %v2149
        %v2308 = vunpack.c.l.b16 %v2150
        %v2309 = vunpack.c.h.b16 %v2150
        %v2310 = vunpack.c.l.b16 %v2151
        %v2311 = vunpack.c.h.b16 %v2151
        %v2312 = vunpack.c.l.b16 %v2152
        %v2313 = vunpack.c.h.b16 %v2152
        %v2314 = vunpack.c.l.b16 %v2153
        %v2315 = vunpack.c.h.b16 %v2153
        %v2316 = vunpack.c.l.b16 %v2154
        %v2317 = vunpack.c.h.b16 %v2154
        %v2318 = vunpack.c.l.b16 %v2155
        %v2319 = vunpack.c.h.b16 %v2155
        %v2320 = vunpack.c.l.b16 %v2156
        %v2321 = vunpack.c.h.b16 %v2156
        %v2322 = vunpack.c.l.b16 %v2157
        %v2323 = vunpack.c.h.b16 %v2157
        %v2324 = vunpack.c.l.b16 %v2158
        %v2325 = vunpack.c.h.b16 %v2158
        %v2326 = vunpack.c.l.b16 %v2159
        %v2327 = vunpack.c.h.b16 %v2159
        %v2328 = vunpack.c.l.b16 %v2160
        %v2329 = vunpack.c.h.b16 %v2160
        %v2330 = vunpack.c.l.b16 %v2161
        %v2331 = vunpack.c.h.b16 %v2161
        %v2332 = vunpack.c.l.b16 %v2162
        %v2333 = vunpack.c.h.b16 %v2162
        %v2334 = vunpack.c.l.b16 %v2163
        %v2335 = vunpack.c.h.b16 %v2163
        %v2336 = vunpack.c.l.b16 %v2164
        %v2337 = vunpack.c.h.b16 %v2164
        %v2338 = vunpack.c.l.b16 %v2165
        %v2339 = vunpack.c.h.b16 %v2165
        %v2340 = vunpack.c.l.b16 %v2166
        %v2341 = vunpack.c.h.b16 %v2166
        %v2342 = vunpack.c.l.b16 %v2167
        %v2343 = vunpack.c.h.b16 %v2167
        %v2344 = vunpack.c.l.b16 %v2168
        %v2345 = vunpack.c.h.b16 %v2168
        %v2346 = vunpack.c.l.b16 %v2169
        %v2347 = vunpack.c.h.b16 %v2169
        %v2348 = vunpack.c.l.b16 %v2170
        %v2349 = vunpack.c.h.b16 %v2170
        %v2350 = vunpack.c.l.b16 %v2171
        %v2351 = vunpack.c.h.b16 %v2171
        %v2352 = vunpack.c.l.b16 %v2172
        %v2353 = vunpack.c.h.b16 %v2172
        %v2354 = vunpack.c.l.b16 %v2173
        %v2355 = vunpack.c.h.b16 %v2173
        %v2356 = vpack.c.b16 %v2296, %v2292
        %v2357 = vpack.c.b16 %v2297, %v2293
        %v2358 = vpack.c.b16 %v2298, %v2294
        %v2359 = vpack.c.b16 %v2299, %v2295
        %v2360 = vpack.c.b16 %v2304, %v2300
        %v2361 = vpack.c.b16 %v2305, %v2301
        %v2362 = vpack.c.b16 %v2306, %v2302
        %v2363 = vpack.c.b16 %v2307, %v2303
        %v2364 = vpack.c.b16 %v2312, %v2308
        %v2365 = vpack.c.b16 %v2313, %v2309
        %v2366 = vpack.c.b16 %v2314, %v2310
        %v2367 = vpack.c.b16 %v2315, %v2311
        %v2368 = vpack.c.b16 %v2320, %v2316
        %v2369 = vpack.c.b16 %v2321, %v2317
        %v2370 = vpack.c.b16 %v2322, %v2318
        %v2371 = vpack.c.b16 %v2323, %v2319
        %v2372 = vpack.c.b16 %v2328, %v2324
        %v2373 = vpack.c.b16 %v2329, %v2325
        %v2374 = vpack.c.b16 %v2330, %v2326
        %v2375 = vpack.c.b16 %v2331, %v2327
        %v2376 = vpack.c.b16 %v2336, %v2332
        %v2377 = vpack.c.b16 %v2337, %v2333
        %v2378 = vpack.c.b16 %v2338, %v2334
        %v2379 = vpack.c.b16 %v2339, %v2335
        %v2380 = vpack.c.b16 %v2344, %v2340
        %v2381 = vpack.c.b16 %v2345, %v2341
        %v2382 = vpack.c.b16 %v2346, %v2342
        %v2383 = vpack.c.b16 %v2347, %v2343
        %v2384 = vpack.c.b16 %v2352, %v2348
        %v2385 = vpack.c.b16 %v2353, %v2349
        %v2386 = vpack.c.b16 %v2354, %v2350
        %v2387 = vpack.c.b16 %v2355, %v2351
        %2420 = vmatprep.subr.bf16.mxu0 %v2357
        %2421 = vmatpush1.bf16.msra.mxu0 %v2356
        %2422 = vmatprep.subr.bf16.mxu0 %v2361
        %2423 = vmatpush1.bf16.msra.mxu0 %v2360
        %2424 = vmatprep.subr.bf16.mxu0 %v2365
        %2425 = vmatpush1.bf16.msra.mxu0 %v2364
        %2426 = vmatprep.subr.bf16.mxu0 %v2369
        %2427 = vmatpush1.bf16.msra.mxu0 %v2368
        %2428 = vmatprep.subr.bf16.mxu0 %v2373
        %2429 = vmatpush1.bf16.msra.mxu0 %v2372
        %2430 = vmatprep.subr.bf16.mxu0 %v2377
        %2431 = vmatpush1.bf16.msra.mxu0 %v2376
        %2432 = vmatprep.subr.bf16.mxu0 %v2381
        %2433 = vmatpush1.bf16.msra.mxu0 %v2380
        %2434 = vmatprep.subr.bf16.mxu0 %v2385
        %2435 = vmatpush1.bf16.msra.mxu0 %v2384
        %2436 = vmatprep.subr.bf16.mxu0 0
        %2437 = vmatpush1.bf16.msra.mxu0 0
        %2438 = vmatprep.subr.bf16.mxu0 0
        %2439 = vmatpush1.bf16.msra.mxu0 0
        %2440 = vmatprep.subr.bf16.mxu0 0
        %2441 = vmatpush1.bf16.msra.mxu0 0
        %2442 = vmatprep.subr.bf16.mxu0 0
        %2443 = vmatpush1.bf16.msra.mxu0 0
        %2444 = vmatprep.subr.bf16.mxu0 0
        %2445 = vmatpush1.bf16.msra.mxu0 0
        %2446 = vmatprep.subr.bf16.mxu0 0
        %2447 = vmatpush1.bf16.msra.mxu0 0
        %2448 = vmatprep.subr.bf16.mxu0 0
        %2449 = vmatpush1.bf16.msra.mxu0 0
        %2450 = vmatprep.subr.bf16.mxu0 0
        %2451 = vmatpush1.bf16.msra.mxu0 0
        %2452 = vmatprep.mubr.bf16.mxu0 0
        %2453 = vmatmul.mubr.bf16.gmra.mrb[0].mxu0 %v2252
        %v2454 = vpop.f32.mrb[0].mxu0
        %v2455 = vadd.f32 %v2219, %v2454
        %v2456 = vpop.f32.mrb[0].mxu0
        %v2457 = vadd.f32 %v2223, %v2456
        %v2458 = vpop.f32.mrb[0].mxu0
        %v2459 = vadd.f32 %v2219, %v2458
        %v2460 = vpop.f32.mrb[0].mxu0
        %v2461 = vadd.f32 %v2223, %v2460
        %2462 = vmatprep.mubr.bf16.mxu0 0
        %2463 = vmatmul.mubr.bf16.gmra.mrb[0].mxu0 %v2253
        %v2464 = vpop.f32.mrb[0].mxu0
        %v2465 = vadd.f32 %v2219, %v2464
        %v2466 = vpop.f32.mrb[0].mxu0
        %v2467 = vadd.f32 %v2223, %v2466
        %v2468 = vpop.f32.mrb[0].mxu0
        %v2469 = vadd.f32 %v2219, %v2468
        %v2470 = vpop.f32.mrb[0].mxu0
        %v2471 = vadd.f32 %v2223, %v2470
        %2472 = vmatprep.mubr.bf16.mxu0 0
        %2473 = vmatmul.mubr.bf16.gmra.mrb[0].mxu0 %v2254
        %v2474 = vpop.f32.mrb[0].mxu0
        %v2475 = vadd.f32 %v2219, %v2474
        %v2476 = vpop.f32.mrb[0].mxu0
        %v2477 = vadd.f32 %v2223, %v2476
        %v2478 = vpop.f32.mrb[0].mxu0
        %v2479 = vadd.f32 %v2219, %v2478
        %v2480 = vpop.f32.mrb[0].mxu0
        %v2481 = vadd.f32 %v2223, %v2480
        %2482 = vmatprep.mubr.bf16.mxu0 0
        %2483 = vmatmul.mubr.bf16.gmra.mrb[0].mxu0 %v2255
        %v2484 = vpop.f32.mrb[0].mxu0
        %v2485 = vadd.f32 %v2219, %v2484
        %v2486 = vpop.f32.mrb[0].mxu0
        %v2487 = vadd.f32 %v2223, %v2486
        %v2488 = vpop.f32.mrb[0].mxu0
        %v2489 = vadd.f32 %v2219, %v2488
        %v2490 = vpop.f32.mrb[0].mxu0
        %v2491 = vadd.f32 %v2223, %v2490
        %2492 = vdwg.mxu0
        %2493 = vmatprep.subr.bf16.mxu0 %v2359
        %2494 = vmatpush1.bf16.msra.mxu0 %v2358
        %2495 = vmatprep.subr.bf16.mxu0 %v2363
        %2496 = vmatpush1.bf16.msra.mxu0 %v2362
        %2497 = vmatprep.subr.bf16.mxu0 %v2367
        %2498 = vmatpush1.bf16.msra.mxu0 %v2366
        %2499 = vmatprep.subr.bf16.mxu0 %v2371
        %2500 = vmatpush1.bf16.msra.mxu0 %v2370
        %2501 = vmatprep.subr.bf16.mxu0 %v2375
        %2502 = vmatpush1.bf16.msra.mxu0 %v2374
        %2503 = vmatprep.subr.bf16.mxu0 %v2379
        %2504 = vmatpush1.bf16.msra.mxu0 %v2378
        %2505 = vmatprep.subr.bf16.mxu0 %v2383
        %2506 = vmatpush1.bf16.msra.mxu0 %v2382
        %2507 = vmatprep.subr.bf16.mxu0 %v2387
        %2508 = vmatpush1.bf16.msra.mxu0 %v2386
        %2509 = vmatprep.subr.bf16.mxu0 0
        %2510 = vmatpush1.bf16.msra.mxu0 0
        %2511 = vmatprep.subr.bf16.mxu0 0
        %2512 = vmatpush1.bf16.msra.mxu0 0
        %2513 = vmatprep.subr.bf16.mxu0 0
        %2514 = vmatpush1.bf16.msra.mxu0 0
        %2515 = vmatprep.subr.bf16.mxu0 0
        %2516 = vmatpush1.bf16.msra.mxu0 0
        %2517 = vmatprep.subr.bf16.mxu0 0
        %2518 = vmatpush1.bf16.msra.mxu0 0
        %2519 = vmatprep.subr.bf16.mxu0 0
        %2520 = vmatpush1.bf16.msra.mxu0 0
        %2521 = vmatprep.subr.bf16.mxu0 0
        %2522 = vmatpush1.bf16.msra.mxu0 0
        %2523 = vmatprep.subr.bf16.mxu0 0
        %2524 = vmatpush1.bf16.msra.mxu0 0
        %2525 = vmatprep.mubr.bf16.mxu0 0
        %2526 = vmatmul.mubr.bf16.gmra.mrb[0].mxu0 %v2252
        %v2527 = vpop.f32.mrb[0].mxu0
        %v2528 = vadd.f32 %v2227, %v2527
        %v2529 = vpop.f32.mrb[0].mxu0
        %v2530 = vadd.f32 %v2231, %v2529
        %v2531 = vpop.f32.mrb[0].mxu0
        %v2532 = vadd.f32 %v2227, %v2531
        %v2533 = vpop.f32.mrb[0].mxu0
        %v2534 = vadd.f32 %v2231, %v2533
        %2535 = vmatprep.mubr.bf16.mxu0 0
        %2536 = vmatmul.mubr.bf16.gmra.mrb[0].mxu0 %v2253
        %v2537 = vpop.f32.mrb[0].mxu0
        %v2538 = vadd.f32 %v2227, %v2537
        %v2539 = vpop.f32.mrb[0].mxu0
        %v2540 = vadd.f32 %v2231, %v2539
        %v2541 = vpop.f32.mrb[0].mxu0
        %v2542 = vadd.f32 %v2227, %v2541
        %v2543 = vpop.f32.mrb[0].mxu0
        %v2544 = vadd.f32 %v2231, %v2543
        %2545 = vmatprep.mubr.bf16.mxu0 0
        %2546 = vmatmul.mubr.bf16.gmra.mrb[0].mxu0 %v2254
        %v2547 = vpop.f32.mrb[0].mxu0
        %v2548 = vadd.f32 %v2227, %v2547
        %v2549 = vpop.f32.mrb[0].mxu0
        %v2550 = vadd.f32 %v2231, %v2549
        %v2551 = vpop.f32.mrb[0].mxu0
        %v2552 = vadd.f32 %v2227, %v2551
        %v2553 = vpop.f32.mrb[0].mxu0
        %v2554 = vadd.f32 %v2231, %v2553
        %2555 = vmatprep.mubr.bf16.mxu0 0
        %2556 = vmatmul.mubr.bf16.gmra.mrb[0].mxu0 %v2255
        %v2557 = vpop.f32.mrb[0].mxu0
        %v2558 = vadd.f32 %v2227, %v2557
        %v2559 = vpop.f32.mrb[0].mxu0
        %v2560 = vadd.f32 %v2231, %v2559
        %v2561 = vpop.f32.mrb[0].mxu0
        %v2562 = vadd.f32 %v2227, %v2561
        %v2563 = vpop.f32.mrb[0].mxu0
        %v2564 = vadd.f32 %v2231, %v2563
        %2565 = vdwg.mxu0
        %v2566 = vpack.c.bf16 %v2455, %v2455
        %v2567 = vpack.c.bf16 %v2457, %v2457
        %v2568 = vpack.c.bf16 %v2528, %v2528
        %v2569 = vpack.c.bf16 %v2530, %v2530
        %v2570 = vpack.c.bf16 %v2459, %v2459
        %v2571 = vpack.c.bf16 %v2461, %v2461
        %v2572 = vpack.c.bf16 %v2532, %v2532
        %v2573 = vpack.c.bf16 %v2534, %v2534
        %v2574 = vpack.c.bf16 %v2465, %v2465
        %v2575 = vpack.c.bf16 %v2467, %v2467
        %v2576 = vpack.c.bf16 %v2538, %v2538
        %v2577 = vpack.c.bf16 %v2540, %v2540
        %v2578 = vpack.c.bf16 %v2469, %v2469
        %v2579 = vpack.c.bf16 %v2471, %v2471
        %v2580 = vpack.c.bf16 %v2542, %v2542
        %v2581 = vpack.c.bf16 %v2544, %v2544
        %v2582 = vpack.c.bf16 %v2475, %v2475
        %v2583 = vpack.c.bf16 %v2477, %v2477
        %v2584 = vpack.c.bf16 %v2548, %v2548
        %v2585 = vpack.c.bf16 %v2550, %v2550
        %v2586 = vpack.c.bf16 %v2479, %v2479
        %v2587 = vpack.c.bf16 %v2481, %v2481
        %v2588 = vpack.c.bf16 %v2552, %v2552
        %v2589 = vpack.c.bf16 %v2554, %v2554
        %v2590 = vpack.c.bf16 %v2485, %v2485
        %v2591 = vpack.c.bf16 %v2487, %v2487
        %v2592 = vpack.c.bf16 %v2558, %v2558
        %v2593 = vpack.c.bf16 %v2560, %v2560
        %v2594 = vpack.c.bf16 %v2489, %v2489
        %v2595 = vpack.c.bf16 %v2491, %v2491
        %v2596 = vpack.c.bf16 %v2562, %v2562
        %v2597 = vpack.c.bf16 %v2564, %v2564
        %v2630 = vunpack.c.l.b16 %v2566
        %v2631 = vunpack.c.l.b16 %v2567
        %v2632 = vunpack.c.l.b16 %v2568
        %v2633 = vunpack.c.l.b16 %v2569
        %v2634 = vunpack.c.l.b16 %v2570
        %v2635 = vunpack.c.l.b16 %v2571
        %v2636 = vunpack.c.l.b16 %v2572
        %v2637 = vunpack.c.l.b16 %v2573
        %v2638 = vunpack.c.l.b16 %v2574
        %v2639 = vunpack.c.l.b16 %v2575
        %v2640 = vunpack.c.l.b16 %v2576
        %v2641 = vunpack.c.l.b16 %v2577
        %v2642 = vunpack.c.l.b16 %v2578
        %v2643 = vunpack.c.l.b16 %v2579
        %v2644 = vunpack.c.l.b16 %v2580
        %v2645 = vunpack.c.l.b16 %v2581
        %v2646 = vunpack.c.l.b16 %v2582
        %v2647 = vunpack.c.l.b16 %v2583
        %v2648 = vunpack.c.l.b16 %v2584
        %v2649 = vunpack.c.l.b16 %v2585
        %v2650 = vunpack.c.l.b16 %v2586
        %v2651 = vunpack.c.l.b16 %v2587
        %v2652 = vunpack.c.l.b16 %v2588
        %v2653 = vunpack.c.l.b16 %v2589
        %v2654 = vunpack.c.l.b16 %v2590
        %v2655 = vunpack.c.l.b16 %v2591
        %v2656 = vunpack.c.l.b16 %v2592
        %v2657 = vunpack.c.l.b16 %v2593
        %v2658 = vunpack.c.l.b16 %v2594
        %v2659 = vunpack.c.l.b16 %v2595
        %v2660 = vunpack.c.l.b16 %v2596
        %v2661 = vunpack.c.l.b16 %v2597
        %v2662 = vpack.c.b16 %v2631, %v2630
        %v2663 = vpack.c.b16 %v2633, %v2632
        %v2664 = vpack.c.b16 %v2635, %v2634
        %v2665 = vpack.c.b16 %v2637, %v2636
        %v2666 = vpack.c.b16 %v2639, %v2638
        %v2667 = vpack.c.b16 %v2641, %v2640
        %v2668 = vpack.c.b16 %v2643, %v2642
        %v2669 = vpack.c.b16 %v2645, %v2644
        %v2670 = vpack.c.b16 %v2647, %v2646
        %v2671 = vpack.c.b16 %v2649, %v2648
        %v2672 = vpack.c.b16 %v2651, %v2650
        %v2673 = vpack.c.b16 %v2653, %v2652
        %v2674 = vpack.c.b16 %v2655, %v2654
        %v2675 = vpack.c.b16 %v2657, %v2656
        %v2676 = vpack.c.b16 %v2659, %v2658
        %v2677 = vpack.c.b16 %v2661, %v2660
        %2694 = vst [vmem:[#allocation2] sm:$0xff] %v2662
        %2695 = vst [vmem:[#allocation2 + $0x8] sm:$0xff] %v2663
        %2696 = vst [vmem:[#allocation2 + $0x10] sm:$0xff] %v2664
        %2697 = vst [vmem:[#allocation2 + $0x18] sm:$0xff] %v2665
        %2698 = vst [vmem:[#allocation2 + $0x20] sm:$0xff] %v2666
        %2699 = vst [vmem:[#allocation2 + $0x28] sm:$0xff] %v2667
        %2700 = vst [vmem:[#allocation2 + $0x30] sm:$0xff] %v2668
        %2701 = vst [vmem:[#allocation2 + $0x38] sm:$0xff] %v2669
        %2702 = vst [vmem:[#allocation2 + $0x40] sm:$0xff] %v2670
        %2703 = vst [vmem:[#allocation2 + $0x48] sm:$0xff] %v2671
        %2704 = vst [vmem:[#allocation2 + $0x50] sm:$0xff] %v2672
        %2705 = vst [vmem:[#allocation2 + $0x58] sm:$0xff] %v2673
        %2706 = vst [vmem:[#allocation2 + $0x60] sm:$0xff] %v2674
        %2707 = vst [vmem:[#allocation2 + $0x68] sm:$0xff] %v2675
        %2708 = vst [vmem:[#allocation2 + $0x70] sm:$0xff] %v2676
        %2709 = vst [vmem:[#allocation2 + $0x78] sm:$0xff] %v2677
        %v2710 = vld [vmem:[#allocation2] sm:$0xff]
        %v2711 = vld [vmem:[#allocation2 + $0x8] sm:$0xff]
        %v2712 = vunpack.c.l.bf16 %v2710
        %v2713 = vunpack.c.h.bf16 %v2710
        %v2714 = vunpack.c.l.bf16 %v2711
        %v2715 = vunpack.c.h.bf16 %v2711
        %v2748 = vunpack.c.l.b16 %v2174
        %v2749 = vunpack.c.h.b16 %v2174
        %v2750 = vunpack.c.l.b16 %v2175
        %v2751 = vunpack.c.h.b16 %v2175
        %v2752 = vunpack.c.l.b16 %v2176
        %v2753 = vunpack.c.h.b16 %v2176
        %v2754 = vunpack.c.l.b16 %v2177
        %v2755 = vunpack.c.h.b16 %v2177
        %v2756 = vunpack.c.l.b16 %v2178
        %v2757 = vunpack.c.h.b16 %v2178
        %v2758 = vunpack.c.l.b16 %v2179
        %v2759 = vunpack.c.h.b16 %v2179
        %v2760 = vunpack.c.l.b16 %v2180
        %v2761 = vunpack.c.h.b16 %v2180
        %v2762 = vunpack.c.l.b16 %v2181
        %v2763 = vunpack.c.h.b16 %v2181
        %v2764 = vunpack.c.l.b16 %v2182
        %v2765 = vunpack.c.h.b16 %v2182
        %v2766 = vunpack.c.l.b16 %v2183
        %v2767 = vunpack.c.h.b16 %v2183
        %v2768 = vunpack.c.l.b16 %v2184
        %v2769 = vunpack.c.h.b16 %v2184
        %v2770 = vunpack.c.l.b16 %v2185
        %v2771 = vunpack.c.h.b16 %v2185
        %v2772 = vunpack.c.l.b16 %v2186
        %v2773 = vunpack.c.h.b16 %v2186
        %v2774 = vunpack.c.l.b16 %v2187
        %v2775 = vunpack.c.h.b16 %v2187
        %v2776 = vunpack.c.l.b16 %v2188
        %v2777 = vunpack.c.h.b16 %v2188
        %v2778 = vunpack.c.l.b16 %v2189
        %v2779 = vunpack.c.h.b16 %v2189
        %v2780 = vunpack.c.l.b16 %v2190
        %v2781 = vunpack.c.h.b16 %v2190
        %v2782 = vunpack.c.l.b16 %v2191
        %v2783 = vunpack.c.h.b16 %v2191
        %v2784 = vunpack.c.l.b16 %v2192
        %v2785 = vunpack.c.h.b16 %v2192
        %v2786 = vunpack.c.l.b16 %v2193
        %v2787 = vunpack.c.h.b16 %v2193
        %v2788 = vunpack.c.l.b16 %v2194
        %v2789 = vunpack.c.h.b16 %v2194
        %v2790 = vunpack.c.l.b16 %v2195
        %v2791 = vunpack.c.h.b16 %v2195
        %v2792 = vunpack.c.l.b16 %v2196
        %v2793 = vunpack.c.h.b16 %v2196
        %v2794 = vunpack.c.l.b16 %v2197
        %v2795 = vunpack.c.h.b16 %v2197
        %v2796 = vunpack.c.l.b16 %v2198
        %v2797 = vunpack.c.h.b16 %v2198
        %v2798 = vunpack.c.l.b16 %v2199
        %v2799 = vunpack.c.h.b16 %v2199
        %v2800 = vunpack.c.l.b16 %v2200
        %v2801 = vunpack.c.h.b16 %v2200
        %v2802 = vunpack.c.l.b16 %v2201
        %v2803 = vunpack.c.h.b16 %v2201
        %v2804 = vunpack.c.l.b16 %v2202
        %v2805 = vunpack.c.h.b16 %v2202
        %v2806 = vunpack.c.l.b16 %v2203
        %v2807 = vunpack.c.h.b16 %v2203
        %v2808 = vunpack.c.l.b16 %v2204
        %v2809 = vunpack.c.h.b16 %v2204
        %v2810 = vunpack.c.l.b16 %v2205
        %v2811 = vunpack.c.h.b16 %v2205
        %v2812 = vpack.c.b16 %v2752, %v2748
        %v2813 = vpack.c.b16 %v2753, %v2749
        %v2814 = vpack.c.b16 %v2754, %v2750
        %v2815 = vpack.c.b16 %v2755, %v2751
        %v2816 = vpack.c.b16 %v2760, %v2756
        %v2817 = vpack.c.b16 %v2761, %v2757
        %v2818 = vpack.c.b16 %v2762, %v2758
        %v2819 = vpack.c.b16 %v2763, %v2759
        %v2820 = vpack.c.b16 %v2768, %v2764
        %v2821 = vpack.c.b16 %v2769, %v2765
        %v2822 = vpack.c.b16 %v2770, %v2766
        %v2823 = vpack.c.b16 %v2771, %v2767
        %v2824 = vpack.c.b16 %v2776, %v2772
        %v2825 = vpack.c.b16 %v2777, %v2773
        %v2826 = vpack.c.b16 %v2778, %v2774
        %v2827 = vpack.c.b16 %v2779, %v2775
        %v2828 = vpack.c.b16 %v2784, %v2780
        %v2829 = vpack.c.b16 %v2785, %v2781
        %v2830 = vpack.c.b16 %v2786, %v2782
        %v2831 = vpack.c.b16 %v2787, %v2783
        %v2832 = vpack.c.b16 %v2792, %v2788
        %v2833 = vpack.c.b16 %v2793, %v2789
        %v2834 = vpack.c.b16 %v2794, %v2790
        %v2835 = vpack.c.b16 %v2795, %v2791
        %v2836 = vpack.c.b16 %v2800, %v2796
        %v2837 = vpack.c.b16 %v2801, %v2797
        %v2838 = vpack.c.b16 %v2802, %v2798
        %v2839 = vpack.c.b16 %v2803, %v2799
        %v2840 = vpack.c.b16 %v2808, %v2804
        %v2841 = vpack.c.b16 %v2809, %v2805
        %v2842 = vpack.c.b16 %v2810, %v2806
        %v2843 = vpack.c.b16 %v2811, %v2807
        %2876 = vmatprep.subr.bf16.mxu0 %v2813
        %2877 = vmatpush1.bf16.msra.mxu0 %v2812
        %2878 = vmatprep.subr.bf16.mxu0 %v2817
        %2879 = vmatpush1.bf16.msra.mxu0 %v2816
        %2880 = vmatprep.subr.bf16.mxu0 %v2821
        %2881 = vmatpush1.bf16.msra.mxu0 %v2820
        %2882 = vmatprep.subr.bf16.mxu0 %v2825
        %2883 = vmatpush1.bf16.msra.mxu0 %v2824
        %2884 = vmatprep.subr.bf16.mxu0 %v2829
        %2885 = vmatpush1.bf16.msra.mxu0 %v2828
        %2886 = vmatprep.subr.bf16.mxu0 %v2833
        %2887 = vmatpush1.bf16.msra.mxu0 %v2832
        %2888 = vmatprep.subr.bf16.mxu0 %v2837
        %2889 = vmatpush1.bf16.msra.mxu0 %v2836
        %2890 = vmatprep.subr.bf16.mxu0 %v2841
        %2891 = vmatpush1.bf16.msra.mxu0 %v2840
        %2892 = vmatprep.subr.bf16.mxu0 0
        %2893 = vmatpush1.bf16.msra.mxu0 0
        %2894 = vmatprep.subr.bf16.mxu0 0
        %2895 = vmatpush1.bf16.msra.mxu0 0
        %2896 = vmatprep.subr.bf16.mxu0 0
        %2897 = vmatpush1.bf16.msra.mxu0 0
        %2898 = vmatprep.subr.bf16.mxu0 0
        %2899 = vmatpush1.bf16.msra.mxu0 0
        %2900 = vmatprep.subr.bf16.mxu0 0
        %2901 = vmatpush1.bf16.msra.mxu0 0
        %2902 = vmatprep.subr.bf16.mxu0 0
        %2903 = vmatpush1.bf16.msra.mxu0 0
        %2904 = vmatprep.subr.bf16.mxu0 0
        %2905 = vmatpush1.bf16.msra.mxu0 0
        %2906 = vmatprep.subr.bf16.mxu0 0
        %2907 = vmatpush1.bf16.msra.mxu0 0
        %2908 = vmatprep.mubr.bf16.mxu0 0
        %2909 = vmatmul.mubr.bf16.gmra.mrb[0].mxu0 0
        %v2910 = vpop.f32.mrb[0].mxu0
        %v2911 = vadd.f32 0.0, %v2910
        %v2912 = vpop.f32.mrb[0].mxu0
        %v2913 = vadd.f32 0.0, %v2912
        %v2914 = vpop.f32.mrb[0].mxu0
        %v2915 = vpop.f32.mrb[0].mxu0
        %2916 = vdwg.mxu0
        %2917 = vmatprep.subr.bf16.mxu0 %v2815
        %2918 = vmatpush1.bf16.msra.mxu0 %v2814
        %2919 = vmatprep.subr.bf16.mxu0 %v2819
        %2920 = vmatpush1.bf16.msra.mxu0 %v2818
        %2921 = vmatprep.subr.bf16.mxu0 %v2823
        %2922 = vmatpush1.bf16.msra.mxu0 %v2822
        %2923 = vmatprep.subr.bf16.mxu0 %v2827
        %2924 = vmatpush1.bf16.msra.mxu0 %v2826
        %2925 = vmatprep.subr.bf16.mxu0 %v2831
        %2926 = vmatpush1.bf16.msra.mxu0 %v2830
        %2927 = vmatprep.subr.bf16.mxu0 %v2835
        %2928 = vmatpush1.bf16.msra.mxu0 %v2834
        %2929 = vmatprep.subr.bf16.mxu0 %v2839
        %2930 = vmatpush1.bf16.msra.mxu0 %v2838
        %2931 = vmatprep.subr.bf16.mxu0 %v2843
        %2932 = vmatpush1.bf16.msra.mxu0 %v2842
        %2933 = vmatprep.subr.bf16.mxu0 0
        %2934 = vmatpush1.bf16.msra.mxu0 0
        %2935 = vmatprep.subr.bf16.mxu0 0
        %2936 = vmatpush1.bf16.msra.mxu0 0
        %2937 = vmatprep.subr.bf16.mxu0 0
        %2938 = vmatpush1.bf16.msra.mxu0 0
        %2939 = vmatprep.subr.bf16.mxu0 0
        %2940 = vmatpush1.bf16.msra.mxu0 0
        %2941 = vmatprep.subr.bf16.mxu0 0
        %2942 = vmatpush1.bf16.msra.mxu0 0
        %2943 = vmatprep.subr.bf16.mxu0 0
        %2944 = vmatpush1.bf16.msra.mxu0 0
        %2945 = vmatprep.subr.bf16.mxu0 0
        %2946 = vmatpush1.bf16.msra.mxu0 0
        %2947 = vmatprep.subr.bf16.mxu0 0
        %2948 = vmatpush1.bf16.msra.mxu0 0
        %2949 = vmatprep.mubr.bf16.mxu0 0
        %2950 = vmatmul.mubr.bf16.gmra.mrb[0].mxu0 0
        %v2951 = vpop.f32.mrb[0].mxu0
        %v2952 = vadd.f32 0.0, %v2951
        %v2953 = vpop.f32.mrb[0].mxu0
        %v2954 = vadd.f32 0.0, %v2953
        %v2955 = vpop.f32.mrb[0].mxu0
        %v2956 = vpop.f32.mrb[0].mxu0
        %2957 = vdwg.mxu0
        %v2958 = vadd.f32 %v2712, %v2911
        %v2959 = vadd.f32 %v2713, %v2913
        %v2960 = vadd.f32 %v2714, %v2952
        %v2961 = vadd.f32 %v2715, %v2954
        %v2962 = vxor.u32 %v2958, 2147483648
        %v2963 = vmul.f32 %v2962, 1.442695
        %v2964 = vpow.pop %v2963
        %v2965 = vadd.f32 %v2964, 1.0
        %v2966 = vrcp.pop %v2965
        %v2967 = vmul.f32 1.0, %v2966
        %v2968 = vxor.u32 %v2959, 2147483648
        %v2969 = vmul.f32 %v2968, 1.442695
        %v2970 = vpow.pop %v2969
        %v2971 = vadd.f32 %v2970, 1.0
        %v2972 = vrcp.pop %v2971
        %v2973 = vmul.f32 1.0, %v2972
        %v2974 = vtanh.pop %v2960
        %v2975 = vxor.u32 %v2961, 2147483648
        %v2976 = vmul.f32 %v2975, 1.442695
        %v2977 = vpow.pop %v2976
        %v2978 = vadd.f32 %v2977, 1.0
        %v2979 = vrcp.pop %v2978
        %v2980 = vmul.f32 1.0, %v2979
        %v2981 = vmul.f32 %v2973, 0.0
        %v2982 = vmul.f32 %v2967, %v2974
        %v2983 = vadd.f32 %v2981, %v2982
        %v2984 = vtanh.pop %v2983
        %v2985 = vmul.f32 %v2980, %v2984
        %v2986 = vpack.c.bf16 %v2985, %v2985
        %2987 = vst [vmem:[#allocation3] sm:$0xf] %v2986
        %v2988 = vld [vmem:[%s1302] sm:$0xff]
        %v2989 = vld [vmem:[%s1302 + $0x8] sm:$0xff]
        %v2990 = vunpack.c.l.bf16 %v2988
        %v2991 = vunpack.c.h.bf16 %v2988
        %v2992 = vunpack.c.l.bf16 %v2989
        %v2993 = vunpack.c.h.bf16 %v2989
        %2994 = vmatprep.subr.bf16.mxu0 %v2813
        %2995 = vmatpush1.bf16.msra.mxu0 %v2812
        %2996 = vmatprep.subr.bf16.mxu0 %v2817
        %2997 = vmatpush1.bf16.msra.mxu0 %v2816
        %2998 = vmatprep.subr.bf16.mxu0 %v2821
        %2999 = vmatpush1.bf16.msra.mxu0 %v2820
        %3000 = vmatprep.subr.bf16.mxu0 %v2825
        %3001 = vmatpush1.bf16.msra.mxu0 %v2824
        %3002 = vmatprep.subr.bf16.mxu0 %v2829
        %3003 = vmatpush1.bf16.msra.mxu0 %v2828
        %3004 = vmatprep.subr.bf16.mxu0 %v2833
        %3005 = vmatpush1.bf16.msra.mxu0 %v2832
        %3006 = vmatprep.subr.bf16.mxu0 %v2837
        %3007 = vmatpush1.bf16.msra.mxu0 %v2836
        %3008 = vmatprep.subr.bf16.mxu0 %v2841
        %3009 = vmatpush1.bf16.msra.mxu0 %v2840
        %3010 = vmatprep.subr.bf16.mxu0 0
        %3011 = vmatpush1.bf16.msra.mxu0 0
        %3012 = vmatprep.subr.bf16.mxu0 0
        %3013 = vmatpush1.bf16.msra.mxu0 0
        %3014 = vmatprep.subr.bf16.mxu0 0
        %3015 = vmatpush1.bf16.msra.mxu0 0
        %3016 = vmatprep.subr.bf16.mxu0 0
        %3017 = vmatpush1.bf16.msra.mxu0 0
        %3018 = vmatprep.subr.bf16.mxu0 0
        %3019 = vmatpush1.bf16.msra.mxu0 0
        %3020 = vmatprep.subr.bf16.mxu0 0
        %3021 = vmatpush1.bf16.msra.mxu0 0
        %3022 = vmatprep.subr.bf16.mxu0 0
        %3023 = vmatpush1.bf16.msra.mxu0 0
        %3024 = vmatprep.subr.bf16.mxu0 0
        %3025 = vmatpush1.bf16.msra.mxu0 0
        %3026 = vmatprep.mubr.bf16.mxu0 0
        %3027 = vmatmul.mubr.bf16.gmra.mrb[0].mxu0 %v2986
        %v3028 = vpop.f32.mrb[0].mxu0
        %v3029 = vadd.f32 0.0, %v3028
        %v3030 = vpop.f32.mrb[0].mxu0
        %v3031 = vadd.f32 0.0, %v3030
        %v3032 = vpop.f32.mrb[0].mxu0
        %v3033 = vpop.f32.mrb[0].mxu0
        %3034 = vdwg.mxu0
        %3035 = vmatprep.subr.bf16.mxu0 %v2815
        %3036 = vmatpush1.bf16.msra.mxu0 %v2814
        %3037 = vmatprep.subr.bf16.mxu0 %v2819
        %3038 = vmatpush1.bf16.msra.mxu0 %v2818
        %3039 = vmatprep.subr.bf16.mxu0 %v2823
        %3040 = vmatpush1.bf16.msra.mxu0 %v2822
        %3041 = vmatprep.subr.bf16.mxu0 %v2827
        %3042 = vmatpush1.bf16.msra.mxu0 %v2826
        %3043 = vmatprep.subr.bf16.mxu0 %v2831
        %3044 = vmatpush1.bf16.msra.mxu0 %v2830
        %3045 = vmatprep.subr.bf16.mxu0 %v2835
        %3046 = vmatpush1.bf16.msra.mxu0 %v2834
        %3047 = vmatprep.subr.bf16.mxu0 %v2839
        %3048 = vmatpush1.bf16.msra.mxu0 %v2838
        %3049 = vmatprep.subr.bf16.mxu0 %v2843
        %3050 = vmatpush1.bf16.msra.mxu0 %v2842
        %3051 = vmatprep.subr.bf16.mxu0 0
        %3052 = vmatpush1.bf16.msra.mxu0 0
        %3053 = vmatprep.subr.bf16.mxu0 0
        %3054 = vmatpush1.bf16.msra.mxu0 0
        %3055 = vmatprep.subr.bf16.mxu0 0
        %3056 = vmatpush1.bf16.msra.mxu0 0
        %3057 = vmatprep.subr.bf16.mxu0 0
        %3058 = vmatpush1.bf16.msra.mxu0 0
        %3059 = vmatprep.subr.bf16.mxu0 0
        %3060 = vmatpush1.bf16.msra.mxu0 0
        %3061 = vmatprep.subr.bf16.mxu0 0
        %3062 = vmatpush1.bf16.msra.mxu0 0
        %3063 = vmatprep.subr.bf16.mxu0 0
        %3064 = vmatpush1.bf16.msra.mxu0 0
        %3065 = vmatprep.subr.bf16.mxu0 0
        %3066 = vmatpush1.bf16.msra.mxu0 0
        %3067 = vmatprep.mubr.bf16.mxu0 0
        %3068 = vmatmul.mubr.bf16.gmra.mrb[0].mxu0 %v2986
        %v3069 = vpop.f32.mrb[0].mxu0
        %v3070 = vadd.f32 0.0, %v3069
        %v3071 = vpop.f32.mrb[0].mxu0
        %v3072 = vadd.f32 0.0, %v3071
        %v3073 = vpop.f32.mrb[0].mxu0
        %v3074 = vpop.f32.mrb[0].mxu0
        %3075 = vdwg.mxu0
        %v3076 = vadd.f32 %v2990, %v3029
        %v3077 = vadd.f32 %v2991, %v3031
        %v3078 = vadd.f32 %v2992, %v3070
        %v3079 = vadd.f32 %v2993, %v3072
        %v3080 = vxor.u32 %v3076, 2147483648
        %v3081 = vmul.f32 %v3080, 1.442695
        %v3082 = vpow.pop %v3081
        %v3083 = vadd.f32 %v3082, 1.0
        %v3084 = vrcp.pop %v3083
        %v3085 = vmul.f32 1.0, %v3084
        %v3086 = vxor.u32 %v3077, 2147483648
        %v3087 = vmul.f32 %v3086, 1.442695
        %v3088 = vpow.pop %v3087
        %v3089 = vadd.f32 %v3088, 1.0
        %v3090 = vrcp.pop %v3089
        %v3091 = vmul.f32 1.0, %v3090
        %v3092 = vtanh.pop %v3078
        %v3093 = vxor.u32 %v3079, 2147483648
        %v3094 = vmul.f32 %v3093, 1.442695
        %v3095 = vpow.pop %v3094
        %v3096 = vadd.f32 %v3095, 1.0
        %v3097 = vrcp.pop %v3096
        %v3098 = vmul.f32 1.0, %v3097
        %v3099 = vmul.f32 %v3091, %v2983
        %v3100 = vmul.f32 %v3085, %v3092
        %v3101 = vadd.f32 %v3099, %v3100
        %v3102 = vtanh.pop %v3101
        %v3103 = vmul.f32 %v3098, %v3102
        %v3104 = vpack.c.bf16 %v3103, %v3103
        %3105 = vst [vmem:[%s1420] sm:$0xf] %v3104
        %v3106 = vld [vmem:[%s1422] sm:$0xff]
        %v3107 = vld [vmem:[%s1422 + $0x8] sm:$0xff]
        %v3108 = vunpack.c.l.bf16 %v3106
        %v3109 = vunpack.c.h.bf16 %v3106
        %v3110 = vunpack.c.l.bf16 %v3107
        %v3111 = vunpack.c.h.bf16 %v3107
        %3112 = vmatprep.subr.bf16.mxu0 %v2813
        %3113 = vmatpush1.bf16.msra.mxu0 %v2812
        %3114 = vmatprep.subr.bf16.mxu0 %v2817
        %3115 = vmatpush1.bf16.msra.mxu0 %v2816
        %3116 = vmatprep.subr.bf16.mxu0 %v2821
        %3117 = vmatpush1.bf16.msra.mxu0 %v2820
        %3118 = vmatprep.subr.bf16.mxu0 %v2825
        %3119 = vmatpush1.bf16.msra.mxu0 %v2824
        %3120 = vmatprep.subr.bf16.mxu0 %v2829
        %3121 = vmatpush1.bf16.msra.mxu0 %v2828
        %3122 = vmatprep.subr.bf16.mxu0 %v2833
        %3123 = vmatpush1.bf16.msra.mxu0 %v2832
        %3124 = vmatprep.subr.bf16.mxu0 %v2837
        %3125 = vmatpush1.bf16.msra.mxu0 %v2836
        %3126 = vmatprep.subr.bf16.mxu0 %v2841
        %3127 = vmatpush1.bf16.msra.mxu0 %v2840
        %3128 = vmatprep.subr.bf16.mxu0 0
        %3129 = vmatpush1.bf16.msra.mxu0 0
        %3130 = vmatprep.subr.bf16.mxu0 0
        %3131 = vmatpush1.bf16.msra.mxu0 0
        %3132 = vmatprep.subr.bf16.mxu0 0
        %3133 = vmatpush1.bf16.msra.mxu0 0
        %3134 = vmatprep.subr.bf16.mxu0 0
        %3135 = vmatpush1.bf16.msra.mxu0 0
        %3136 = vmatprep.subr.bf16.mxu0 0
        %3137 = vmatpush1.bf16.msra.mxu0 0
        %3138 = vmatprep.subr.bf16.mxu0 0
        %3139 = vmatpush1.bf16.msra.mxu0 0
        %3140 = vmatprep.subr.bf16.mxu0 0
        %3141 = vmatpush1.bf16.msra.mxu0 0
        %3142 = vmatprep.subr.bf16.mxu0 0
        %3143 = vmatpush1.bf16.msra.mxu0 0
        %3144 = vmatprep.mubr.bf16.mxu0 0
        %3145 = vmatmul.mubr.bf16.gmra.mrb[0].mxu0 %v3104
        %v3146 = vpop.f32.mrb[0].mxu0
        %v3147 = vadd.f32 0.0, %v3146
        %v3148 = vpop.f32.mrb[0].mxu0
        %v3149 = vadd.f32 0.0, %v3148
        %v3150 = vpop.f32.mrb[0].mxu0
        %v3151 = vpop.f32.mrb[0].mxu0
        %3152 = vdwg.mxu0
        %3153 = vmatprep.subr.bf16.mxu0 %v2815
        %3154 = vmatpush1.bf16.msra.mxu0 %v2814
        %3155 = vmatprep.subr.bf16.mxu0 %v2819
        %3156 = vmatpush1.bf16.msra.mxu0 %v2818
        %3157 = vmatprep.subr.bf16.mxu0 %v2823
        %3158 = vmatpush1.bf16.msra.mxu0 %v2822
        %3159 = vmatprep.subr.bf16.mxu0 %v2827
        %3160 = vmatpush1.bf16.msra.mxu0 %v2826
        %3161 = vmatprep.subr.bf16.mxu0 %v2831
        %3162 = vmatpush1.bf16.msra.mxu0 %v2830
        %3163 = vmatprep.subr.bf16.mxu0 %v2835
        %3164 = vmatpush1.bf16.msra.mxu0 %v2834
        %3165 = vmatprep.subr.bf16.mxu0 %v2839
        %3166 = vmatpush1.bf16.msra.mxu0 %v2838
        %3167 = vmatprep.subr.bf16.mxu0 %v2843
        %3168 = vmatpush1.bf16.msra.mxu0 %v2842
        %3169 = vmatprep.subr.bf16.mxu0 0
        %3170 = vmatpush1.bf16.msra.mxu0 0
        %3171 = vmatprep.subr.bf16.mxu0 0
        %3172 = vmatpush1.bf16.msra.mxu0 0
        %3173 = vmatprep.subr.bf16.mxu0 0
        %3174 = vmatpush1.bf16.msra.mxu0 0
        %3175 = vmatprep.subr.bf16.mxu0 0
        %3176 = vmatpush1.bf16.msra.mxu0 0
        %3177 = vmatprep.subr.bf16.mxu0 0
        %3178 = vmatpush1.bf16.msra.mxu0 0
        %3179 = vmatprep.subr.bf16.mxu0 0
        %3180 = vmatpush1.bf16.msra.mxu0 0
        %3181 = vmatprep.subr.bf16.mxu0 0
        %3182 = vmatpush1.bf16.msra.mxu0 0
        %3183 = vmatprep.subr.bf16.mxu0 0
        %3184 = vmatpush1.bf16.msra.mxu0 0
        %3185 = vmatprep.mubr.bf16.mxu0 0
        %3186 = vmatmul.mubr.bf16.gmra.mrb[0].mxu0 %v3104
        %v3187 = vpop.f32.mrb[0].mxu0
        %v3188 = vadd.f32 0.0, %v3187
        %v3189 = vpop.f32.mrb[0].mxu0
        %v3190 = vadd.f32 0.0, %v3189
        %v3191 = vpop.f32.mrb[0].mxu0
        %v3192 = vpop.f32.mrb[0].mxu0
        %3193 = vdwg.mxu0
        %v3194 = vadd.f32 %v3108, %v3147
        %v3195 = vadd.f32 %v3109, %v3149
        %v3196 = vadd.f32 %v3110, %v3188
        %v3197 = vadd.f32 %v3111, %v3190
        %v3198 = vxor.u32 %v3194, 2147483648
        %v3199 = vmul.f32 %v3198, 1.442695
        %v3200 = vpow.pop %v3199
        %v3201 = vadd.f32 %v3200, 1.0
        %v3202 = vrcp.pop %v3201
        %v3203 = vmul.f32 1.0, %v3202
        %v3204 = vxor.u32 %v3195, 2147483648
        %v3205 = vmul.f32 %v3204, 1.442695
        %v3206 = vpow.pop %v3205
        %v3207 = vadd.f32 %v3206, 1.0
        %v3208 = vrcp.pop %v3207
        %v3209 = vmul.f32 1.0, %v3208
        %v3210 = vtanh.pop %v3196
        %v3211 = vxor.u32 %v3197, 2147483648
        %v3212 = vmul.f32 %v3211, 1.442695
        %v3213 = vpow.pop %v3212
        %v3214 = vadd.f32 %v3213, 1.0
        %v3215 = vrcp.pop %v3214
        %v3216 = vmul.f32 1.0, %v3215
        %v3217 = vmul.f32 %v3209, %v3101
        %v3218 = vmul.f32 %v3203, %v3210
        %v3219 = vadd.f32 %v3217, %v3218
        %v3220 = vtanh.pop %v3219
        %v3221 = vmul.f32 %v3216, %v3220
        %v3222 = vpack.c.bf16 %v3221, %v3221
        %3223 = vst [vmem:[%s1540] sm:$0xf] %v3222
        %v3224 = vld [vmem:[%s1542] sm:$0xff]
        %v3225 = vld [vmem:[%s1542 + $0x8] sm:$0xff]
        %v3226 = vunpack.c.l.bf16 %v3224
        %v3227 = vunpack.c.h.bf16 %v3224
        %v3228 = vunpack.c.l.bf16 %v3225
        %v3229 = vunpack.c.h.bf16 %v3225
        %3230 = vmatprep.subr.bf16.mxu0 %v2813
        %3231 = vmatpush1.bf16.msra.mxu0 %v2812
        %3232 = vmatprep.subr.bf16.mxu0 %v2817
        %3233 = vmatpush1.bf16.msra.mxu0 %v2816
        %3234 = vmatprep.subr.bf16.mxu0 %v2821
        %3235 = vmatpush1.bf16.msra.mxu0 %v2820
        %3236 = vmatprep.subr.bf16.mxu0 %v2825
        %3237 = vmatpush1.bf16.msra.mxu0 %v2824
        %3238 = vmatprep.subr.bf16.mxu0 %v2829
        %3239 = vmatpush1.bf16.msra.mxu0 %v2828
        %3240 = vmatprep.subr.bf16.mxu0 %v2833
        %3241 = vmatpush1.bf16.msra.mxu0 %v2832
        %3242 = vmatprep.subr.bf16.mxu0 %v2837
        %3243 = vmatpush1.bf16.msra.mxu0 %v2836
        %3244 = vmatprep.subr.bf16.mxu0 %v2841
        %3245 = vmatpush1.bf16.msra.mxu0 %v2840
        %3246 = vmatprep.subr.bf16.mxu0 0
        %3247 = vmatpush1.bf16.msra.mxu0 0
        %3248 = vmatprep.subr.bf16.mxu0 0
        %3249 = vmatpush1.bf16.msra.mxu0 0
        %3250 = vmatprep.subr.bf16.mxu0 0
        %3251 = vmatpush1.bf16.msra.mxu0 0
        %3252 = vmatprep.subr.bf16.mxu0 0
        %3253 = vmatpush1.bf16.msra.mxu0 0
        %3254 = vmatprep.subr.bf16.mxu0 0
        %3255 = vmatpush1.bf16.msra.mxu0 0
        %3256 = vmatprep.subr.bf16.mxu0 0
        %3257 = vmatpush1.bf16.msra.mxu0 0
        %3258 = vmatprep.subr.bf16.mxu0 0
        %3259 = vmatpush1.bf16.msra.mxu0 0
        %3260 = vmatprep.subr.bf16.mxu0 0
        %3261 = vmatpush1.bf16.msra.mxu0 0
        %3262 = vmatprep.mubr.bf16.mxu0 0
        %3263 = vmatmul.mubr.bf16.gmra.mrb[0].mxu0 %v3222
        %v3264 = vpop.f32.mrb[0].mxu0
        %v3265 = vadd.f32 0.0, %v3264
        %v3266 = vpop.f32.mrb[0].mxu0
        %v3267 = vadd.f32 0.0, %v3266
        %v3268 = vpop.f32.mrb[0].mxu0
        %v3269 = vpop.f32.mrb[0].mxu0
        %3270 = vdwg.mxu0
        %3271 = vmatprep.subr.bf16.mxu0 %v2815
        %3272 = vmatpush1.bf16.msra.mxu0 %v2814
        %3273 = vmatprep.subr.bf16.mxu0 %v2819
        %3274 = vmatpush1.bf16.msra.mxu0 %v2818
        %3275 = vmatprep.subr.bf16.mxu0 %v2823
        %3276 = vmatpush1.bf16.msra.mxu0 %v2822
        %3277 = vmatprep.subr.bf16.mxu0 %v2827
        %3278 = vmatpush1.bf16.msra.mxu0 %v2826
        %3279 = vmatprep.subr.bf16.mxu0 %v2831
        %3280 = vmatpush1.bf16.msra.mxu0 %v2830
        %3281 = vmatprep.subr.bf16.mxu0 %v2835
        %3282 = vmatpush1.bf16.msra.mxu0 %v2834
        %3283 = vmatprep.subr.bf16.mxu0 %v2839
        %3284 = vmatpush1.bf16.msra.mxu0 %v2838
        %3285 = vmatprep.subr.bf16.mxu0 %v2843
        %3286 = vmatpush1.bf16.msra.mxu0 %v2842
        %3287 = vmatprep.subr.bf16.mxu0 0
        %3288 = vmatpush1.bf16.msra.mxu0 0
        %3289 = vmatprep.subr.bf16.mxu0 0
        %3290 = vmatpush1.bf16.msra.mxu0 0
        %3291 = vmatprep.subr.bf16.mxu0 0
        %3292 = vmatpush1.bf16.msra.mxu0 0
        %3293 = vmatprep.subr.bf16.mxu0 0
        %3294 = vmatpush1.bf16.msra.mxu0 0
        %3295 = vmatprep.subr.bf16.mxu0 0
        %3296 = vmatpush1.bf16.msra.mxu0 0
        %3297 = vmatprep.subr.bf16.mxu0 0
        %3298 = vmatpush1.bf16.msra.mxu0 0
        %3299 = vmatprep.subr.bf16.mxu0 0
        %3300 = vmatpush1.bf16.msra.mxu0 0
        %3301 = vmatprep.subr.bf16.mxu0 0
        %3302 = vmatpush1.bf16.msra.mxu0 0
        %3303 = vmatprep.mubr.bf16.mxu0 0
        %3304 = vmatmul.mubr.bf16.gmra.mrb[0].mxu0 %v3222
        %v3305 = vpop.f32.mrb[0].mxu0
        %v3306 = vadd.f32 0.0, %v3305
        %v3307 = vpop.f32.mrb[0].mxu0
        %v3308 = vadd.f32 0.0, %v3307
        %v3309 = vpop.f32.mrb[0].mxu0
        %v3310 = vpop.f32.mrb[0].mxu0
        %3311 = vdwg.mxu0
        %v3312 = vadd.f32 %v3226, %v3265
        %v3313 = vadd.f32 %v3227, %v3267
        %v3314 = vadd.f32 %v3228, %v3306
        %v3315 = vadd.f32 %v3229, %v3308
        %v3316 = vxor.u32 %v3312, 2147483648
        %v3317 = vmul.f32 %v3316, 1.442695
        %v3318 = vpow.pop %v3317
        %v3319 = vadd.f32 %v3318, 1.0
        %v3320 = vrcp.pop %v3319
        %v3321 = vmul.f32 1.0, %v3320
        %v3322 = vxor.u32 %v3313, 2147483648
        %v3323 = vmul.f32 %v3322, 1.442695
        %v3324 = vpow.pop %v3323
        %v3325 = vadd.f32 %v3324, 1.0
        %v3326 = vrcp.pop %v3325
        %v3327 = vmul.f32 1.0, %v3326
        %v3328 = vtanh.pop %v3314
        %v3329 = vxor.u32 %v3315, 2147483648
        %v3330 = vmul.f32 %v3329, 1.442695
        %v3331 = vpow.pop %v3330
        %v3332 = vadd.f32 %v3331, 1.0
        %v3333 = vrcp.pop %v3332
        %v3334 = vmul.f32 1.0, %v3333
        %v3335 = vmul.f32 %v3327, %v3219
        %v3336 = vmul.f32 %v3321, %v3328
        %v3337 = vadd.f32 %v3335, %v3336
        %v3338 = vtanh.pop %v3337
        %v3339 = vmul.f32 %v3334, %v3338
        %v3340 = vpack.c.bf16 %v3339, %v3339
        %3341 = vst [vmem:[%s1660] sm:$0xf] %v3340
        %v3342 = vld [vmem:[%s1662] sm:$0xff]
        %v3343 = vld [vmem:[%s1662 + $0x8] sm:$0xff]
        %v3344 = vunpack.c.l.bf16 %v3342
        %v3345 = vunpack.c.h.bf16 %v3342
        %v3346 = vunpack.c.l.bf16 %v3343
        %v3347 = vunpack.c.h.bf16 %v3343
        %3348 = vmatprep.subr.bf16.mxu0 %v2813
        %3349 = vmatpush1.bf16.msra.mxu0 %v2812
        %3350 = vmatprep.subr.bf16.mxu0 %v2817
        %3351 = vmatpush1.bf16.msra.mxu0 %v2816
        %3352 = vmatprep.subr.bf16.mxu0 %v2821
        %3353 = vmatpush1.bf16.msra.mxu0 %v2820
        %3354 = vmatprep.subr.bf16.mxu0 %v2825
        %3355 = vmatpush1.bf16.msra.mxu0 %v2824
        %3356 = vmatprep.subr.bf16.mxu0 %v2829
        %3357 = vmatpush1.bf16.msra.mxu0 %v2828
        %3358 = vmatprep.subr.bf16.mxu0 %v2833
        %3359 = vmatpush1.bf16.msra.mxu0 %v2832
        %3360 = vmatprep.subr.bf16.mxu0 %v2837
        %3361 = vmatpush1.bf16.msra.mxu0 %v2836
        %3362 = vmatprep.subr.bf16.mxu0 %v2841
        %3363 = vmatpush1.bf16.msra.mxu0 %v2840
        %3364 = vmatprep.subr.bf16.mxu0 0
        %3365 = vmatpush1.bf16.msra.mxu0 0
        %3366 = vmatprep.subr.bf16.mxu0 0
        %3367 = vmatpush1.bf16.msra.mxu0 0
        %3368 = vmatprep.subr.bf16.mxu0 0
        %3369 = vmatpush1.bf16.msra.mxu0 0
        %3370 = vmatprep.subr.bf16.mxu0 0
        %3371 = vmatpush1.bf16.msra.mxu0 0
        %3372 = vmatprep.subr.bf16.mxu0 0
        %3373 = vmatpush1.bf16.msra.mxu0 0
        %3374 = vmatprep.subr.bf16.mxu0 0
        %3375 = vmatpush1.bf16.msra.mxu0 0
        %3376 = vmatprep.subr.bf16.mxu0 0
        %3377 = vmatpush1.bf16.msra.mxu0 0
        %3378 = vmatprep.subr.bf16.mxu0 0
        %3379 = vmatpush1.bf16.msra.mxu0 0
        %3380 = vmatprep.mubr.bf16.mxu0 0
        %3381 = vmatmul.mubr.bf16.gmra.mrb[0].mxu0 %v3340
        %v3382 = vpop.f32.mrb[0].mxu0
        %v3383 = vadd.f32 0.0, %v3382
        %v3384 = vpop.f32.mrb[0].mxu0
        %v3385 = vadd.f32 0.0, %v3384
        %v3386 = vpop.f32.mrb[0].mxu0
        %v3387 = vpop.f32.mrb[0].mxu0
        %3388 = vdwg.mxu0
        %3389 = vmatprep.subr.bf16.mxu0 %v2815
        %3390 = vmatpush1.bf16.msra.mxu0 %v2814
        %3391 = vmatprep.subr.bf16.mxu0 %v2819
        %3392 = vmatpush1.bf16.msra.mxu0 %v2818
        %3393 = vmatprep.subr.bf16.mxu0 %v2823
        %3394 = vmatpush1.bf16.msra.mxu0 %v2822
        %3395 = vmatprep.subr.bf16.mxu0 %v2827
        %3396 = vmatpush1.bf16.msra.mxu0 %v2826
        %3397 = vmatprep.subr.bf16.mxu0 %v2831
        %3398 = vmatpush1.bf16.msra.mxu0 %v2830
        %3399 = vmatprep.subr.bf16.mxu0 %v2835
        %3400 = vmatpush1.bf16.msra.mxu0 %v2834
        %3401 = vmatprep.subr.bf16.mxu0 %v2839
        %3402 = vmatpush1.bf16.msra.mxu0 %v2838
        %3403 = vmatprep.subr.bf16.mxu0 %v2843
        %3404 = vmatpush1.bf16.msra.mxu0 %v2842
        %3405 = vmatprep.subr.bf16.mxu0 0
        %3406 = vmatpush1.bf16.msra.mxu0 0
        %3407 = vmatprep.subr.bf16.mxu0 0
        %3408 = vmatpush1.bf16.msra.mxu0 0
        %3409 = vmatprep.subr.bf16.mxu0 0
        %3410 = vmatpush1.bf16.msra.mxu0 0
        %3411 = vmatprep.subr.bf16.mxu0 0
        %3412 = vmatpush1.bf16.msra.mxu0 0
        %3413 = vmatprep.subr.bf16.mxu0 0
        %3414 = vmatpush1.bf16.msra.mxu0 0
        %3415 = vmatprep.subr.bf16.mxu0 0
        %3416 = vmatpush1.bf16.msra.mxu0 0
        %3417 = vmatprep.subr.bf16.mxu0 0
        %3418 = vmatpush1.bf16.msra.mxu0 0
        %3419 = vmatprep.subr.bf16.mxu0 0
        %3420 = vmatpush1.bf16.msra.mxu0 0
        %3421 = vmatprep.mubr.bf16.mxu0 0
        %3422 = vmatmul.mubr.bf16.gmra.mrb[0].mxu0 %v3340
        %v3423 = vpop.f32.mrb[0].mxu0
        %v3424 = vadd.f32 0.0, %v3423
        %v3425 = vpop.f32.mrb[0].mxu0
        %v3426 = vadd.f32 0.0, %v3425
        %v3427 = vpop.f32.mrb[0].mxu0
        %v3428 = vpop.f32.mrb[0].mxu0
        %3429 = vdwg.mxu0
        %v3430 = vadd.f32 %v3344, %v3383
        %v3431 = vadd.f32 %v3345, %v3385
        %v3432 = vadd.f32 %v3346, %v3424
        %v3433 = vadd.f32 %v3347, %v3426
        %v3434 = vxor.u32 %v3430, 2147483648
        %v3435 = vmul.f32 %v3434, 1.442695
        %v3436 = vpow.pop %v3435
        %v3437 = vadd.f32 %v3436, 1.0
        %v3438 = vrcp.pop %v3437
        %v3439 = vmul.f32 1.0, %v3438
        %v3440 = vxor.u32 %v3431, 2147483648
        %v3441 = vmul.f32 %v3440, 1.442695
        %v3442 = vpow.pop %v3441
        %v3443 = vadd.f32 %v3442, 1.0
        %v3444 = vrcp.pop %v3443
        %v3445 = vmul.f32 1.0, %v3444
        %v3446 = vtanh.pop %v3432
        %v3447 = vxor.u32 %v3433, 2147483648
        %v3448 = vmul.f32 %v3447, 1.442695
        %v3449 = vpow.pop %v3448
        %v3450 = vadd.f32 %v3449, 1.0
        %v3451 = vrcp.pop %v3450
        %v3452 = vmul.f32 1.0, %v3451
        %v3453 = vmul.f32 %v3445, %v3337
        %v3454 = vmul.f32 %v3439, %v3446
        %v3455 = vadd.f32 %v3453, %v3454
        %v3456 = vtanh.pop %v3455
        %v3457 = vmul.f32 %v3452, %v3456
        %v3458 = vpack.c.bf16 %v3457, %v3457
        %3459 = vst [vmem:[%s1780] sm:$0xf] %v3458
        %v3460 = vld [vmem:[%s1782] sm:$0xff]
        %v3461 = vld [vmem:[%s1782 + $0x8] sm:$0xff]
        %v3462 = vunpack.c.l.bf16 %v3460
        %v3463 = vunpack.c.h.bf16 %v3460
        %v3464 = vunpack.c.l.bf16 %v3461
        %v3465 = vunpack.c.h.bf16 %v3461
        %3466 = vmatprep.subr.bf16.mxu0 %v2813
        %3467 = vmatpush1.bf16.msra.mxu0 %v2812
        %3468 = vmatprep.subr.bf16.mxu0 %v2817
        %3469 = vmatpush1.bf16.msra.mxu0 %v2816
        %3470 = vmatprep.subr.bf16.mxu0 %v2821
        %3471 = vmatpush1.bf16.msra.mxu0 %v2820
        %3472 = vmatprep.subr.bf16.mxu0 %v2825
        %3473 = vmatpush1.bf16.msra.mxu0 %v2824
        %3474 = vmatprep.subr.bf16.mxu0 %v2829
        %3475 = vmatpush1.bf16.msra.mxu0 %v2828
        %3476 = vmatprep.subr.bf16.mxu0 %v2833
        %3477 = vmatpush1.bf16.msra.mxu0 %v2832
        %3478 = vmatprep.subr.bf16.mxu0 %v2837
        %3479 = vmatpush1.bf16.msra.mxu0 %v2836
        %3480 = vmatprep.subr.bf16.mxu0 %v2841
        %3481 = vmatpush1.bf16.msra.mxu0 %v2840
        %3482 = vmatprep.subr.bf16.mxu0 0
        %3483 = vmatpush1.bf16.msra.mxu0 0
        %3484 = vmatprep.subr.bf16.mxu0 0
        %3485 = vmatpush1.bf16.msra.mxu0 0
        %3486 = vmatprep.subr.bf16.mxu0 0
        %3487 = vmatpush1.bf16.msra.mxu0 0
        %3488 = vmatprep.subr.bf16.mxu0 0
        %3489 = vmatpush1.bf16.msra.mxu0 0
        %3490 = vmatprep.subr.bf16.mxu0 0
        %3491 = vmatpush1.bf16.msra.mxu0 0
        %3492 = vmatprep.subr.bf16.mxu0 0
        %3493 = vmatpush1.bf16.msra.mxu0 0
        %3494 = vmatprep.subr.bf16.mxu0 0
        %3495 = vmatpush1.bf16.msra.mxu0 0
        %3496 = vmatprep.subr.bf16.mxu0 0
        %3497 = vmatpush1.bf16.msra.mxu0 0
        %3498 = vmatprep.mubr.bf16.mxu0 0
        %3499 = vmatmul.mubr.bf16.gmra.mrb[0].mxu0 %v3458
        %v3500 = vpop.f32.mrb[0].mxu0
        %v3501 = vadd.f32 0.0, %v3500
        %v3502 = vpop.f32.mrb[0].mxu0
        %v3503 = vadd.f32 0.0, %v3502
        %v3504 = vpop.f32.mrb[0].mxu0
        %v3505 = vpop.f32.mrb[0].mxu0
        %3506 = vdwg.mxu0
        %3507 = vmatprep.subr.bf16.mxu0 %v2815
        %3508 = vmatpush1.bf16.msra.mxu0 %v2814
        %3509 = vmatprep.subr.bf16.mxu0 %v2819
        %3510 = vmatpush1.bf16.msra.mxu0 %v2818
        %3511 = vmatprep.subr.bf16.mxu0 %v2823
        %3512 = vmatpush1.bf16.msra.mxu0 %v2822
        %3513 = vmatprep.subr.bf16.mxu0 %v2827
        %3514 = vmatpush1.bf16.msra.mxu0 %v2826
        %3515 = vmatprep.subr.bf16.mxu0 %v2831
        %3516 = vmatpush1.bf16.msra.mxu0 %v2830
        %3517 = vmatprep.subr.bf16.mxu0 %v2835
        %3518 = vmatpush1.bf16.msra.mxu0 %v2834
        %3519 = vmatprep.subr.bf16.mxu0 %v2839
        %3520 = vmatpush1.bf16.msra.mxu0 %v2838
        %3521 = vmatprep.subr.bf16.mxu0 %v2843
        %3522 = vmatpush1.bf16.msra.mxu0 %v2842
        %3523 = vmatprep.subr.bf16.mxu0 0
        %3524 = vmatpush1.bf16.msra.mxu0 0
        %3525 = vmatprep.subr.bf16.mxu0 0
        %3526 = vmatpush1.bf16.msra.mxu0 0
        %3527 = vmatprep.subr.bf16.mxu0 0
        %3528 = vmatpush1.bf16.msra.mxu0 0
        %3529 = vmatprep.subr.bf16.mxu0 0
        %3530 = vmatpush1.bf16.msra.mxu0 0
        %3531 = vmatprep.subr.bf16.mxu0 0
        %3532 = vmatpush1.bf16.msra.mxu0 0
        %3533 = vmatprep.subr.bf16.mxu0 0
        %3534 = vmatpush1.bf16.msra.mxu0 0
        %3535 = vmatprep.subr.bf16.mxu0 0
        %3536 = vmatpush1.bf16.msra.mxu0 0
        %3537 = vmatprep.subr.bf16.mxu0 0
        %3538 = vmatpush1.bf16.msra.mxu0 0
        %3539 = vmatprep.mubr.bf16.mxu0 0
        %3540 = vmatmul.mubr.bf16.gmra.mrb[0].mxu0 %v3458
        %v3541 = vpop.f32.mrb[0].mxu0
        %v3542 = vadd.f32 0.0, %v3541
        %v3543 = vpop.f32.mrb[0].mxu0
        %v3544 = vadd.f32 0.0, %v3543
        %v3545 = vpop.f32.mrb[0].mxu0
        %v3546 = vpop.f32.mrb[0].mxu0
        %3547 = vdwg.mxu0
        %v3548 = vadd.f32 %v3462, %v3501
        %v3549 = vadd.f32 %v3463, %v3503
        %v3550 = vadd.f32 %v3464, %v3542
        %v3551 = vadd.f32 %v3465, %v3544
        %v3552 = vxor.u32 %v3548, 2147483648
        %v3553 = vmul.f32 %v3552, 1.442695
        %v3554 = vpow.pop %v3553
        %v3555 = vadd.f32 %v3554, 1.0
        %v3556 = vrcp.pop %v3555
        %v3557 = vmul.f32 1.0, %v3556
        %v3558 = vxor.u32 %v3549, 2147483648
        %v3559 = vmul.f32 %v3558, 1.442695
        %v3560 = vpow.pop %v3559
        %v3561 = vadd.f32 %v3560, 1.0
        %v3562 = vrcp.pop %v3561
        %v3563 = vmul.f32 1.0, %v3562
        %v3564 = vtanh.pop %v3550
        %v3565 = vxor.u32 %v3551, 2147483648
        %v3566 = vmul.f32 %v3565, 1.442695
        %v3567 = vpow.pop %v3566
        %v3568 = vadd.f32 %v3567, 1.0
        %v3569 = vrcp.pop %v3568
        %v3570 = vmul.f32 1.0, %v3569
        %v3571 = vmul.f32 %v3563, %v3455
        %v3572 = vmul.f32 %v3557, %v3564
        %v3573 = vadd.f32 %v3571, %v3572
        %v3574 = vtanh.pop %v3573
        %v3575 = vmul.f32 %v3570, %v3574
        %v3576 = vpack.c.bf16 %v3575, %v3575
        %3577 = vst [vmem:[%s1900] sm:$0xf] %v3576
        %v3578 = vld [vmem:[%s1902] sm:$0xff]
        %v3579 = vld [vmem:[%s1902 + $0x8] sm:$0xff]
        %v3580 = vunpack.c.l.bf16 %v3578
        %v3581 = vunpack.c.h.bf16 %v3578
        %v3582 = vunpack.c.l.bf16 %v3579
        %v3583 = vunpack.c.h.bf16 %v3579
        %3584 = vmatprep.subr.bf16.mxu0 %v2813
        %3585 = vmatpush1.bf16.msra.mxu0 %v2812
        %3586 = vmatprep.subr.bf16.mxu0 %v2817
        %3587 = vmatpush1.bf16.msra.mxu0 %v2816
        %3588 = vmatprep.subr.bf16.mxu0 %v2821
        %3589 = vmatpush1.bf16.msra.mxu0 %v2820
        %3590 = vmatprep.subr.bf16.mxu0 %v2825
        %3591 = vmatpush1.bf16.msra.mxu0 %v2824
        %3592 = vmatprep.subr.bf16.mxu0 %v2829
        %3593 = vmatpush1.bf16.msra.mxu0 %v2828
        %3594 = vmatprep.subr.bf16.mxu0 %v2833
        %3595 = vmatpush1.bf16.msra.mxu0 %v2832
        %3596 = vmatprep.subr.bf16.mxu0 %v2837
        %3597 = vmatpush1.bf16.msra.mxu0 %v2836
        %3598 = vmatprep.subr.bf16.mxu0 %v2841
        %3599 = vmatpush1.bf16.msra.mxu0 %v2840
        %3600 = vmatprep.subr.bf16.mxu0 0
        %3601 = vmatpush1.bf16.msra.mxu0 0
        %3602 = vmatprep.subr.bf16.mxu0 0
        %3603 = vmatpush1.bf16.msra.mxu0 0
        %3604 = vmatprep.subr.bf16.mxu0 0
        %3605 = vmatpush1.bf16.msra.mxu0 0
        %3606 = vmatprep.subr.bf16.mxu0 0
        %3607 = vmatpush1.bf16.msra.mxu0 0
        %3608 = vmatprep.subr.bf16.mxu0 0
        %3609 = vmatpush1.bf16.msra.mxu0 0
        %3610 = vmatprep.subr.bf16.mxu0 0
        %3611 = vmatpush1.bf16.msra.mxu0 0
        %3612 = vmatprep.subr.bf16.mxu0 0
        %3613 = vmatpush1.bf16.msra.mxu0 0
        %3614 = vmatprep.subr.bf16.mxu0 0
        %3615 = vmatpush1.bf16.msra.mxu0 0
        %3616 = vmatprep.mubr.bf16.mxu0 0
        %3617 = vmatmul.mubr.bf16.gmra.mrb[0].mxu0 %v3576
        %v3618 = vpop.f32.mrb[0].mxu0
        %v3619 = vadd.f32 0.0, %v3618
        %v3620 = vpop.f32.mrb[0].mxu0
        %v3621 = vadd.f32 0.0, %v3620
        %v3622 = vpop.f32.mrb[0].mxu0
        %v3623 = vpop.f32.mrb[0].mxu0
        %3624 = vdwg.mxu0
        %3625 = vmatprep.subr.bf16.mxu0 %v2815
        %3626 = vmatpush1.bf16.msra.mxu0 %v2814
        %3627 = vmatprep.subr.bf16.mxu0 %v2819
        %3628 = vmatpush1.bf16.msra.mxu0 %v2818
        %3629 = vmatprep.subr.bf16.mxu0 %v2823
        %3630 = vmatpush1.bf16.msra.mxu0 %v2822
        %3631 = vmatprep.subr.bf16.mxu0 %v2827
        %3632 = vmatpush1.bf16.msra.mxu0 %v2826
        %3633 = vmatprep.subr.bf16.mxu0 %v2831
        %3634 = vmatpush1.bf16.msra.mxu0 %v2830
        %3635 = vmatprep.subr.bf16.mxu0 %v2835
        %3636 = vmatpush1.bf16.msra.mxu0 %v2834
        %3637 = vmatprep.subr.bf16.mxu0 %v2839
        %3638 = vmatpush1.bf16.msra.mxu0 %v2838
        %3639 = vmatprep.subr.bf16.mxu0 %v2843
        %3640 = vmatpush1.bf16.msra.mxu0 %v2842
        %3641 = vmatprep.subr.bf16.mxu0 0
        %3642 = vmatpush1.bf16.msra.mxu0 0
        %3643 = vmatprep.subr.bf16.mxu0 0
        %3644 = vmatpush1.bf16.msra.mxu0 0
        %3645 = vmatprep.subr.bf16.mxu0 0
        %3646 = vmatpush1.bf16.msra.mxu0 0
        %3647 = vmatprep.subr.bf16.mxu0 0
        %3648 = vmatpush1.bf16.msra.mxu0 0
        %3649 = vmatprep.subr.bf16.mxu0 0
        %3650 = vmatpush1.bf16.msra.mxu0 0
        %3651 = vmatprep.subr.bf16.mxu0 0
        %3652 = vmatpush1.bf16.msra.mxu0 0
        %3653 = vmatprep.subr.bf16.mxu0 0
        %3654 = vmatpush1.bf16.msra.mxu0 0
        %3655 = vmatprep.subr.bf16.mxu0 0
        %3656 = vmatpush1.bf16.msra.mxu0 0
        %3657 = vmatprep.mubr.bf16.mxu0 0
        %3658 = vmatmul.mubr.bf16.gmra.mrb[0].mxu0 %v3576
        %v3659 = vpop.f32.mrb[0].mxu0
        %v3660 = vadd.f32 0.0, %v3659
        %v3661 = vpop.f32.mrb[0].mxu0
        %v3662 = vadd.f32 0.0, %v3661
        %v3663 = vpop.f32.mrb[0].mxu0
        %v3664 = vpop.f32.mrb[0].mxu0
        %3665 = vdwg.mxu0
        %v3666 = vadd.f32 %v3580, %v3619
        %v3667 = vadd.f32 %v3581, %v3621
        %v3668 = vadd.f32 %v3582, %v3660
        %v3669 = vadd.f32 %v3583, %v3662
        %v3670 = vxor.u32 %v3666, 2147483648
        %v3671 = vmul.f32 %v3670, 1.442695
        %v3672 = vpow.pop %v3671
        %v3673 = vadd.f32 %v3672, 1.0
        %v3674 = vrcp.pop %v3673
        %v3675 = vmul.f32 1.0, %v3674
        %v3676 = vxor.u32 %v3667, 2147483648
        %v3677 = vmul.f32 %v3676, 1.442695
        %v3678 = vpow.pop %v3677
        %v3679 = vadd.f32 %v3678, 1.0
        %v3680 = vrcp.pop %v3679
        %v3681 = vmul.f32 1.0, %v3680
        %v3682 = vtanh.pop %v3668
        %v3683 = vxor.u32 %v3669, 2147483648
        %v3684 = vmul.f32 %v3683, 1.442695
        %v3685 = vpow.pop %v3684
        %v3686 = vadd.f32 %v3685, 1.0
        %v3687 = vrcp.pop %v3686
        %v3688 = vmul.f32 1.0, %v3687
        %v3689 = vmul.f32 %v3681, %v3573
        %v3690 = vmul.f32 %v3675, %v3682
        %v3691 = vadd.f32 %v3689, %v3690
        %v3692 = vtanh.pop %v3691
        %v3693 = vmul.f32 %v3688, %v3692
        %v3694 = vpack.c.bf16 %v3693, %v3693
        %3695 = vst [vmem:[%s2020] sm:$0xf] %v3694
        %v3696 = vld [vmem:[%s2022] sm:$0xff]
        %v3697 = vld [vmem:[%s2022 + $0x8] sm:$0xff]
        %v3698 = vunpack.c.l.bf16 %v3696
        %v3699 = vunpack.c.h.bf16 %v3696
        %v3700 = vunpack.c.l.bf16 %v3697
        %v3701 = vunpack.c.h.bf16 %v3697
        %3702 = vmatprep.subr.bf16.mxu0 %v2813
        %3703 = vmatpush1.bf16.msra.mxu0 %v2812
        %3704 = vmatprep.subr.bf16.mxu0 %v2817
        %3705 = vmatpush1.bf16.msra.mxu0 %v2816
        %3706 = vmatprep.subr.bf16.mxu0 %v2821
        %3707 = vmatpush1.bf16.msra.mxu0 %v2820
        %3708 = vmatprep.subr.bf16.mxu0 %v2825
        %3709 = vmatpush1.bf16.msra.mxu0 %v2824
        %3710 = vmatprep.subr.bf16.mxu0 %v2829
        %3711 = vmatpush1.bf16.msra.mxu0 %v2828
        %3712 = vmatprep.subr.bf16.mxu0 %v2833
        %3713 = vmatpush1.bf16.msra.mxu0 %v2832
        %3714 = vmatprep.subr.bf16.mxu0 %v2837
        %3715 = vmatpush1.bf16.msra.mxu0 %v2836
        %3716 = vmatprep.subr.bf16.mxu0 %v2841
        %3717 = vmatpush1.bf16.msra.mxu0 %v2840
        %3718 = vmatprep.subr.bf16.mxu0 0
        %3719 = vmatpush1.bf16.msra.mxu0 0
        %3720 = vmatprep.subr.bf16.mxu0 0
        %3721 = vmatpush1.bf16.msra.mxu0 0
        %3722 = vmatprep.subr.bf16.mxu0 0
        %3723 = vmatpush1.bf16.msra.mxu0 0
        %3724 = vmatprep.subr.bf16.mxu0 0
        %3725 = vmatpush1.bf16.msra.mxu0 0
        %3726 = vmatprep.subr.bf16.mxu0 0
        %3727 = vmatpush1.bf16.msra.mxu0 0
        %3728 = vmatprep.subr.bf16.mxu0 0
        %3729 = vmatpush1.bf16.msra.mxu0 0
        %3730 = vmatprep.subr.bf16.mxu0 0
        %3731 = vmatpush1.bf16.msra.mxu0 0
        %3732 = vmatprep.subr.bf16.mxu0 0
        %3733 = vmatpush1.bf16.msra.mxu0 0
        %3734 = vmatprep.mubr.bf16.mxu0 0
        %3735 = vmatmul.mubr.bf16.gmra.mrb[0].mxu0 %v3694
        %v3736 = vpop.f32.mrb[0].mxu0
        %v3737 = vadd.f32 0.0, %v3736
        %v3738 = vpop.f32.mrb[0].mxu0
        %v3739 = vadd.f32 0.0, %v3738
        %v3740 = vpop.f32.mrb[0].mxu0
        %v3741 = vpop.f32.mrb[0].mxu0
        %3742 = vdwg.mxu0
        %3743 = vmatprep.subr.bf16.mxu0 %v2815
        %3744 = vmatpush1.bf16.msra.mxu0 %v2814
        %3745 = vmatprep.subr.bf16.mxu0 %v2819
        %3746 = vmatpush1.bf16.msra.mxu0 %v2818
        %3747 = vmatprep.subr.bf16.mxu0 %v2823
        %3748 = vmatpush1.bf16.msra.mxu0 %v2822
        %3749 = vmatprep.subr.bf16.mxu0 %v2827
        %3750 = vmatpush1.bf16.msra.mxu0 %v2826
        %3751 = vmatprep.subr.bf16.mxu0 %v2831
        %3752 = vmatpush1.bf16.msra.mxu0 %v2830
        %3753 = vmatprep.subr.bf16.mxu0 %v2835
        %3754 = vmatpush1.bf16.msra.mxu0 %v2834
        %3755 = vmatprep.subr.bf16.mxu0 %v2839
        %3756 = vmatpush1.bf16.msra.mxu0 %v2838
        %3757 = vmatprep.subr.bf16.mxu0 %v2843
        %3758 = vmatpush1.bf16.msra.mxu0 %v2842
        %3759 = vmatprep.subr.bf16.mxu0 0
        %3760 = vmatpush1.bf16.msra.mxu0 0
        %3761 = vmatprep.subr.bf16.mxu0 0
        %3762 = vmatpush1.bf16.msra.mxu0 0
        %3763 = vmatprep.subr.bf16.mxu0 0
        %3764 = vmatpush1.bf16.msra.mxu0 0
        %3765 = vmatprep.subr.bf16.mxu0 0
        %3766 = vmatpush1.bf16.msra.mxu0 0
        %3767 = vmatprep.subr.bf16.mxu0 0
        %3768 = vmatpush1.bf16.msra.mxu0 0
        %3769 = vmatprep.subr.bf16.mxu0 0
        %3770 = vmatpush1.bf16.msra.mxu0 0
        %3771 = vmatprep.subr.bf16.mxu0 0
        %3772 = vmatpush1.bf16.msra.mxu0 0
        %3773 = vmatprep.subr.bf16.mxu0 0
        %3774 = vmatpush1.bf16.msra.mxu0 0
        %3775 = vmatprep.mubr.bf16.mxu0 0
        %3776 = vmatmul.mubr.bf16.gmra.mrb[0].mxu0 %v3694
        %v3777 = vpop.f32.mrb[0].mxu0
        %v3778 = vadd.f32 0.0, %v3777
        %v3779 = vpop.f32.mrb[0].mxu0
        %v3780 = vadd.f32 0.0, %v3779
        %v3781 = vpop.f32.mrb[0].mxu0
        %v3782 = vpop.f32.mrb[0].mxu0
        %3783 = vdwg.mxu0
        %v3784 = vadd.f32 %v3698, %v3737
        %v3785 = vadd.f32 %v3699, %v3739
        %v3786 = vadd.f32 %v3700, %v3778
        %v3787 = vadd.f32 %v3701, %v3780
        %v3788 = vxor.u32 %v3784, 2147483648
        %v3789 = vmul.f32 %v3788, 1.442695
        %v3790 = vpow.pop %v3789
        %v3791 = vadd.f32 %v3790, 1.0
        %v3792 = vrcp.pop %v3791
        %v3793 = vmul.f32 1.0, %v3792
        %v3794 = vxor.u32 %v3785, 2147483648
        %v3795 = vmul.f32 %v3794, 1.442695
        %v3796 = vpow.pop %v3795
        %v3797 = vadd.f32 %v3796, 1.0
        %v3798 = vrcp.pop %v3797
        %v3799 = vmul.f32 1.0, %v3798
        %v3800 = vtanh.pop %v3786
        %v3801 = vxor.u32 %v3787, 2147483648
        %v3802 = vmul.f32 %v3801, 1.442695
        %v3803 = vpow.pop %v3802
        %v3804 = vadd.f32 %v3803, 1.0
        %v3805 = vrcp.pop %v3804
        %v3806 = vmul.f32 1.0, %v3805
        %v3807 = vmul.f32 %v3799, %v3691
        %v3808 = vmul.f32 %v3793, %v3800
        %v3809 = vadd.f32 %v3807, %v3808
        %v3810 = vtanh.pop %v3809
        %v3811 = vmul.f32 %v3806, %v3810
        %v3812 = vpack.c.bf16 %v3811, %v3811
        %3813 = vst [vmem:[%s2140] sm:$0xf] %v3812
        %v3814 = vld [vmem:[%s7] sm:$0xf]
        %v3815 = vld [vmem:[%s7 + $0x4] sm:$0xf]
        %v3816 = vld [vmem:[%s7 + $0x8] sm:$0xf]
        %v3817 = vld [vmem:[%s7 + $0xc] sm:$0xf]
        %v3818 = vld [vmem:[%s7 + $0x10] sm:$0xf]
        %v3819 = vld [vmem:[%s7 + $0x14] sm:$0xf]
        %v3820 = vld [vmem:[%s7 + $0x18] sm:$0xf]
        %v3821 = vld [vmem:[%s7 + $0x1c] sm:$0xf]
        %v3822 = vld [vmem:[%s7 + $0x20] sm:$0xf]
        %v3823 = vld [vmem:[%s7 + $0x24] sm:$0xf]
        %v3824 = vld [vmem:[%s7 + $0x28] sm:$0xf]
        %v3825 = vld [vmem:[%s7 + $0x2c] sm:$0xf]
        %v3826 = vld [vmem:[%s7 + $0x30] sm:$0xf]
        %v3827 = vld [vmem:[%s7 + $0x34] sm:$0xf]
        %v3828 = vld [vmem:[%s7 + $0x38] sm:$0xf]
        %v3829 = vld [vmem:[%s7 + $0x3c] sm:$0xf]
        %v3830 = vld [vmem:[%s8] sm:$0x1]
        %v3831 = vld [vmem:[#allocation3] sm:$0xf]
        %v3832 = vld [vmem:[#allocation3 + $0x4] sm:$0xf]
        %v3833 = vld [vmem:[#allocation3 + $0x8] sm:$0xf]
        %v3834 = vld [vmem:[#allocation3 + $0xc] sm:$0xf]
        %v3835 = vld [vmem:[#allocation3 + $0x10] sm:$0xf]
        %v3836 = vld [vmem:[#allocation3 + $0x14] sm:$0xf]
        %v3837 = vld [vmem:[#allocation3 + $0x18] sm:$0xf]
        %v3838 = vld [vmem:[#allocation3 + $0x1c] sm:$0xf]
        %v3840 = vlaneseq
        %v3841 = vshrl.u32 %v3840, 7
        %v3842 = vsub.s32 0, %v3841
        %v3843 = vrot.slane %v3830, %v3842
        %v3853 = vunpack.c.l.b16 %v3831
        %v3854 = vunpack.c.l.b16 %v3832
        %v3855 = vunpack.c.l.b16 %v3833
        %v3856 = vunpack.c.l.b16 %v3834
        %v3857 = vunpack.c.l.b16 %v3835
        %v3858 = vunpack.c.l.b16 %v3836
        %v3859 = vunpack.c.l.b16 %v3837
        %v3860 = vunpack.c.l.b16 %v3838
        %v3861 = vpack.c.b16 %v3854, %v3853
        %v3862 = vpack.c.b16 %v3856, %v3855
        %v3863 = vpack.c.b16 %v3858, %v3857
        %v3864 = vpack.c.b16 %v3860, %v3859
        %v3885 = vunpack.c.l.b16 %v3814
        %v3886 = vunpack.c.l.b16 %v3815
        %v3887 = vunpack.c.l.b16 %v3816
        %v3888 = vunpack.c.l.b16 %v3817
        %v3889 = vunpack.c.l.b16 %v3818
        %v3890 = vunpack.c.l.b16 %v3819
        %v3891 = vunpack.c.l.b16 %v3820
        %v3892 = vunpack.c.l.b16 %v3821
        %v3893 = vunpack.c.l.b16 %v3822
        %v3894 = vunpack.c.l.b16 %v3823
        %v3895 = vunpack.c.l.b16 %v3824
        %v3896 = vunpack.c.l.b16 %v3825
        %v3897 = vunpack.c.l.b16 %v3826
        %v3898 = vunpack.c.l.b16 %v3827
        %v3899 = vunpack.c.l.b16 %v3828
        %v3900 = vunpack.c.l.b16 %v3829
        %v3901 = vpack.c.b16 %v3886, %v3885
        %v3902 = vpack.c.b16 %v3888, %v3887
        %v3903 = vpack.c.b16 %v3890, %v3889
        %v3904 = vpack.c.b16 %v3892, %v3891
        %v3905 = vpack.c.b16 %v3894, %v3893
        %v3906 = vpack.c.b16 %v3896, %v3895
        %v3907 = vpack.c.b16 %v3898, %v3897
        %v3908 = vpack.c.b16 %v3900, %v3899
        %3917 = vmatprep.subr.bf16.mxu0 0
        %3918 = vmatpush1.bf16.msra.mxu0 %v3901
        %3919 = vmatprep.subr.bf16.mxu0 0
        %3920 = vmatpush1.bf16.msra.mxu0 %v3902
        %3921 = vmatprep.subr.bf16.mxu0 0
        %3922 = vmatpush1.bf16.msra.mxu0 %v3903
        %3923 = vmatprep.subr.bf16.mxu0 0
        %3924 = vmatpush1.bf16.msra.mxu0 %v3904
        %3925 = vmatprep.subr.bf16.mxu0 0
        %3926 = vmatpush1.bf16.msra.mxu0 %v3905
        %3927 = vmatprep.subr.bf16.mxu0 0
        %3928 = vmatpush1.bf16.msra.mxu0 %v3906
        %3929 = vmatprep.subr.bf16.mxu0 0
        %3930 = vmatpush1.bf16.msra.mxu0 %v3907
        %3931 = vmatprep.subr.bf16.mxu0 0
        %3932 = vmatpush1.bf16.msra.mxu0 %v3908
        %3933 = vmatprep.subr.bf16.mxu0 0
        %3934 = vmatpush1.bf16.msra.mxu0 0
        %3935 = vmatprep.subr.bf16.mxu0 0
        %3936 = vmatpush1.bf16.msra.mxu0 0
        %3937 = vmatprep.subr.bf16.mxu0 0
        %3938 = vmatpush1.bf16.msra.mxu0 0
        %3939 = vmatprep.subr.bf16.mxu0 0
        %3940 = vmatpush1.bf16.msra.mxu0 0
        %3941 = vmatprep.subr.bf16.mxu0 0
        %3942 = vmatpush1.bf16.msra.mxu0 0
        %3943 = vmatprep.subr.bf16.mxu0 0
        %3944 = vmatpush1.bf16.msra.mxu0 0
        %3945 = vmatprep.subr.bf16.mxu0 0
        %3946 = vmatpush1.bf16.msra.mxu0 0
        %3947 = vmatprep.subr.bf16.mxu0 0
        %3948 = vmatpush1.bf16.msra.mxu0 0
        %3949 = vmatprep.mubr.bf16.mxu0 0
        %3950 = vmatmul.mubr.bf16.gmra.mrb[0].mxu0 %v3861
        %v3951 = vpop.f32.mrb[0].mxu0
        %v3952 = vadd.f32 %v3843, %v3951
        %v3953 = vpop.f32.mrb[0].mxu0
        %v3954 = vpop.f32.mrb[0].mxu0
        %v3955 = vadd.f32 %v3843, %v3954
        %v3956 = vpop.f32.mrb[0].mxu0
        %3957 = vmatprep.mubr.bf16.mxu0 0
        %3958 = vmatmul.mubr.bf16.gmra.mrb[0].mxu0 %v3862
        %v3959 = vpop.f32.mrb[0].mxu0
        %v3960 = vadd.f32 %v3843, %v3959
        %v3961 = vpop.f32.mrb[0].mxu0
        %v3962 = vpop.f32.mrb[0].mxu0
        %v3963 = vadd.f32 %v3843, %v3962
        %v3964 = vpop.f32.mrb[0].mxu0
        %3965 = vmatprep.mubr.bf16.mxu0 0
        %3966 = vmatmul.mubr.bf16.gmra.mrb[0].mxu0 %v3863
        %v3967 = vpop.f32.mrb[0].mxu0
        %v3968 = vadd.f32 %v3843, %v3967
        %v3969 = vpop.f32.mrb[0].mxu0
        %v3970 = vpop.f32.mrb[0].mxu0
        %v3971 = vadd.f32 %v3843, %v3970
        %v3972 = vpop.f32.mrb[0].mxu0
        %3973 = vmatprep.mubr.bf16.mxu0 0
        %3974 = vmatmul.mubr.bf16.gmra.mrb[0].mxu0 %v3864
        %v3975 = vpop.f32.mrb[0].mxu0
        %v3976 = vadd.f32 %v3843, %v3975
        %v3977 = vpop.f32.mrb[0].mxu0
        %v3978 = vpop.f32.mrb[0].mxu0
        %v3979 = vadd.f32 %v3843, %v3978
        %v3980 = vpop.f32.mrb[0].mxu0
        %3981 = vdwg.mxu0
        %v3982 = vpack.c.bf16 %v3952, %v3952
        %v3983 = vpack.c.bf16 %v3955, %v3955
        %v3984 = vpack.c.bf16 %v3960, %v3960
        %v3985 = vpack.c.bf16 %v3963, %v3963
        %v3986 = vpack.c.bf16 %v3968, %v3968
        %v3987 = vpack.c.bf16 %v3971, %v3971
        %v3988 = vpack.c.bf16 %v3976, %v3976
        %v3989 = vpack.c.bf16 %v3979, %v3979
        %3990 = vst [vmem:[%s454] sm:$0xf] %v3982
        %3991 = vst [vmem:[%s454 + $0x4] sm:$0xf] %v3983
        %3992 = vst [vmem:[%s454 + $0x8] sm:$0xf] %v3984
        %3993 = vst [vmem:[%s454 + $0xc] sm:$0xf] %v3985
        %3994 = vst [vmem:[%s454 + $0x10] sm:$0xf] %v3986
        %3995 = vst [vmem:[%s454 + $0x14] sm:$0xf] %v3987
        %3996 = vst [vmem:[%s454 + $0x18] sm:$0xf] %v3988
        %3997 = vst [vmem:[%s454 + $0x1c] sm:$0xf] %v3989
        %s3998 = sand.u32 %s225, 1
        %s3999 = sand.u32 %s225, 1
        %s4000 = smul.addr %s3999, 32
        %s4001 = scalar_lea.vmem [#allocation12], %s4000
        // Predicated region
        $region114: #{lstm_forward.1} parent=92 // pred_check
          %p4002 = pneg %p235
        $region115: #{lstm_forward.1} parent=92 // pred_check_branch
          %4004 = sbr.rel (%p4002) target = $region117
        $region116: #{lstm_forward.1} parent=92 // pred_region
          %s4005 = smul.addr %s23, 4
          %s4006 = scalar_lea.vmem %s9, %s4005
          // Predicated region
          $region118: #{lstm_forward.1} parent=116 // pred_check
            _
          $region119: #{lstm_forward.1} parent=116 // pred_check_branch
            %4008 = sbr.rel (0) target = $region121
          $region120: #{lstm_forward.1} parent=116 // pred_region
            // Predicated region
            $region122: #{lstm_forward.1} parent=120 // pred_check
              _
            $region123: #{lstm_forward.1} parent=120 // pred_check_branch
              %4010 = sbr.rel target = $region125
            $region124: #{lstm_forward.1} parent=120 // pred_region
              // Predicated region
              $region137: #{lstm_forward.1} parent=124 // pred_check
                _
              $region138: #{lstm_forward.1} parent=124 // pred_check_branch
                %4039 = sbr.rel (0) target = $region140
              $region139: #{lstm_forward.1} parent=124 // pred_region
                loop: start=0, step=1, limit=1
                $region141: #{lstm_forward.1} parent=139 // loop_pre_header
                  _
                $region142: #{lstm_forward.1} parent=139 // loop_header
                  %s4041 = sphi 0, %s4045
                  %p4042 = scmp.ge.s32.totalorder %s4041, 1
                  %s4046 = sphi %s4001, %s4001
                  %s4047 = sphi %s4006, %s4006
                $region143: #{lstm_forward.1} parent=139 // loop_header_branch
                  %4044 = sbr.rel (%p4042) target = $region147
                $region144: #{lstm_forward.1} parent=139 // loop_body
                  _
                $region145: #{lstm_forward.1} parent=139 // loop_footer
                  %s4045 = sadd.s32 1, %s4041
                $region146: #{lstm_forward.1} parent=139 // loop_footer_branch
                  %4040 = sbr.rel target = $region142
                $region147: #{lstm_forward.1} parent=139 // loop_exit
                  _
                loop: start=0, step=1, limit=1
                $region148: #{lstm_forward.1} parent=139 // loop_pre_header
                  _
                $region149: #{lstm_forward.1} parent=139 // loop_header
                  %s4050 = sphi 0, %s4054
                  %p4051 = scmp.ge.s32.totalorder %s4050, 1
                  %s4055 = sphi %s4001, %s4001
                  %s4056 = sphi %s4006, %s4006
                $region150: #{lstm_forward.1} parent=139 // loop_header_branch
                  %4053 = sbr.rel (%p4051) target = $region154
                $region151: #{lstm_forward.1} parent=139 // loop_body
                  %v4057 = vld [vmem:[%s4055] sm:$0xf]
                  %4058 = vst [vmem:[%s4056] sm:$0xf] %v4057
                  %v4059 = vld [vmem:[%s4055 + $0x4] sm:$0xf]
                  %4060 = vst [vmem:[%s4056 + $0x8] sm:$0xf] %v4059
                  %v4061 = vld [vmem:[%s4055 + $0x8] sm:$0xf]
                  %4062 = vst [vmem:[%s4056 + $0x10] sm:$0xf] %v4061
                  %v4063 = vld [vmem:[%s4055 + $0xc] sm:$0xf]
                  %4064 = vst [vmem:[%s4056 + $0x18] sm:$0xf] %v4063
                  %v4065 = vld [vmem:[%s4055 + $0x10] sm:$0xf]
                  %4066 = vst [vmem:[%s4056 + $0x20] sm:$0xf] %v4065
                  %v4067 = vld [vmem:[%s4055 + $0x14] sm:$0xf]
                  %4068 = vst [vmem:[%s4056 + $0x28] sm:$0xf] %v4067
                  %v4069 = vld [vmem:[%s4055 + $0x18] sm:$0xf]
                  %4070 = vst [vmem:[%s4056 + $0x30] sm:$0xf] %v4069
                  %v4071 = vld [vmem:[%s4055 + $0x1c] sm:$0xf]
                  %4072 = vst [vmem:[%s4056 + $0x38] sm:$0xf] %v4071
                $region152: #{lstm_forward.1} parent=139 // loop_footer
                  %s4054 = sadd.s32 1, %s4050
                $region153: #{lstm_forward.1} parent=139 // loop_footer_branch
                  %4049 = sbr.rel target = $region149
                $region154: #{lstm_forward.1} parent=139 // loop_exit
                  _
              $region140: #{lstm_forward.1} parent=124 // pred_fallthru
                _
            $region125: #{lstm_forward.1} parent=120 // pred_fallthru
              _
            // Predicated region
            $region126: #{lstm_forward.1} parent=120 // pred_check
              _
            $region127: #{lstm_forward.1} parent=120 // pred_check_branch
              %4012 = sbr.rel (0) target = $region129
            $region128: #{lstm_forward.1} parent=120 // pred_region
              loop: start=0, step=1, limit=1
              $region130: #{lstm_forward.1} parent=128 // loop_pre_header
                _
              $region131: #{lstm_forward.1} parent=128 // loop_header
                %s4015 = sphi 0, %s4019
                %p4016 = scmp.ge.s32.totalorder %s4015, 1
                %s4020 = sphi %s4001, %s4001
                %s4021 = sphi %s4006, %s4006
              $region132: #{lstm_forward.1} parent=128 // loop_header_branch
                %4018 = sbr.rel (%p4016) target = $region136
              $region133: #{lstm_forward.1} parent=128 // loop_body
                %v4022 = vld [vmem:[%s4020] sm:$0xf]
                %4023 = vst [vmem:[%s4021] sm:$0xf] %v4022
                %v4024 = vld [vmem:[%s4020 + $0x4] sm:$0xf]
                %4025 = vst [vmem:[%s4021 + $0x8] sm:$0xf] %v4024
                %v4026 = vld [vmem:[%s4020 + $0x8] sm:$0xf]
                %4027 = vst [vmem:[%s4021 + $0x10] sm:$0xf] %v4026
                %v4028 = vld [vmem:[%s4020 + $0xc] sm:$0xf]
                %4029 = vst [vmem:[%s4021 + $0x18] sm:$0xf] %v4028
                %v4030 = vld [vmem:[%s4020 + $0x10] sm:$0xf]
                %4031 = vst [vmem:[%s4021 + $0x20] sm:$0xf] %v4030
                %v4032 = vld [vmem:[%s4020 + $0x14] sm:$0xf]
                %4033 = vst [vmem:[%s4021 + $0x28] sm:$0xf] %v4032
                %v4034 = vld [vmem:[%s4020 + $0x18] sm:$0xf]
                %4035 = vst [vmem:[%s4021 + $0x30] sm:$0xf] %v4034
                %v4036 = vld [vmem:[%s4020 + $0x1c] sm:$0xf]
                %4037 = vst [vmem:[%s4021 + $0x38] sm:$0xf] %v4036
              $region134: #{lstm_forward.1} parent=128 // loop_footer
                %s4019 = sadd.s32 1, %s4015
              $region135: #{lstm_forward.1} parent=128 // loop_footer_branch
                %4014 = sbr.rel target = $region131
              $region136: #{lstm_forward.1} parent=128 // loop_exit
                _
            $region129: #{lstm_forward.1} parent=120 // pred_fallthru
              _
          $region121: #{lstm_forward.1} parent=116 // pred_fallthru
            _
          %4073 = vnop
        $region117: #{lstm_forward.1} parent=92 // pred_fallthru
          _
      $region93: #{lstm_forward.1} parent=5 // pred_fallthru
        _
      %p4074 = scmp.le.s32.totalorder 2, %s18
      // Predicated region
      $region155: #{lstm_forward.1} parent=5 // pred_check
        %p4075 = pneg %p4074
      $region156: #{lstm_forward.1} parent=5 // pred_check_branch
        %4077 = sbr.rel (%p4075) target = $region158
      $region157: #{lstm_forward.1} parent=5 // pred_region
        %s4078 = ssub.s32 %s18, 2
        // Predicated region
        $region159: #{lstm_forward.1} parent=157 // pred_check
          %p4079 = pneg %p241
        $region160: #{lstm_forward.1} parent=157 // pred_check_branch
          %4081 = sbr.rel (%p4079) target = $region162
        $region161: #{lstm_forward.1} parent=157 // pred_region
          %s4082 = sand.u32 %s226, 1
          %s4083 = sand.u32 %s226, 1
          %s4084 = smul.addr %s4083, 32
          %s4085 = scalar_lea.vmem [#allocation12], %s4084
        $region162: #{lstm_forward.1} parent=157 // pred_fallthru
          _
      $region158: #{lstm_forward.1} parent=5 // pred_fallthru
        _
    $region6: #{lstm_forward.1} parent=1 // loop_footer
      %s22 = sadd.s32 1, %s18
    $region7: #{lstm_forward.1} parent=1 // loop_footer_branch
      %17 = sbr.rel target = $region3
    $region8: #{lstm_forward.1} parent=1 // loop_exit
      _
    %4086 = vsyncpa [#allocation6], 1
    %s4087 = scalar_lea.sflag [#allocation6], 1
    %4088 = vsyncpa %s4087, 1
    %4089 = vsyncpa [#allocation8], 1
    %4090 = vsyncpa [#allocation11], 1

</llo_original>
